<compile_context>
chip_gen: v6e
topology: v6e:2x2x1
jax: 0.10.0
libtpu: 0.0.40
codegen_flags: <defaults>
</compile_context>

<pallas_src>
import functools
import math

import jax
import jax.numpy as jnp
from jax import lax
from jax.experimental import pallas as pl
from jax.experimental.pallas import tpu as pltpu


# ------------------------------ helpers ------------------------------------ #

def _round_up(v, m):
    return ((v + m - 1) // m) * m


def _pick_k_tile(K, n_cols, itemsize=2, budget_bytes=6 << 20):
    """Largest multiple-of-128 divisor of K whose (tk, n_cols) weight tile fits
    the byte budget (few grid steps -> per-step overhead amortized)."""
    if K * n_cols * itemsize <= budget_bytes:
        return K
    best = None
    t = 128
    while t < K:
        if K % t == 0 and t * n_cols * itemsize <= budget_bytes:
            best = t
        t += 128
    return best if best is not None else K


def _pick_images_per_block(n_images, howo, target_rows=512):
    """Images per conv-stage M block.

    Rows per block = nb * howo must be a multiple of 8 (sublane rule) unless it
    covers the whole batch (full-dim blocks are always legal).  Prefer >=2 M
    blocks so both v7x TensorCores get work on the 'parallel' axis."""
    best = n_images                       # whole batch in one block: always legal
    for nb in range(1, n_images):
        rows = nb * howo
        if n_images % nb == 0 and rows % 8 == 0 and rows <= target_rows:
            best = nb
    return best


# --------------------- fused conv stage (1x1 + 2x2/s2) ---------------------- #

def _conv_stage_kernel(*args, has_conv1):
    # x:  (1, mt, C)      bf16  -- pixels of one patch parity
    # w1: (C, Cp)         bf16  -- optional 1x1 channel-reduction conv
    # b1: (1, Cp)         f32
    # w2: (1, Kin, Cp)    bf16  -- 2x2/s2 conv slab for this parity
    # b2: (1, Cp)         f32
    # o:  (mt, Cp)        bf16  (resident across the parity axis)
    # acc:(mt, Cp)        f32   scratch
    if has_conv1:
        x_ref, w1_ref, b1_ref, w2_ref, b2_ref, o_ref, acc_ref = args
    else:
        x_ref, w2_ref, b2_ref, o_ref, acc_ref = args

    @pl.when(pl.program_id(1) == 0)
    def _():
        acc_ref[...] = jnp.zeros_like(acc_ref)

    x = x_ref[0]                                            # (mt, C) bf16
    if has_conv1:
        y = jnp.dot(x, w1_ref[...], preferred_element_type=jnp.float32)
        y = jnp.maximum(y + b1_ref[...], 0.0).astype(jnp.bfloat16)
    else:
        y = x
    acc_ref[...] += jnp.dot(y, w2_ref[0], preferred_element_type=jnp.float32)

    @pl.when(pl.program_id(1) == pl.num_programs(1) - 1)
    def _():
        o_ref[...] = jnp.maximum(acc_ref[...] + b2_ref[...],
                                 0.0).astype(o_ref.dtype)


def pallas_conv_stage(xp, packed, *, howo):
    """Fused (optional 1x1 conv + ReLU) -> 2x2/s2 conv + ReLU.

    xp: (4, N*Ho*Wo, C) bf16, parity-packed pixels (see conv_fc_head_forward).
    Returns (N*Ho*Wo, Cp) bf16 with rows ordered (n, ho, wo).
    """
    _, M, C = xp.shape
    Cp = packed["Cp"]
    has_conv1 = "w1" in packed
    n_images = M // howo
    mt = _pick_images_per_block(n_images, howo) * howo
    assert M % mt == 0
    grid = (M // mt, 4)

    in_specs = [pl.BlockSpec((1, mt, C), lambda m, p: (p, m, 0))]
    inputs = [xp]
    if has_conv1:
        in_specs += [
            pl.BlockSpec(packed["w1"].shape, lambda m, p: (0, 0)),
            pl.BlockSpec((1, Cp), lambda m, p: (0, 0)),
        ]
        inputs += [packed["w1"], packed["b1"]]
    kin = packed["w2"].shape[1]
    in_specs += [
        pl.BlockSpec((1, kin, Cp), lambda m, p: (p, 0, 0)),
        pl.BlockSpec((1, Cp), lambda m, p: (0, 0)),
    ]
    inputs += [packed["w2"], packed["b2"]]

    kernel = functools.partial(_conv_stage_kernel, has_conv1=has_conv1)
    return pl.pallas_call(
        kernel,
        out_shape=jax.ShapeDtypeStruct((M, Cp), jnp.bfloat16),
        grid=grid,
        in_specs=in_specs,
        out_specs=pl.BlockSpec((mt, Cp), lambda m, p: (m, 0)),
        scratch_shapes=[pltpu.VMEM((mt, Cp), jnp.float32)],
        compiler_params=pltpu.CompilerParams(
            dimension_semantics=("parallel", "arbitrary")),
    )(*inputs)


# ------------------------- fused FC stack kernel ---------------------------- #

def _fc_stack_kernel(*args, num_layers, single_k):
    # args: z, w0, b0, w1, b1, ..., w_{L-1}, b_{L-1}, o_ref [, acc_ref]
    # Layer 0 is streamed over the K grid; layers 1..L-1 run in the epilogue.
    # Layers 0..L-2 get ReLU (FC layers), layer L-1 is the prediction (no ReLU).
    z_ref = args[0]
    o_ref = args[1 + 2 * num_layers]

    def head_matmul():
        return jnp.dot(z_ref[...], args[1][...],
                       preferred_element_type=jnp.float32)

    def epilogue(acc0):
        h = jnp.maximum(acc0 + args[2][...], 0.0).astype(jnp.bfloat16)
        for l in range(1, num_layers):
            w_ref = args[1 + 2 * l]
            b_ref = args[2 + 2 * l]
            a = jnp.dot(h, w_ref[...],
                        preferred_element_type=jnp.float32) + b_ref[...]
            if l < num_layers - 1:
                h = jnp.maximum(a, 0.0).astype(jnp.bfloat16)
            else:
                o_ref[...] = a.astype(o_ref.dtype)

    if single_k:
        # Single K step: no accumulator scratch, no pl.when init/finalize.
        epilogue(head_matmul())
    else:
        acc_ref = args[2 + 2 * num_layers]

        @pl.when(pl.program_id(0) == 0)
        def _():
            acc_ref[...] = jnp.zeros_like(acc_ref)

        acc_ref[...] += head_matmul()

        @pl.when(pl.program_id(0) == pl.num_programs(0) - 1)
        def _():
            epilogue(acc_ref[...])


def pallas_fc_stack(z, layers):
    """One pallas_call for relu(fc_0)..relu(fc_{L-2}) -> prediction fc_{L-1}.

    Only the first (largest) weight is streamed over a K grid; all later
    weights/biases and the small activation stay VMEM-resident, so the
    intermediate activations never round-trip HBM and there is a single
    kernel launch for the whole stack.
    """
    M, K0 = z.shape
    num_layers = len(layers)
    assert num_layers >= 2, "module requires >=1 FC layer plus the prediction"
    w0, b0 = layers[0]
    assert w0.shape[0] == K0
    F0 = w0.shape[1]

    tk = _pick_k_tile(K0, F0)
    nk = K0 // tk
    single_k = nk == 1

    in_specs = [pl.BlockSpec((M, tk), lambda k: (0, k)),
                pl.BlockSpec((tk, F0), lambda k: (k, 0)),
                pl.BlockSpec((1, F0), lambda k: (0, 0))]
    inputs = [z, w0, b0]
    for w, b in layers[1:]:
        in_specs += [pl.BlockSpec(w.shape, lambda k: (0, 0)),
                     pl.BlockSpec(b.shape, lambda k: (0, 0))]
        inputs += [w, b]

    out_cols = layers[-1][0].shape[1]
    kernel = functools.partial(_fc_stack_kernel, num_layers=num_layers,
                               single_k=single_k)
    scratch = [] if single_k else [pltpu.VMEM((M, F0), jnp.float32)]
    # NOTE(v7x): at realistic PointRend sizes the streamed first-FC tile plus
    # the resident later weights stays well under the 32 MiB scoped default;
    # raise vmem_limit_bytes only if the prediction weight grows past ~8 MiB.
    return pl.pallas_call(
        kernel,
        out_shape=jax.ShapeDtypeStruct((M, out_cols), jnp.float32),
        grid=(nk,),
        in_specs=in_specs,
        out_specs=pl.BlockSpec((M, out_cols), lambda k: (0, 0)),
        scratch_shapes=scratch,
        compiler_params=pltpu.CompilerParams(
            dimension_semantics=("arbitrary",)),
    )(*inputs)


# --------------------------- ConvFCHead forward ----------------------------- #

def conv_fc_head_forward(x, packed):
    """Forward pass of ConvFCHead.  x: (N, C_in, H, W) float32 (NCHW)."""
    N, C, H, W = x.shape
    assert H % 2 == 0 and W % 2 == 0, "2x2/s2 conv expects even spatial dims"
    Ho, Wo = H // 2, W // 2
    howo = Ho * Wo
    Cp = packed["Cp"]

    # Single XLA relayout of the (small) activation: NCHW -> (parity, pixel, c)
    # with parity = 2*dy + dx of the 2x2/s2 patch.  This one copy absorbs the
    # NCHW->channels-last transpose, the 2x2/s2 patch gather (im2col) and the
    # old separate pad/reshape.  The 1x1 conv is pointwise, so it commutes with
    # this pixel permutation and runs on the permuted pixels inside the kernel.
    # TODO(synk): could be folded into the conv kernel with manual strided DMA.
    xp = x.reshape(N, C, Ho, 2, Wo, 2)
    xp = jnp.transpose(xp, (3, 5, 0, 2, 4, 1))        # (dy, dx, n, ho, wo, c)
    xp = xp.reshape(4, N * howo, C).astype(jnp.bfloat16)

    conv_out = pallas_conv_stage(xp, packed, howo=howo)   # (N*howo, Cp) bf16

    # Tiny flatten (N * howo * Cp bf16); the NCHW torch.flatten permutation is
    # folded into the first FC weight's rows, so no permutation happens here.
    z = conv_out.reshape(N, howo * Cp)

    out = pallas_fc_stack(z, packed["fc_layers"])          # (N, Op) f32
    out = out[:, :packed["out_dim"]]
    return out.reshape((N,) + tuple(packed["output_shape"]))


# ------------------------------ Param init ---------------------------------- #

def init_params(key, *, input_channels, input_h, input_w,
                conv_dim, fc_dims, output_shape):
    """PyTorch-layout parameters (used by the reference path)."""
    keys = jax.random.split(key, 3 + len(fc_dims))
    params = {"output_shape": tuple(output_shape)}

    if input_channels > conv_dim:
        # c2_msra_fill: kaiming normal (fan_out), bias 0
        std1 = (2.0 / (conv_dim * 1 * 1)) ** 0.5
        params["conv1_w"] = std1 * jax.random.normal(
            keys[0], (conv_dim, input_channels), jnp.float32)
        params["conv1_b"] = jnp.zeros((conv_dim,), jnp.float32)

    std2 = (2.0 / (conv_dim * 2 * 2)) ** 0.5
    params["conv2_w"] = std2 * jax.random.normal(
        keys[1], (conv_dim, conv_dim, 2, 2), jnp.float32)
    params["conv2_b"] = jnp.zeros((conv_dim,), jnp.float32)

    input_dim = (conv_dim * input_h * input_w) // 4
    fcs = []
    for k, fc_dim in enumerate(fc_dims):
        bound = (6.0 / input_dim) ** 0.5
        wk = jax.random.uniform(keys[2 + k], (fc_dim, input_dim), jnp.float32,
                                minval=-bound, maxval=bound)
        fcs.append((wk, jnp.zeros((fc_dim,), jnp.float32)))
        input_dim = fc_dim
    params["fcs"] = fcs

    output_dim = math.prod(output_shape)
    params["pred_w"] = 0.001 * jax.random.normal(
        keys[-1], (output_dim, fc_dims[-1]), jnp.float32)
    params["pred_b"] = jnp.zeros((output_dim,), jnp.float32)
    return params


def pack_params(params, *, input_h, input_w):
    """One-time packing into kernel-ready (pre-transposed / padded / bf16) layouts."""
    conv_dim = params["conv2_w"].shape[0]
    Ho, Wo = input_h // 2, input_w // 2
    Cp = _round_up(conv_dim, 128)
    bf16 = jnp.bfloat16
    packed = {"Cp": Cp, "output_shape": tuple(params["output_shape"])}

    has_conv1 = "conv1_w" in params
    if has_conv1:
        w1 = params["conv1_w"]                                  # (conv_dim, C_in)
        c_in = w1.shape[1]
        w1p = jnp.zeros((c_in, Cp), jnp.float32).at[:, :conv_dim].set(w1.T)
        packed["w1"] = w1p.astype(bf16)
        packed["b1"] = jnp.zeros((1, Cp), jnp.float32).at[0, :conv_dim].set(
            params["conv1_b"])

    # conv2 (co, ci, 2, 2) -> (parity = 2*dy + dx, c_in[pad], c_out[pad])
    kin = Cp if has_conv1 else params["conv2_w"].shape[1]
    w2 = jnp.transpose(params["conv2_w"], (2, 3, 1, 0))         # (dy, dx, ci, co)
    w2p = jnp.zeros((2, 2, kin, Cp), jnp.float32).at[
        :, :, :w2.shape[2], :conv_dim].set(w2)
    packed["w2"] = w2p.reshape(4, kin, Cp).astype(bf16)
    packed["b2"] = jnp.zeros((1, Cp), jnp.float32).at[0, :conv_dim].set(
        params["conv2_b"])

    layers = []
    prev_pad = None
    for idx, (wk, bk) in enumerate(params["fcs"]):
        fc_dim, in_dim = wk.shape
        Fp = _round_up(fc_dim, 128)
        if idx == 0:
            # Fold the NCHW flatten order (c, ho, wo) into the weight rows so
            # the kernel consumes the (ho, wo, c_padded) activation directly.
            wr = wk.reshape(fc_dim, conv_dim, Ho, Wo)
            wr = jnp.transpose(wr, (2, 3, 1, 0))                # (ho, wo, c, out)
            wp = jnp.zeros((Ho, Wo, Cp, Fp), jnp.float32).at[
                :, :, :conv_dim, :fc_dim].set(wr)
            wp = wp.reshape(Ho * Wo * Cp, Fp)
        else:
            wp = jnp.zeros((prev_pad, Fp), jnp.float32).at[
                :in_dim, :fc_dim].set(wk.T)
        bp = jnp.zeros((1, Fp), jnp.float32).at[0, :fc_dim].set(bk)
        layers.append((wp.astype(bf16), bp))
        prev_pad = Fp

    out_dim, last_fc = params["pred_w"].shape
    Op = _round_up(out_dim, 128)
    wpred = jnp.zeros((prev_pad, Op), jnp.float32).at[
        :last_fc, :out_dim].set(params["pred_w"].T)
    bpred = jnp.zeros((1, Op), jnp.float32).at[0, :out_dim].set(params["pred_b"])
    layers.append((wpred.astype(bf16), bpred))

    packed["fc_layers"] = layers
    packed["out_dim"] = out_dim
    return packed


# ------------------------------ Reference ----------------------------------- #

def reference_forward(x, params):
    """Pure-JAX reference with matching bf16-input / f32-accumulate numerics."""
    N = x.shape[0]
    conv_dim = params["conv2_w"].shape[0]
    f32 = jnp.float32
    bf = lambda a: a.astype(jnp.bfloat16)

    y = x
    if "conv1_w" in params:
        w1 = params["conv1_w"].reshape(conv_dim, -1, 1, 1)
        y = lax.conv_general_dilated(bf(y), bf(w1), (1, 1), "VALID",
                                     dimension_numbers=("NCHW", "OIHW", "NCHW"),
                                     preferred_element_type=f32)
        y = jax.nn.relu(y + params["conv1_b"][None, :, None, None])
        y = y.astype(jnp.bfloat16)
    else:
        y = bf(y)
    y = lax.conv_general_dilated(y, bf(params["conv2_w"]), (2, 2), "VALID",
                                 dimension_numbers=("NCHW", "OIHW", "NCHW"),
                                 preferred_element_type=f32)
    y = jax.nn.relu(y + params["conv2_b"][None, :, None, None])
    y = y.astype(jnp.bfloat16)

    z = y.reshape(N, -1)
    for wk, bk in params["fcs"]:
        z = jax.nn.relu(jnp.dot(z, bf(wk).T, preferred_element_type=f32) + bk)
        z = z.astype(jnp.bfloat16)
    out = jnp.dot(z, bf(params["pred_w"]).T, preferred_element_type=f32)
    out = out + params["pred_b"]
    return out.reshape((N,) + tuple(params["output_shape"]))


# --------------------------------- Main -------------------------------------- #

if __name__ == "__main__":
    key = jax.random.PRNGKey(0)
    k_x, k_p = jax.random.split(key)

    # Small, module-consistent shapes (input_channels > conv_dim -> conv1 path).
    N, C_in, H, W = 2, 8, 16, 16
    conv_dim = 4
    fc_dims = [32, 32]
    output_shape = (3, 7, 7)            # (num_classes, side, side)

    x = jax.random.normal(k_x, (N, C_in, H, W), jnp.float32)
    params = init_params(k_p, input_channels=C_in, input_h=H, input_w=W,
                         conv_dim=conv_dim, fc_dims=fc_dims,
                         output_shape=output_shape)
    packed = pack_params(params, input_h=H, input_w=W)

    fwd = jax.jit(lambda inp: conv_fc_head_forward(inp, packed))
    out = jax.block_until_ready(fwd(x))
    assert out.shape == (N,) + output_shape, out.shape

    ref = jax.block_until_ready(reference_forward(x, params))
    err = float(jnp.max(jnp.abs(out - ref)))
    scale = float(jnp.max(jnp.abs(ref)))
    if not (err <= 1e-2 * scale + 1e-4):
        raise AssertionError(
            f"Pallas output does not match reference: max|diff|={err}, "
            f"max|ref|={scale}")

    print("KERNEL_OK")
</pallas_src>

<mosaic_0001>
module attributes {stable_mosaic.version = 11 : i64} {
  func.func @_conv_stage_kernel(%arg0: i32, %arg1: i32, %arg2: memref<1x64x8xbf16, #tpu.memory_space<vmem>>, %arg3: memref<8x128xbf16, #tpu.memory_space<vmem>>, %arg4: memref<1x128xf32, #tpu.memory_space<vmem>>, %arg5: memref<1x128x128xbf16, #tpu.memory_space<vmem>>, %arg6: memref<1x128xf32, #tpu.memory_space<vmem>>, %arg7: memref<64x128xbf16, #tpu.memory_space<vmem>>, %arg8: memref<64x128xf32, #tpu.memory_space<vmem>>) attributes {dimension_semantics = [#tpu.dimension_semantics<parallel>, #tpu.dimension_semantics<arbitrary>], iteration_bounds = array<i64: 2, 4>, scalar_prefetch = 0 : i64, scratch_operands = 1 : i64, tpu.core_type = #tpu.core_type<tc>, window_params = [{transform_indices = @transform_0, window_bounds = array<i64: 1, 64, 8>}, {pipeline_mode = #tpu.pipeline_mode<synchronous>, transform_indices = @transform_1, window_bounds = array<i64: 8, 128>}, {pipeline_mode = #tpu.pipeline_mode<synchronous>, transform_indices = @transform_2, window_bounds = array<i64: 1, 128>}, {transform_indices = @transform_3, window_bounds = array<i64: 1, 128, 128>}, {pipeline_mode = #tpu.pipeline_mode<synchronous>, transform_indices = @transform_4, window_bounds = array<i64: 1, 128>}, {transform_indices = @transform_5, window_bounds = array<i64: 64, 128>}]} {
    %c0_i32 = arith.constant 0 : i32
    %0 = arith.cmpi eq, %arg1, %c0_i32 : i32
    %1 = arith.extui %0 : i1 to i32
    %c0_i32_0 = arith.constant 0 : i32
    %2 = arith.cmpi ne, %1, %c0_i32_0 : i32
    scf.if %2 {
      %cst_17 = arith.constant 0.000000e+00 : f32
      %22 = vector.broadcast %cst_17 : f32 to vector<64x128xf32>
      %c0_18 = arith.constant 0 : index
      %c0_19 = arith.constant 0 : index
      %23 = vector.load %arg8[%c0_18, %c0_19] : memref<64x128xf32, #tpu.memory_space<vmem>>, vector<64x128xf32>
      tpu.vector_store %arg8[%c0_18, %c0_19], %22 {strides = array<i32>} : memref<64x128xf32, #tpu.memory_space<vmem>>, vector<64x128xf32>,
    } else {
    }
    %c0 = arith.constant 0 : index
    %c0_1 = arith.constant 0 : index
    %c0_2 = arith.constant 0 : index
    %3 = vector.load %arg2[%c0, %c0_1, %c0_2] : memref<1x64x8xbf16, #tpu.memory_space<vmem>>, vector<1x64x8xbf16>
    %4 = vector.shape_cast %3 : vector<1x64x8xbf16> to vector<64x8xbf16>
    %c0_3 = arith.constant 0 : index
    %c0_4 = arith.constant 0 : index
    %5 = vector.load %arg3[%c0_3, %c0_4] : memref<8x128xbf16, #tpu.memory_space<vmem>>, vector<8x128xbf16>
    %cst = arith.constant dense<0.000000e+00> : vector<64x128xf32>
    %6 = tpu.matmul %4, %5, %cst {dimension_numbers = #tpu.dot_dimension_numbers<[1], [0], [0], [1], [0, 0, 1, 1], [], []>} : vector<64x8xbf16>, vector<8x128xbf16>, vector<64x128xf32> -> vector<64x128xf32>
    %c0_5 = arith.constant 0 : index
    %c0_6 = arith.constant 0 : index
    %7 = vector.load %arg4[%c0_5, %c0_6] : memref<1x128xf32, #tpu.memory_space<vmem>>, vector<1x128xf32>
    %8 = vector.broadcast %7 : vector<1x128xf32> to vector<64x128xf32>
    %9 = arith.addf %6, %8 : vector<64x128xf32>
    %cst_7 = arith.constant 0.000000e+00 : f32
    %10 = vector.broadcast %cst_7 : f32 to vector<64x128xf32>
    %11 = arith.maximumf %9, %10 : vector<64x128xf32>
    %12 = arith.truncf %11 : vector<64x128xf32> to vector<64x128xbf16>
    %c0_8 = arith.constant 0 : index
    %c0_9 = arith.constant 0 : index
    %13 = vector.load %arg8[%c0_8, %c0_9] : memref<64x128xf32, #tpu.memory_space<vmem>>, vector<64x128xf32>
    %c0_10 = arith.constant 0 : index
    %c0_11 = arith.constant 0 : index
    %c0_12 = arith.constant 0 : index
    %14 = vector.load %arg5[%c0_10, %c0_11, %c0_12] : memref<1x128x128xbf16, #tpu.memory_space<vmem>>, vector<1x128x128xbf16>
    %15 = vector.shape_cast %14 : vector<1x128x128xbf16> to vector<128x128xbf16>
    %cst_13 = arith.constant dense<0.000000e+00> : vector<64x128xf32>
    %16 = tpu.matmul %12, %15, %cst_13 {dimension_numbers = #tpu.dot_dimension_numbers<[1], [0], [0], [1], [0, 0, 1, 1], [], []>} : vector<64x128xbf16>, vector<128x128xbf16>, vector<64x128xf32> -> vector<64x128xf32>
    %17 = arith.addf %13, %16 : vector<64x128xf32>
    %c0_14 = arith.constant 0 : index
    %c0_15 = arith.constant 0 : index
    %18 = vector.load %arg8[%c0_14, %c0_15] : memref<64x128xf32, #tpu.memory_space<vmem>>, vector<64x128xf32>
    tpu.vector_store %arg8[%c0_14, %c0_15], %17 {strides = array<i32>} : memref<64x128xf32, #tpu.memory_space<vmem>>, vector<64x128xf32>,
    %c3_i32 = arith.constant 3 : i32
    %19 = arith.cmpi eq, %arg1, %c3_i32 : i32
    %20 = arith.extui %19 : i1 to i32
    %c0_i32_16 = arith.constant 0 : i32
    %21 = arith.cmpi ne, %20, %c0_i32_16 : i32
    scf.if %21 {
      %c0_17 = arith.constant 0 : index
      %c0_18 = arith.constant 0 : index
      %22 = vector.load %arg8[%c0_17, %c0_18] : memref<64x128xf32, #tpu.memory_space<vmem>>, vector<64x128xf32>
      %c0_19 = arith.constant 0 : index
      %c0_20 = arith.constant 0 : index
      %23 = vector.load %arg6[%c0_19, %c0_20] : memref<1x128xf32, #tpu.memory_space<vmem>>, vector<1x128xf32>
      %24 = vector.broadcast %23 : vector<1x128xf32> to vector<64x128xf32>
      %25 = arith.addf %22, %24 : vector<64x128xf32>
      %cst_21 = arith.constant 0.000000e+00 : f32
      %26 = vector.broadcast %cst_21 : f32 to vector<64x128xf32>
      %27 = arith.maximumf %25, %26 : vector<64x128xf32>
      %28 = arith.truncf %27 : vector<64x128xf32> to vector<64x128xbf16>
      %c0_22 = arith.constant 0 : index
      %c0_23 = arith.constant 0 : index
      %29 = vector.load %arg7[%c0_22, %c0_23] : memref<64x128xbf16, #tpu.memory_space<vmem>>, vector<64x128xbf16>
      tpu.vector_store %arg7[%c0_22, %c0_23], %28 {strides = array<i32>} : memref<64x128xbf16, #tpu.memory_space<vmem>>, vector<64x128xbf16>,
    } else {
    }
    return
  }
  func.func @transform_0(%arg0: i32, %arg1: i32) -> (i32, i32, i32) {
    %c0_i32 = arith.constant 0 : i32
    %c0_i32_0 = arith.constant 0 : i32
    return %arg1, %arg0, %c0_i32 : i32, i32, i32
  }
  func.func @transform_1(%arg0: i32, %arg1: i32) -> (i32, i32) {
    %c0_i32 = arith.constant 0 : i32
    %c0_i32_0 = arith.constant 0 : i32
    %c0_i32_1 = arith.constant 0 : i32
    return %c0_i32, %c0_i32_0 : i32, i32
  }
  func.func @transform_2(%arg0: i32, %arg1: i32) -> (i32, i32) {
    %c0_i32 = arith.constant 0 : i32
    %c0_i32_0 = arith.constant 0 : i32
    %c0_i32_1 = arith.constant 0 : i32
    return %c0_i32, %c0_i32_0 : i32, i32
  }
  func.func @transform_3(%arg0: i32, %arg1: i32) -> (i32, i32, i32) {
    %c0_i32 = arith.constant 0 : i32
    %c0_i32_0 = arith.constant 0 : i32
    %c0_i32_1 = arith.constant 0 : i32
    return %arg1, %c0_i32, %c0_i32_0 : i32, i32, i32
  }
  func.func @transform_4(%arg0: i32, %arg1: i32) -> (i32, i32) {
    %c0_i32 = arith.constant 0 : i32
    %c0_i32_0 = arith.constant 0 : i32
    %c0_i32_1 = arith.constant 0 : i32
    return %c0_i32, %c0_i32_0 : i32, i32
  }
  func.func @transform_5(%arg0: i32, %arg1: i32) -> (i32, i32) {
    %c0_i32 = arith.constant 0 : i32
    %c0_i32_0 = arith.constant 0 : i32
    return %arg0, %c0_i32 : i32, i32
  }
}

module attributes {stable_mosaic.version = 11 : i64} {
  func.func @_fc_stack_kernel(%arg0: i32, %arg1: memref<2x8192xbf16, #tpu.memory_space<vmem>>, %arg2: memref<8192x128xbf16, #tpu.memory_space<vmem>>, %arg3: memref<1x128xf32, #tpu.memory_space<vmem>>, %arg4: memref<128x128xbf16, #tpu.memory_space<vmem>>, %arg5: memref<1x128xf32, #tpu.memory_space<vmem>>, %arg6: memref<128x256xbf16, #tpu.memory_space<vmem>>, %arg7: memref<1x256xf32, #tpu.memory_space<vmem>>, %arg8: memref<2x256xf32, #tpu.memory_space<vmem>>) attributes {dimension_semantics = [#tpu.dimension_semantics<arbitrary>], iteration_bounds = array<i64: 1>, scalar_prefetch = 0 : i64, scratch_operands = 0 : i64, tpu.core_type = #tpu.core_type<tc>, window_params = [{transform_indices = @transform_0, window_bounds = array<i64: 2, 8192>}, {transform_indices = @transform_1, window_bounds = array<i64: 8192, 128>}, {pipeline_mode = #tpu.pipeline_mode<synchronous>, transform_indices = @transform_2, window_bounds = array<i64: 1, 128>}, {pipeline_mode = #tpu.pipeline_mode<synchronous>, transform_indices = @transform_3, window_bounds = array<i64: 128, 128>}, {pipeline_mode = #tpu.pipeline_mode<synchronous>, transform_indices = @transform_4, window_bounds = array<i64: 1, 128>}, {pipeline_mode = #tpu.pipeline_mode<synchronous>, transform_indices = @transform_5, window_bounds = array<i64: 128, 256>}, {pipeline_mode = #tpu.pipeline_mode<synchronous>, transform_indices = @transform_6, window_bounds = array<i64: 1, 256>}, {pipeline_mode = #tpu.pipeline_mode<synchronous>, transform_indices = @transform_7, window_bounds = array<i64: 2, 256>}]} {
    %c0 = arith.constant 0 : index
    %c0_0 = arith.constant 0 : index
    %0 = vector.load %arg1[%c0, %c0_0] : memref<2x8192xbf16, #tpu.memory_space<vmem>>, vector<2x8192xbf16>
    %c0_1 = arith.constant 0 : index
    %c0_2 = arith.constant 0 : index
    %1 = vector.load %arg2[%c0_1, %c0_2] : memref<8192x128xbf16, #tpu.memory_space<vmem>>, vector<8192x128xbf16>
    %cst = arith.constant dense<0.000000e+00> : vector<2x128xf32>
    %2 = tpu.matmul %0, %1, %cst {dimension_numbers = #tpu.dot_dimension_numbers<[1], [0], [0], [1], [0, 0, 1, 1], [], []>} : vector<2x8192xbf16>, vector<8192x128xbf16>, vector<2x128xf32> -> vector<2x128xf32>
    %c0_3 = arith.constant 0 : index
    %c0_4 = arith.constant 0 : index
    %3 = vector.load %arg3[%c0_3, %c0_4] : memref<1x128xf32, #tpu.memory_space<vmem>>, vector<1x128xf32>
    %4 = vector.broadcast %3 : vector<1x128xf32> to vector<2x128xf32>
    %5 = arith.addf %2, %4 : vector<2x128xf32>
    %cst_5 = arith.constant 0.000000e+00 : f32
    %6 = vector.broadcast %cst_5 : f32 to vector<2x128xf32>
    %7 = arith.maximumf %5, %6 : vector<2x128xf32>
    %8 = arith.truncf %7 : vector<2x128xf32> to vector<2x128xbf16>
    %c0_6 = arith.constant 0 : index
    %c0_7 = arith.constant 0 : index
    %9 = vector.load %arg4[%c0_6, %c0_7] : memref<128x128xbf16, #tpu.memory_space<vmem>>, vector<128x128xbf16>
    %cst_8 = arith.constant dense<0.000000e+00> : vector<2x128xf32>
    %10 = tpu.matmul %8, %9, %cst_8 {dimension_numbers = #tpu.dot_dimension_numbers<[1], [0], [0], [1], [0, 0, 1, 1], [], []>} : vector<2x128xbf16>, vector<128x128xbf16>, vector<2x128xf32> -> vector<2x128xf32>
    %c0_9 = arith.constant 0 : index
    %c0_10 = arith.constant 0 : index
    %11 = vector.load %arg5[%c0_9, %c0_10] : memref<1x128xf32, #tpu.memory_space<vmem>>, vector<1x128xf32>
    %12 = vector.broadcast %11 : vector<1x128xf32> to vector<2x128xf32>
    %13 = arith.addf %10, %12 : vector<2x128xf32>
    %cst_11 = arith.constant 0.000000e+00 : f32
    %14 = vector.broadcast %cst_11 : f32 to vector<2x128xf32>
    %15 = arith.maximumf %13, %14 : vector<2x128xf32>
    %16 = arith.truncf %15 : vector<2x128xf32> to vector<2x128xbf16>
    %c0_12 = arith.constant 0 : index
    %c0_13 = arith.constant 0 : index
    %17 = vector.load %arg6[%c0_12, %c0_13] : memref<128x256xbf16, #tpu.memory_space<vmem>>, vector<128x256xbf16>
    %cst_14 = arith.constant dense<0.000000e+00> : vector<2x256xf32>
    %18 = tpu.matmul %16, %17, %cst_14 {dimension_numbers = #tpu.dot_dimension_numbers<[1], [0], [0], [1], [0, 0, 1, 1], [], []>} : vector<2x128xbf16>, vector<128x256xbf16>, vector<2x256xf32> -> vector<2x256xf32>
    %c0_15 = arith.constant 0 : index
    %c0_16 = arith.constant 0 : index
    %19 = vector.load %arg7[%c0_15, %c0_16] : memref<1x256xf32, #tpu.memory_space<vmem>>, vector<1x256xf32>
    %20 = vector.broadcast %19 : vector<1x256xf32> to vector<2x256xf32>
    %21 = arith.addf %18, %20 : vector<2x256xf32>
    %c0_17 = arith.constant 0 : index
    %c0_18 = arith.constant 0 : index
    %22 = vector.load %arg8[%c0_17, %c0_18] : memref<2x256xf32, #tpu.memory_space<vmem>>, vector<2x256xf32>
    tpu.vector_store %arg8[%c0_17, %c0_18], %21 {strides = array<i32>} : memref<2x256xf32, #tpu.memory_space<vmem>>, vector<2x256xf32>,
    return
  }
  func.func @transform_0(%arg0: i32) -> (i32, i32) {
    %c0_i32 = arith.constant 0 : i32
    %c0_i32_0 = arith.constant 0 : i32
    return %c0_i32, %arg0 : i32, i32
  }
  func.func @transform_1(%arg0: i32) -> (i32, i32) {
    %c0_i32 = arith.constant 0 : i32
    %c0_i32_0 = arith.constant 0 : i32
    return %arg0, %c0_i32 : i32, i32
  }
  func.func @transform_2(%arg0: i32) -> (i32, i32) {
    %c0_i32 = arith.constant 0 : i32
    %c0_i32_0 = arith.constant 0 : i32
    %c0_i32_1 = arith.constant 0 : i32
    return %c0_i32, %c0_i32_0 : i32, i32
  }
  func.func @transform_3(%arg0: i32) -> (i32, i32) {
    %c0_i32 = arith.constant 0 : i32
    %c0_i32_0 = arith.constant 0 : i32
    %c0_i32_1 = arith.constant 0 : i32
    return %c0_i32, %c0_i32_0 : i32, i32
  }
  func.func @transform_4(%arg0: i32) -> (i32, i32) {
    %c0_i32 = arith.constant 0 : i32
    %c0_i32_0 = arith.constant 0 : i32
    %c0_i32_1 = arith.constant 0 : i32
    return %c0_i32, %c0_i32_0 : i32, i32
  }
  func.func @transform_5(%arg0: i32) -> (i32, i32) {
    %c0_i32 = arith.constant 0 : i32
    %c0_i32_0 = arith.constant 0 : i32
    %c0_i32_1 = arith.constant 0 : i32
    return %c0_i32, %c0_i32_0 : i32, i32
  }
  func.func @transform_6(%arg0: i32) -> (i32, i32) {
    %c0_i32 = arith.constant 0 : i32
    %c0_i32_0 = arith.constant 0 : i32
    %c0_i32_1 = arith.constant 0 : i32
    return %c0_i32, %c0_i32_0 : i32, i32
  }
  func.func @transform_7(%arg0: i32) -> (i32, i32) {
    %c0_i32 = arith.constant 0 : i32
    %c0_i32_0 = arith.constant 0 : i32
    %c0_i32_1 = arith.constant 0 : i32
    return %c0_i32, %c0_i32_0 : i32, i32
  }
}

</mosaic_0001>

<llo_original>
// kernel: _lambda_.2
$region0: #{_lambda_.2}
  #allocation0 [shape = 'u32[]', space=smem, size = 0x4, offset = 0x4, fixed_abs, tag = 'smem constant byte address 0x4 - core index']
  #allocation1 [shape = 'u32[144,128]{1,0:T(1,128)}', space=vmem, size = 0x12000, scoped, tag = 'internal scratch']
  #allocation2 [shape = 'f32[64,128]{1,0:T(8,128)}', space=vmem, size = 0x8000, scoped, tag = 'scratch operand']
  %s0 = inlined_call_operand.vmem [shape: bf16[4,128,8], index: 0, kind: input, shape index: {}]
  %s1 = inlined_call_operand.hbm [shape: bf16[8,128], index: 1, kind: input, shape index: {}]
  %s2 = inlined_call_operand.vmem [shape: f32[1,128], index: 2, kind: input, shape index: {}, may-alias: {2,4}]
  %s3 = inlined_call_operand.hbm [shape: bf16[4,128,128], index: 3, kind: input, shape index: {}]
  %s4 = inlined_call_operand.vmem [shape: f32[1,128], index: 4, kind: input, shape index: {}, may-alias: {2,4}]
  %s5 = inlined_call_operand.vmem [shape: bf16[128,128], index: 5, kind: output, shape index: {}]
  %s6 = sld [smem:[#allocation0]]
  $region69: #{_lambda_.2} parent=0
    _
  %s8 = ssub.s32 1, %s6
  %s9 = scalar_select 0, %s8, %s6
  $region1: #{_lambda_.2} parent=0
    #allocation3 [shape = 'u8[2048]{0}', space=vmem, size = 0x800, scoped, tag = 'input window, operand 1, single buffered']
    #allocation4 [shape = 's32[2]{0}', space=sflag, size = 0x8, scoped, tag = 'scoped memory for _lambda_.2']
    #allocation5 [shape = 'u8[65536]{0}', space=vmem, size = 0x10000, scoped, tag = 'input window, operand 3']
    #allocation6 [shape = 's32[2]{0}', space=sflag, size = 0x8, scoped, tag = 'scoped memory for _lambda_.2']
    %10 = vsyncpa [#allocation4], 0
    %11 = vsyncpa [#allocation6], 0
    %s12 = scalar_lea.sflag [#allocation6], 1
    %13 = vsyncpa %s12, 0
    loop: start=0, step=1, limit=10
    $region2: #{_lambda_.2} parent=1 // loop_pre_header
      _
    $region3: #{_lambda_.2} parent=1 // loop_header
      %s15 = sphi 0, %s19
      %p16 = scmp.ge.s32.totalorder %s15, 10
      %s22 = sphi 0, %s34
      %s23 = sphi 0, %s30
      %s24 = sphi 0, %s22
      %s25 = sphi 0, %s23
      %s26 = sphi 0, %s24
      %s27 = sphi 0, %s25
      %s39 = sphi 0, %s41
      %s42 = sphi 0, %s39
      %s43 = sphi 0, %s42
      %s59 = sphi 0, %s43
      %s63 = sphi 0, %s63
      %s65 = sphi 0, %s63
      %s66 = sphi 0, %s65
      %s80 = sphi 0, %s66
      %s84 = sphi 0, %s84
      %s86 = sphi 0, %s84
      %s87 = sphi 0, %s86
      %s101 = sphi 0, %s87
      %s107 = sphi 0, %s109
      %s110 = sphi 0, %s107
      %s111 = sphi 0, %s110
      %s127 = sphi 0, %s111
      %s131 = sphi 0, %s131
      %s133 = sphi 0, %s131
      %s134 = sphi 0, %s133
      %s148 = sphi 0, %s134
      %s154 = sphi 0, %s156
      %s157 = sphi 0, %s154
      %s158 = sphi 0, %s157
      %s174 = sphi 0, %s158
    $region4: #{_lambda_.2} parent=1 // loop_header_branch
      %18 = sbr.rel (%p16) target = $region8
    $region5: #{_lambda_.2} parent=1 // loop_body
      %s20 = ssub.s32 %s15, 1
      %s21 = ssub.s32 %s15, 2
      %s28 = sadd.s32 1, %s23
      %p29 = scmp.ge.s32.totalorder %s28, 4
      %s30 = scalar_select %p29, 0, %s28
      %s31 = sadd.s32 1, %s22
      %s32 = scalar_select %p29, %s31, %s22
      %p33 = scmp.ge.s32.totalorder %s32, 2
      %s34 = scalar_select %p33, 0, %s32
      %s35 = ssub.s32 %s23, %s30
      %s36 = ssub.s32 %s22, %s34
      %s37 = sor.u32 %s35, %s36
      %p38 = scmp.eq.s32.totalorder %s37, 0
      %s40 = sadd.s32 %s39, 1
      %s41 = scalar_select %p38, %s39, %s40
      %p44 = pneg %p38
      %p45 = scmp.eq.s32.totalorder %s15, 7
      %p46 = por %p44, %p45
      %p47 = scmp.ne.s32.totalorder %s39, %s42
      %p48 = scmp.eq.s32.totalorder %s15, 0
      %p49 = por %p47, %p48
      %p50 = scmp.ne.s32.totalorder %s39, %s42
      %p51 = scmp.eq.s32.totalorder %s20, 7
      %p52 = por %p50, %p51
      %p53 = scmp.ne.s32.totalorder %s42, %s43
      %p54 = scmp.eq.s32.totalorder %s20, 0
      %p55 = por %p53, %p54
      %p56 = scmp.ne.s32.totalorder %s42, %s43
      %p57 = scmp.eq.s32.totalorder %s21, 7
      %p58 = por %p56, %p57
      %p60 = scmp.ne.s32.totalorder %s43, %s59
      %p61 = scmp.eq.s32.totalorder %s21, 0
      %p62 = por %p60, %p61
      %s64 = sadd.s32 %s63, 1
      %p67 = scmp.eq.s32.totalorder %s15, 7
      %p68 = scmp.ne.s32.totalorder %s63, %s65
      %p69 = scmp.eq.s32.totalorder %s15, 0
      %p70 = por %p68, %p69
      %p71 = scmp.ne.s32.totalorder %s63, %s65
      %p72 = scmp.eq.s32.totalorder %s20, 7
      %p73 = por %p71, %p72
      %p74 = scmp.ne.s32.totalorder %s65, %s66
      %p75 = scmp.eq.s32.totalorder %s20, 0
      %p76 = por %p74, %p75
      %p77 = scmp.ne.s32.totalorder %s65, %s66
      %p78 = scmp.eq.s32.totalorder %s21, 7
      %p79 = por %p77, %p78
      %p81 = scmp.ne.s32.totalorder %s66, %s80
      %p82 = scmp.eq.s32.totalorder %s21, 0
      %p83 = por %p81, %p82
      %s85 = sadd.s32 %s84, 1
      %p88 = scmp.eq.s32.totalorder %s15, 7
      %p89 = scmp.ne.s32.totalorder %s84, %s86
      %p90 = scmp.eq.s32.totalorder %s15, 0
      %p91 = por %p89, %p90
      %p92 = scmp.ne.s32.totalorder %s84, %s86
      %p93 = scmp.eq.s32.totalorder %s20, 7
      %p94 = por %p92, %p93
      %p95 = scmp.ne.s32.totalorder %s86, %s87
      %p96 = scmp.eq.s32.totalorder %s20, 0
      %p97 = por %p95, %p96
      %p98 = scmp.ne.s32.totalorder %s86, %s87
      %p99 = scmp.eq.s32.totalorder %s21, 7
      %p100 = por %p98, %p99
      %p102 = scmp.ne.s32.totalorder %s87, %s101
      %p103 = scmp.eq.s32.totalorder %s21, 0
      %p104 = por %p102, %p103
      %s105 = ssub.s32 %s23, %s30
      %p106 = scmp.eq.s32.totalorder %s105, 0
      %s108 = sadd.s32 %s107, 1
      %s109 = scalar_select %p106, %s107, %s108
      %p112 = pneg %p106
      %p113 = scmp.eq.s32.totalorder %s15, 7
      %p114 = por %p112, %p113
      %p115 = scmp.ne.s32.totalorder %s107, %s110
      %p116 = scmp.eq.s32.totalorder %s15, 0
      %p117 = por %p115, %p116
      %p118 = scmp.ne.s32.totalorder %s107, %s110
      %p119 = scmp.eq.s32.totalorder %s20, 7
      %p120 = por %p118, %p119
      %p121 = scmp.ne.s32.totalorder %s110, %s111
      %p122 = scmp.eq.s32.totalorder %s20, 0
      %p123 = por %p121, %p122
      %p124 = scmp.ne.s32.totalorder %s110, %s111
      %p125 = scmp.eq.s32.totalorder %s21, 7
      %p126 = por %p124, %p125
      %p128 = scmp.ne.s32.totalorder %s111, %s127
      %p129 = scmp.eq.s32.totalorder %s21, 0
      %p130 = por %p128, %p129
      %s132 = sadd.s32 %s131, 1
      %p135 = scmp.eq.s32.totalorder %s15, 7
      %p136 = scmp.ne.s32.totalorder %s131, %s133
      %p137 = scmp.eq.s32.totalorder %s15, 0
      %p138 = por %p136, %p137
      %p139 = scmp.ne.s32.totalorder %s131, %s133
      %p140 = scmp.eq.s32.totalorder %s20, 7
      %p141 = por %p139, %p140
      %p142 = scmp.ne.s32.totalorder %s133, %s134
      %p143 = scmp.eq.s32.totalorder %s20, 0
      %p144 = por %p142, %p143
      %p145 = scmp.ne.s32.totalorder %s133, %s134
      %p146 = scmp.eq.s32.totalorder %s21, 7
      %p147 = por %p145, %p146
      %p149 = scmp.ne.s32.totalorder %s134, %s148
      %p150 = scmp.eq.s32.totalorder %s21, 0
      %p151 = por %p149, %p150
      %s152 = ssub.s32 %s22, %s34
      %p153 = scmp.eq.s32.totalorder %s152, 0
      %s155 = sadd.s32 %s154, 1
      %s156 = scalar_select %p153, %s154, %s155
      %p159 = pneg %p153
      %p160 = scmp.eq.s32.totalorder %s15, 7
      %p161 = por %p159, %p160
      %p162 = scmp.ne.s32.totalorder %s154, %s157
      %p163 = scmp.eq.s32.totalorder %s15, 0
      %p164 = por %p162, %p163
      %p165 = scmp.ne.s32.totalorder %s154, %s157
      %p166 = scmp.eq.s32.totalorder %s20, 7
      %p167 = por %p165, %p166
      %p168 = scmp.ne.s32.totalorder %s157, %s158
      %p169 = scmp.eq.s32.totalorder %s20, 0
      %p170 = por %p168, %p169
      %p171 = scmp.ne.s32.totalorder %s157, %s158
      %p172 = scmp.eq.s32.totalorder %s21, 7
      %p173 = por %p171, %p172
      %p175 = scmp.ne.s32.totalorder %s158, %s174
      %p176 = scmp.eq.s32.totalorder %s21, 0
      %p177 = por %p175, %p176
      %p178 = scmp.le.s32.totalorder 1, %s15
      %p179 = scmp.lt.s32.totalorder %s15, 9
      %p180 = pnand %p178, %p179
      %p181 = pneg %p180
      // Predicated region
      $region9: #{_lambda_.2} parent=5 // pred_check
        _
      $region10: #{_lambda_.2} parent=5 // pred_check_branch
        %183 = sbr.rel (%p180) target = $region12
      $region11: #{_lambda_.2} parent=5 // pred_region
        %s184 = ssub.s32 %s15, 1
        // Predicated region
        $region13: #{_lambda_.2} parent=11 // pred_check
          %p185 = pneg %p76
        $region14: #{_lambda_.2} parent=11 // pred_check_branch
          %187 = sbr.rel (%p185) target = $region16
        $region15: #{_lambda_.2} parent=11 // pred_region
          %s189 = ssub.s32 64, 64
          %190 = vsyncadd [#allocation4], %s189
          %s192 = sshll.u32 [#allocation3], 4
          %s193 = int_to_ptr.vmem [resolvable:$true] %s192
          %195 = dma.hbm_to_vmem [thread:$0]  %s1, 64, %s193, [#allocation4]
        $region16: #{_lambda_.2} parent=11 // pred_fallthru
          _
        // Predicated region
        $region17: #{_lambda_.2} parent=11 // pred_check
          %p196 = pneg %p97
        $region18: #{_lambda_.2} parent=11 // pred_check_branch
          %198 = sbr.rel (%p196) target = $region20
        $region19: #{_lambda_.2} parent=11 // pred_region
          _
        $region20: #{_lambda_.2} parent=11 // pred_fallthru
          _
        // Predicated region
        $region21: #{_lambda_.2} parent=11 // pred_check
          %p199 = pneg %p144
        $region22: #{_lambda_.2} parent=11 // pred_check_branch
          %201 = sbr.rel (%p199) target = $region24
        $region23: #{_lambda_.2} parent=11 // pred_region
          _
        $region24: #{_lambda_.2} parent=11 // pred_fallthru
          _
      $region12: #{_lambda_.2} parent=5 // pred_fallthru
        _
      %p202 = scmp.lt.s32.totalorder %s15, 8
      // Predicated region
      $region25: #{_lambda_.2} parent=5 // pred_check
        %p203 = pneg %p202
      $region26: #{_lambda_.2} parent=5 // pred_check_branch
        %205 = sbr.rel (%p203) target = $region28
      $region27: #{_lambda_.2} parent=5 // pred_region
        // Predicated region
        $region29: #{_lambda_.2} parent=27 // pred_check
          %p206 = pneg %p49
        $region30: #{_lambda_.2} parent=27 // pred_check_branch
          %208 = sbr.rel (%p206) target = $region32
        $region31: #{_lambda_.2} parent=27 // pred_region
          %s209 = smul.u32 8, %s22
          %p210 = scmp.lt.s32.totalorder %s23, 3
          %s211 = scalar_select %p210, %s23, 3
          %p212 = scmp.lt.s32.totalorder %s209, 15
          %s213 = scalar_select %p212, %s209, 15
          %s214 = smul.addr %s211, 16
          %s215 = sadd.s32 %s213, %s214
          %s216 = smul.addr %s215, 4
          %s217 = scalar_lea.vmem %s0, %s216
          %s218 = smul.u32 8, %s22
        $region32: #{_lambda_.2} parent=27 // pred_fallthru
          _
        // Predicated region
        $region33: #{_lambda_.2} parent=27 // pred_check
          %p219 = pneg %p117
        $region34: #{_lambda_.2} parent=27 // pred_check_branch
          %221 = sbr.rel (%p219) target = $region36
        $region35: #{_lambda_.2} parent=27 // pred_region
          %s222 = sand.u32 %s107, 1
          %s223 = scalar_lea.sflag [#allocation6], %s222
          %s224 = sand.u32 %s107, 1
          %s225 = smul.addr %s224, 64
          %s226 = scalar_lea.vmem [#allocation5], %s225
          %s228 = ssub.s32 1024, 1024
          %229 = vsyncadd %s223, %s228
          %s230 = smul.addr %s23, 16
          %s231 = smul.addr %s230, 64
          %s232 = scalar_lea.hbm %s3, %s231
          %s233 = sshll.u32 %s226, 4
          %s234 = int_to_ptr.vmem [resolvable:$true] %s233
          %239 = dma.hbm_to_vmem [thread:$0]  %s232, 1024, %s234, %s223, 64, 64, 4
        $region36: #{_lambda_.2} parent=27 // pred_fallthru
          _
      $region28: #{_lambda_.2} parent=5 // pred_fallthru
        _
      %p240 = scmp.le.s32.totalorder 1, %s15
      %p241 = scmp.lt.s32.totalorder %s15, 9
      %p242 = pnand %p240, %p241
      %p243 = pneg %p242
      // Predicated region
      $region37: #{_lambda_.2} parent=5 // pred_check
        _
      $region38: #{_lambda_.2} parent=5 // pred_check_branch
        %245 = sbr.rel (%p242) target = $region40
      $region39: #{_lambda_.2} parent=5 // pred_region
        %s246 = ssub.s32 %s15, 1
        // Predicated region
        $region41: #{_lambda_.2} parent=39 // pred_check
          %p247 = pneg %p76
        $region42: #{_lambda_.2} parent=39 // pred_check_branch
          %249 = sbr.rel (%p247) target = $region44
        $region43: #{_lambda_.2} parent=39 // pred_region
          %250 = dma.done [#allocation4], 64
        $region44: #{_lambda_.2} parent=39 // pred_fallthru
          _
        %s251 = sand.u32 %s110, 1
        %s252 = scalar_lea.sflag [#allocation6], %s251
        %s253 = sand.u32 %s110, 1
        %s254 = smul.addr %s253, 64
        %s255 = scalar_lea.vmem [#allocation5], %s254
        // Predicated region
        $region45: #{_lambda_.2} parent=39 // pred_check
          %p256 = pneg %p123
        $region46: #{_lambda_.2} parent=39 // pred_check_branch
          %258 = sbr.rel (%p256) target = $region48
        $region47: #{_lambda_.2} parent=39 // pred_region
          %259 = dma.done %s252, 1024
        $region48: #{_lambda_.2} parent=39 // pred_fallthru
          _
        %s260 = smul.u32 8, %s24
        %p261 = scmp.lt.s32.totalorder %s25, 3
        %s262 = scalar_select %p261, %s25, 3
        %p263 = scmp.lt.s32.totalorder %s260, 15
        %s264 = scalar_select %p263, %s260, 15
        %s265 = smul.addr %s262, 16
        %s266 = sadd.s32 %s264, %s265
        %s267 = smul.addr %s266, 4
        %s268 = scalar_lea.vmem %s0, %s267
        %p269 = pneg %p55
        %p270 = pneg %p52
        %p271 = pneg %p76
        %p272 = pneg %p73
        %p273 = pneg %p97
        %p274 = pneg %p94
        %s275 = sand.u32 %s110, 1
        %s276 = scalar_lea.sflag [#allocation6], %s275
        %s277 = sand.u32 %s110, 1
        %s278 = smul.addr %s277, 64
        %s279 = scalar_lea.vmem [#allocation5], %s278
        %p280 = pneg %p123
        %p281 = pneg %p120
        %p282 = pneg %p144
        %p283 = pneg %p141
        %p284 = pneg %p170
        %p285 = pneg %p167
        %s286 = smul.u32 8, %s24
        %p287 = scmp.lt.s32.totalorder %s286, 15
        %s288 = scalar_select %p287, %s286, 15
        %s289 = smul.addr %s288, 4
        %s290 = scalar_lea.vmem %s5, %s289
        %s291 = smul.u32 8, %s24
        %p292 = scmp.lt.s32.totalorder %s25, 3
        %s293 = scalar_select %p292, %s25, 3
        %p294 = scmp.lt.s32.totalorder %s291, 15
        %s295 = scalar_select %p294, %s291, 15
        %s296 = smul.addr %s293, 16
        %s297 = sadd.s32 %s295, %s296
        %s298 = smul.addr %s297, 4
        %s299 = scalar_lea.vmem %s0, %s298
        %s300 = smul.u32 8, %s24
        %s301 = smul.u32 8, %s24
        %p302 = scmp.lt.s32.totalorder %s301, 15
        %s303 = scalar_select %p302, %s301, 15
        %s304 = smul.addr %s303, 4
        %s305 = scalar_lea.vmem %s5, %s304
        %s306 = smul.u32 8, %s24
        %p308 = scmp.eq.s32.totalorder %s25, 0
        // Predicated region
        $region49: #{_lambda_.2} parent=39 // pred_check
          %p309 = pneg %p308
        $region50: #{_lambda_.2} parent=39 // pred_check_branch
          %311 = sbr.rel (%p309) target = $region52
        $region51: #{_lambda_.2} parent=39 // pred_region
          %312 = vst [vmem:[#allocation2] sm:$0xff] 0.0
          %313 = vst [vmem:[#allocation2 + $0x8] sm:$0xff] 0.0
          %314 = vst [vmem:[#allocation2 + $0x10] sm:$0xff] 0.0
          %315 = vst [vmem:[#allocation2 + $0x18] sm:$0xff] 0.0
          %316 = vst [vmem:[#allocation2 + $0x20] sm:$0xff] 0.0
          %317 = vst [vmem:[#allocation2 + $0x28] sm:$0xff] 0.0
          %318 = vst [vmem:[#allocation2 + $0x30] sm:$0xff] 0.0
          %319 = vst [vmem:[#allocation2 + $0x38] sm:$0xff] 0.0
        $region52: #{_lambda_.2} parent=39 // pred_fallthru
          _
        %v320 = vld [vmem:[%s299] sm:$0xf]
        %v321 = vld [vmem:[%s299 + $0x4] sm:$0xf]
        %v322 = vld [vmem:[%s299 + $0x8] sm:$0xf]
        %v323 = vld [vmem:[%s299 + $0xc] sm:$0xf]
        %v324 = vld [vmem:[%s299 + $0x10] sm:$0xf]
        %v325 = vld [vmem:[%s299 + $0x14] sm:$0xf]
        %v326 = vld [vmem:[%s299 + $0x18] sm:$0xf]
        %v327 = vld [vmem:[%s299 + $0x1c] sm:$0xf]
        %v328 = vld [vmem:[#allocation3] sm:$0xf]
        %v329 = vld [vmem:[%s2] sm:$0x1]
        %v331 = vlaneseq
        %v332 = vshrl.u32 %v331, 7
        %v333 = vsub.s32 0, %v332
        %v334 = vrot.slane %v329, %v333
        %v344 = vunpack.c.l.b16 %v320
        %v345 = vunpack.c.l.b16 %v321
        %v346 = vunpack.c.l.b16 %v322
        %v347 = vunpack.c.l.b16 %v323
        %v348 = vunpack.c.l.b16 %v324
        %v349 = vunpack.c.l.b16 %v325
        %v350 = vunpack.c.l.b16 %v326
        %v351 = vunpack.c.l.b16 %v327
        %v352 = vpack.c.b16 %v345, %v344
        %v353 = vpack.c.b16 %v347, %v346
        %v354 = vpack.c.b16 %v349, %v348
        %v355 = vpack.c.b16 %v351, %v350
        %vm356 = vcmask 64512
        %v358 = vsel %vm356, %v352, 0
        %v361 = vsel %vm356, %v353, 0
        %v364 = vsel %vm356, %v354, 0
        %v367 = vsel %vm356, %v355, 0
        %vm369 = vcmask 1043456
        %v371 = vsel %vm369, %v328, 0
        %373 = vmatprep.subr.bf16.mxu0 0
        %374 = vmatpush1.bf16.msra.mxu0 0
        %375 = vmatprep.subr.bf16.mxu0 0
        %376 = vmatpush1.bf16.msra.mxu0 0
        %377 = vmatprep.subr.bf16.mxu0 0
        %378 = vmatpush1.bf16.msra.mxu0 0
        %379 = vmatprep.subr.bf16.mxu0 0
        %380 = vmatpush1.bf16.msra.mxu0 0
        %381 = vmatprep.subr.bf16.mxu0 0
        %382 = vmatpush1.bf16.msra.mxu0 0
        %383 = vmatprep.subr.bf16.mxu0 0
        %384 = vmatpush1.bf16.msra.mxu0 0
        %385 = vmatprep.subr.bf16.mxu0 0
        %386 = vmatpush1.bf16.msra.mxu0 0
        %387 = vmatprep.subr.bf16.mxu0 0
        %388 = vmatpush1.bf16.msra.mxu0 %v371
        %389 = vmatprep.subr.bf16.mxu0 0
        %390 = vmatpush2.bf16.msra.mxu0 0
        %391 = vmatprep.subr.bf16.mxu0 0
        %392 = vmatpush2.bf16.msra.mxu0 0
        %393 = vmatprep.subr.bf16.mxu0 0
        %394 = vmatpush2.bf16.msra.mxu0 0
        %395 = vmatprep.subr.bf16.mxu0 0
        %396 = vmatpush2.bf16.msra.mxu0 0
        %397 = vmatprep.subr.bf16.mxu0 0
        %398 = vmatpush2.bf16.msra.mxu0 0
        %399 = vmatprep.subr.bf16.mxu0 0
        %400 = vmatpush2.bf16.msra.mxu0 0
        %401 = vmatprep.subr.bf16.mxu0 0
        %402 = vmatpush2.bf16.msra.mxu0 0
        %403 = vmatprep.subr.bf16.mxu0 0
        %404 = vmatpush2.bf16.msra.mxu0 0
        %405 = vmatprep.mubr.bf16.mxu0 0
        %406 = vmatmul.mubr.bf16.gmra.mxu0 %v358
        %v407 = vpop.f32.mrf.mxu0
        %v408 = vadd.f32 %v334, %v407
        %v409 = vpop.f32.mrf.mxu0
        %v410 = vpop.f32.mrf.mxu0
        %v411 = vadd.f32 %v334, %v410
        %v412 = vpop.f32.mrf.mxu0
        %413 = vmatprep.mubr.bf16.mxu0 0
        %414 = vmatmul.mubr.bf16.gmra.mxu0 %v361
        %v415 = vpop.f32.mrf.mxu0
        %v416 = vadd.f32 %v334, %v415
        %v417 = vpop.f32.mrf.mxu0
        %v418 = vpop.f32.mrf.mxu0
        %v419 = vadd.f32 %v334, %v418
        %v420 = vpop.f32.mrf.mxu0
        %421 = vmatprep.mubr.bf16.mxu0 0
        %422 = vmatmul.mubr.bf16.gmra.mxu0 %v364
        %v423 = vpop.f32.mrf.mxu0
        %v424 = vadd.f32 %v334, %v423
        %v425 = vpop.f32.mrf.mxu0
        %v426 = vpop.f32.mrf.mxu0
        %v427 = vadd.f32 %v334, %v426
        %v428 = vpop.f32.mrf.mxu0
        %429 = vmatprep.mubr.bf16.mxu0 0
        %430 = vmatmul.mubr.bf16.gmra.mxu0 %v367
        %v431 = vpop.f32.mrf.mxu0
        %v432 = vadd.f32 %v334, %v431
        %v433 = vpop.f32.mrf.mxu0
        %v434 = vpop.f32.mrf.mxu0
        %v435 = vadd.f32 %v334, %v434
        %v436 = vpop.f32.mrf.mxu0
        %437 = vdwg.mxu0
        %v438 = vmax.f32 %v408, 0.0
        %v439 = vmax.f32 %v411, 0.0
        %v440 = vmax.f32 %v416, 0.0
        %v441 = vmax.f32 %v419, 0.0
        %v442 = vmax.f32 %v424, 0.0
        %v443 = vmax.f32 %v427, 0.0
        %v444 = vmax.f32 %v432, 0.0
        %v445 = vmax.f32 %v435, 0.0
        %v446 = vpack.c.bf16 %v439, %v438
        %v447 = vpack.c.bf16 %v441, %v440
        %v448 = vpack.c.bf16 %v443, %v442
        %v449 = vpack.c.bf16 %v445, %v444
        %v450 = vld [vmem:[#allocation2] sm:$0xff]
        %v451 = vld [vmem:[#allocation2 + $0x8] sm:$0xff]
        %v452 = vld [vmem:[#allocation2 + $0x10] sm:$0xff]
        %v453 = vld [vmem:[#allocation2 + $0x18] sm:$0xff]
        %v454 = vld [vmem:[#allocation2 + $0x20] sm:$0xff]
        %v455 = vld [vmem:[#allocation2 + $0x28] sm:$0xff]
        %v456 = vld [vmem:[#allocation2 + $0x30] sm:$0xff]
        %v457 = vld [vmem:[#allocation2 + $0x38] sm:$0xff]
        %v458 = vld [vmem:[%s255] sm:$0xf]
        %v459 = vld [vmem:[%s255 + $0x4] sm:$0xf]
        %v460 = vld [vmem:[%s255 + $0x8] sm:$0xf]
        %v461 = vld [vmem:[%s255 + $0xc] sm:$0xf]
        %v462 = vld [vmem:[%s255 + $0x10] sm:$0xf]
        %v463 = vld [vmem:[%s255 + $0x14] sm:$0xf]
        %v464 = vld [vmem:[%s255 + $0x18] sm:$0xf]
        %v465 = vld [vmem:[%s255 + $0x1c] sm:$0xf]
        %v466 = vld [vmem:[%s255 + $0x20] sm:$0xf]
        %v467 = vld [vmem:[%s255 + $0x24] sm:$0xf]
        %v468 = vld [vmem:[%s255 + $0x28] sm:$0xf]
        %v469 = vld [vmem:[%s255 + $0x2c] sm:$0xf]
        %v470 = vld [vmem:[%s255 + $0x30] sm:$0xf]
        %v471 = vld [vmem:[%s255 + $0x34] sm:$0xf]
        %v472 = vld [vmem:[%s255 + $0x38] sm:$0xf]
        %v473 = vld [vmem:[%s255 + $0x3c] sm:$0xf]
        %v490 = vunpack.c.l.b16 %v458
        %v491 = vunpack.c.l.b16 %v459
        %v492 = vunpack.c.l.b16 %v460
        %v493 = vunpack.c.l.b16 %v461
        %v494 = vunpack.c.l.b16 %v462
        %v495 = vunpack.c.l.b16 %v463
        %v496 = vunpack.c.l.b16 %v464
        %v497 = vunpack.c.l.b16 %v465
        %v498 = vunpack.c.l.b16 %v466
        %v499 = vunpack.c.l.b16 %v467
        %v500 = vunpack.c.l.b16 %v468
        %v501 = vunpack.c.l.b16 %v469
        %v502 = vunpack.c.l.b16 %v470
        %v503 = vunpack.c.l.b16 %v471
        %v504 = vunpack.c.l.b16 %v472
        %v505 = vunpack.c.l.b16 %v473
        %v506 = vpack.c.b16 %v491, %v490
        %v507 = vpack.c.b16 %v493, %v492
        %v508 = vpack.c.b16 %v495, %v494
        %v509 = vpack.c.b16 %v497, %v496
        %v510 = vpack.c.b16 %v499, %v498
        %v511 = vpack.c.b16 %v501, %v500
        %v512 = vpack.c.b16 %v503, %v502
        %v513 = vpack.c.b16 %v505, %v504
        %522 = vmatprep.subr.bf16.mxu0 0
        %523 = vmatpush1.bf16.msra.mxu0 %v513
        %524 = vmatprep.subr.bf16.mxu0 0
        %525 = vmatpush1.bf16.msra.mxu0 %v512
        %526 = vmatprep.subr.bf16.mxu0 0
        %527 = vmatpush1.bf16.msra.mxu0 %v511
        %528 = vmatprep.subr.bf16.mxu0 0
        %529 = vmatpush1.bf16.msra.mxu0 %v510
        %530 = vmatprep.subr.bf16.mxu0 0
        %531 = vmatpush1.bf16.msra.mxu0 %v509
        %532 = vmatprep.subr.bf16.mxu0 0
        %533 = vmatpush1.bf16.msra.mxu0 %v508
        %534 = vmatprep.subr.bf16.mxu0 0
        %535 = vmatpush1.bf16.msra.mxu0 %v507
        %536 = vmatprep.subr.bf16.mxu0 0
        %537 = vmatpush1.bf16.msra.mxu0 %v506
        %538 = vmatprep.subr.bf16.mxu0 0
        %539 = vmatpush2.bf16.msra.mxu0 0
        %540 = vmatprep.subr.bf16.mxu0 0
        %541 = vmatpush2.bf16.msra.mxu0 0
        %542 = vmatprep.subr.bf16.mxu0 0
        %543 = vmatpush2.bf16.msra.mxu0 0
        %544 = vmatprep.subr.bf16.mxu0 0
        %545 = vmatpush2.bf16.msra.mxu0 0
        %546 = vmatprep.subr.bf16.mxu0 0
        %547 = vmatpush2.bf16.msra.mxu0 0
        %548 = vmatprep.subr.bf16.mxu0 0
        %549 = vmatpush2.bf16.msra.mxu0 0
        %550 = vmatprep.subr.bf16.mxu0 0
        %551 = vmatpush2.bf16.msra.mxu0 0
        %552 = vmatprep.subr.bf16.mxu0 0
        %553 = vmatpush2.bf16.msra.mxu0 0
        %554 = vmatprep.mubr.bf16.mxu0 0
        %555 = vmatmul.mubr.bf16.gmra.mxu0 %v446
        %v556 = vpop.f32.mrf.mxu0
        %v557 = vadd.f32 0.0, %v556
        %v558 = vpop.f32.mrf.mxu0
        %v559 = vpop.f32.mrf.mxu0
        %v560 = vadd.f32 0.0, %v559
        %v561 = vpop.f32.mrf.mxu0
        %562 = vmatprep.mubr.bf16.mxu0 0
        %563 = vmatmul.mubr.bf16.gmra.mxu0 %v447
        %v564 = vpop.f32.mrf.mxu0
        %v565 = vadd.f32 0.0, %v564
        %v566 = vpop.f32.mrf.mxu0
        %v567 = vpop.f32.mrf.mxu0
        %v568 = vadd.f32 0.0, %v567
        %v569 = vpop.f32.mrf.mxu0
        %570 = vmatprep.mubr.bf16.mxu0 0
        %571 = vmatmul.mubr.bf16.gmra.mxu0 %v448
        %v572 = vpop.f32.mrf.mxu0
        %v573 = vadd.f32 0.0, %v572
        %v574 = vpop.f32.mrf.mxu0
        %v575 = vpop.f32.mrf.mxu0
        %v576 = vadd.f32 0.0, %v575
        %v577 = vpop.f32.mrf.mxu0
        %578 = vmatprep.mubr.bf16.mxu0 0
        %579 = vmatmul.mubr.bf16.gmra.mxu0 %v449
        %v580 = vpop.f32.mrf.mxu0
        %v581 = vadd.f32 0.0, %v580
        %v582 = vpop.f32.mrf.mxu0
        %v583 = vpop.f32.mrf.mxu0
        %v584 = vadd.f32 0.0, %v583
        %v585 = vpop.f32.mrf.mxu0
        %586 = vdwg.mxu0
        %v587 = vadd.f32 %v450, %v557
        %v588 = vadd.f32 %v451, %v560
        %v589 = vadd.f32 %v452, %v565
        %v590 = vadd.f32 %v453, %v568
        %v591 = vadd.f32 %v454, %v573
        %v592 = vadd.f32 %v455, %v576
        %v593 = vadd.f32 %v456, %v581
        %v594 = vadd.f32 %v457, %v584
        %595 = vst [vmem:[#allocation2] sm:$0xff] %v587
        %596 = vst [vmem:[#allocation2 + $0x8] sm:$0xff] %v588
        %597 = vst [vmem:[#allocation2 + $0x10] sm:$0xff] %v589
        %598 = vst [vmem:[#allocation2 + $0x18] sm:$0xff] %v590
        %599 = vst [vmem:[#allocation2 + $0x20] sm:$0xff] %v591
        %600 = vst [vmem:[#allocation2 + $0x28] sm:$0xff] %v592
        %601 = vst [vmem:[#allocation2 + $0x30] sm:$0xff] %v593
        %602 = vst [vmem:[#allocation2 + $0x38] sm:$0xff] %v594
        %p603 = scmp.eq.s32.totalorder %s25, 3
        // Predicated region
        $region53: #{_lambda_.2} parent=39 // pred_check
          %p604 = pneg %p603
        $region54: #{_lambda_.2} parent=39 // pred_check_branch
          %606 = sbr.rel (%p604) target = $region56
        $region55: #{_lambda_.2} parent=39 // pred_region
          %v607 = vld [vmem:[#allocation2] sm:$0xff]
          %v608 = vld [vmem:[#allocation2 + $0x8] sm:$0xff]
          %v609 = vld [vmem:[#allocation2 + $0x10] sm:$0xff]
          %v610 = vld [vmem:[#allocation2 + $0x18] sm:$0xff]
          %v611 = vld [vmem:[#allocation2 + $0x20] sm:$0xff]
          %v612 = vld [vmem:[#allocation2 + $0x28] sm:$0xff]
          %v613 = vld [vmem:[#allocation2 + $0x30] sm:$0xff]
          %v614 = vld [vmem:[#allocation2 + $0x38] sm:$0xff]
          %v615 = vld [vmem:[%s4] sm:$0x1]
          %v617 = vlaneseq
          %v618 = vshrl.u32 %v617, 7
          %v619 = vsub.s32 0, %v618
          %v620 = vrot.slane %v615, %v619
          %v622 = vadd.f32 %v607, %v620
          %v623 = vadd.f32 %v608, %v620
          %v624 = vadd.f32 %v609, %v620
          %v625 = vadd.f32 %v610, %v620
          %v626 = vadd.f32 %v611, %v620
          %v627 = vadd.f32 %v612, %v620
          %v628 = vadd.f32 %v613, %v620
          %v629 = vadd.f32 %v614, %v620
          %v630 = vmax.f32 %v622, 0.0
          %v631 = vmax.f32 %v623, 0.0
          %v632 = vmax.f32 %v624, 0.0
          %v633 = vmax.f32 %v625, 0.0
          %v634 = vmax.f32 %v626, 0.0
          %v635 = vmax.f32 %v627, 0.0
          %v636 = vmax.f32 %v628, 0.0
          %v637 = vmax.f32 %v629, 0.0
          %v638 = vpack.c.bf16 %v631, %v630
          %v639 = vpack.c.bf16 %v633, %v632
          %v640 = vpack.c.bf16 %v635, %v634
          %v641 = vpack.c.bf16 %v637, %v636
          %v646 = vunpack.c.l.b16 %v638
          %v647 = vunpack.c.h.b16 %v638
          %v648 = vunpack.c.l.b16 %v639
          %v649 = vunpack.c.h.b16 %v639
          %v650 = vunpack.c.l.b16 %v640
          %v651 = vunpack.c.h.b16 %v640
          %v652 = vunpack.c.l.b16 %v641
          %v653 = vunpack.c.h.b16 %v641
          %v654 = vpack.c.b16 %v646, %v646
          %v655 = vpack.c.b16 %v647, %v647
          %v656 = vpack.c.b16 %v648, %v648
          %v657 = vpack.c.b16 %v649, %v649
          %v658 = vpack.c.b16 %v650, %v650
          %v659 = vpack.c.b16 %v651, %v651
          %v660 = vpack.c.b16 %v652, %v652
          %v661 = vpack.c.b16 %v653, %v653
          %670 = vst [vmem:[%s305] sm:$0xf] %v654
          %671 = vst [vmem:[%s305 + $0x4] sm:$0xf] %v655
          %672 = vst [vmem:[%s305 + $0x8] sm:$0xf] %v656
          %673 = vst [vmem:[%s305 + $0xc] sm:$0xf] %v657
          %674 = vst [vmem:[%s305 + $0x10] sm:$0xf] %v658
          %675 = vst [vmem:[%s305 + $0x14] sm:$0xf] %v659
          %676 = vst [vmem:[%s305 + $0x18] sm:$0xf] %v660
          %677 = vst [vmem:[%s305 + $0x1c] sm:$0xf] %v661
        $region56: #{_lambda_.2} parent=39 // pred_fallthru
          _
        %s678 = smul.u32 8, %s24
        %p679 = scmp.lt.s32.totalorder %s678, 15
        %s680 = scalar_select %p679, %s678, 15
        %s681 = smul.addr %s680, 4
        %s682 = scalar_lea.vmem %s5, %s681
        // Predicated region
        $region57: #{_lambda_.2} parent=39 // pred_check
          %p683 = pneg %p167
        $region58: #{_lambda_.2} parent=39 // pred_check_branch
          %685 = sbr.rel (%p683) target = $region60
        $region59: #{_lambda_.2} parent=39 // pred_region
          %s686 = smul.u32 8, %s24
        $region60: #{_lambda_.2} parent=39 // pred_fallthru
          _
      $region40: #{_lambda_.2} parent=5 // pred_fallthru
        _
      %p687 = scmp.le.s32.totalorder 2, %s15
      // Predicated region
      $region61: #{_lambda_.2} parent=5 // pred_check
        %p688 = pneg %p687
      $region62: #{_lambda_.2} parent=5 // pred_check_branch
        %690 = sbr.rel (%p688) target = $region64
      $region63: #{_lambda_.2} parent=5 // pred_region
        %s691 = ssub.s32 %s15, 2
        // Predicated region
        $region65: #{_lambda_.2} parent=63 // pred_check
          %p692 = pneg %p173
        $region66: #{_lambda_.2} parent=63 // pred_check_branch
          %694 = sbr.rel (%p692) target = $region68
        $region67: #{_lambda_.2} parent=63 // pred_region
          %s695 = smul.u32 8, %s26
          %p696 = scmp.lt.s32.totalorder %s695, 15
          %s697 = scalar_select %p696, %s695, 15
          %s698 = smul.addr %s697, 4
          %s699 = scalar_lea.vmem %s5, %s698
        $region68: #{_lambda_.2} parent=63 // pred_fallthru
          _
      $region64: #{_lambda_.2} parent=5 // pred_fallthru
        _
    $region6: #{_lambda_.2} parent=1 // loop_footer
      %s19 = sadd.s32 1, %s15
    $region7: #{_lambda_.2} parent=1 // loop_footer_branch
      %14 = sbr.rel target = $region3
    $region8: #{_lambda_.2} parent=1 // loop_exit
      _
    %700 = vsyncpa [#allocation4], 1
    %s701 = scalar_lea.sflag [#allocation4], 1
    %702 = vsyncpa %s701, 1
    %703 = vsyncpa [#allocation6], 1
    %s704 = scalar_lea.sflag [#allocation6], 1
    %705 = vsyncpa %s704, 1

// kernel: _lambda_.3
$region0: #{_lambda_.3}
  #allocation0 [shape = 'u32[]', space=smem, size = 0x4, offset = 0x4, fixed_abs, tag = 'smem constant byte address 0x4 - core index']
  #allocation1 [shape = 'u32[144,128]{1,0:T(1,128)}', space=vmem, size = 0x12000, scoped, tag = 'internal scratch']
  %s0 = inlined_call_operand.vmem [shape: bf16[2,8192], index: 0, kind: input, shape index: {}]
  %s1 = inlined_call_operand.hbm [shape: bf16[8192,128], index: 1, kind: input, shape index: {}]
  %s2 = inlined_call_operand.vmem [shape: f32[1,128], index: 2, kind: input, shape index: {}, may-alias: {2,4}]
  %s3 = inlined_call_operand.hbm [shape: bf16[128,128], index: 3, kind: input, shape index: {}]
  %s4 = inlined_call_operand.vmem [shape: f32[1,128], index: 4, kind: input, shape index: {}, may-alias: {2,4}]
  %s5 = inlined_call_operand.hbm [shape: bf16[128,256], index: 5, kind: input, shape index: {}]
  %s6 = inlined_call_operand.vmem [shape: f32[1,256], index: 6, kind: input, shape index: {}]
  %s7 = inlined_call_operand.vmem [shape: f32[2,256], index: 7, kind: output, shape index: {}]
  %s8 = sld [smem:[#allocation0]]
  $region50: #{_lambda_.3} parent=0
    _
  %s10 = ssub.s32 1, %s8
  %s11 = scalar_select 0, %s10, %s8
  $region1: #{_lambda_.3} parent=0
    #allocation2 [shape = 'u8[2097152]{0}', space=vmem, size = 0x200000, scoped, tag = 'input window, operand 1, single buffered']
    #allocation3 [shape = 's32[1]{0}', space=sflag, size = 0x4, scoped, tag = 'scoped memory for _lambda_.3']
    #allocation4 [shape = 'u8[32768]{0}', space=vmem, size = 0x8000, scoped, tag = 'input window, operand 3, single buffered']
    #allocation5 [shape = 's32[1]{0}', space=sflag, size = 0x4, scoped, tag = 'scoped memory for _lambda_.3']
    #allocation6 [shape = 'u8[65536]{0}', space=vmem, size = 0x10000, scoped, tag = 'input window, operand 5, single buffered']
    %12 = vsyncpa [#allocation3], 0
    %13 = vsyncpa [#allocation5], 0
    // Predicated region
    $region2: #{_lambda_.3} parent=1 // pred_check
      _
    $region3: #{_lambda_.3} parent=1 // pred_check_branch
      %15 = sbr.rel (0) target = $region5
    $region4: #{_lambda_.3} parent=1 // pred_region
      _
    $region5: #{_lambda_.3} parent=1 // pred_fallthru
      _
    // Predicated region
    $region6: #{_lambda_.3} parent=1 // pred_check
      _
    $region7: #{_lambda_.3} parent=1 // pred_check_branch
      %17 = sbr.rel (0) target = $region9
    $region8: #{_lambda_.3} parent=1 // pred_region
      %s19 = ssub.s32 65536, 65536
      %20 = vsyncadd [#allocation3], %s19
      %s21 = sshll.u32 [#allocation2], 4
      %s22 = int_to_ptr.vmem [resolvable:$true] %s21
      %27 = dma.hbm_to_vmem [thread:$0]  %s1, 65536, %s22, [#allocation3], 64, 64, 4
    $region9: #{_lambda_.3} parent=1 // pred_fallthru
      _
    // Predicated region
    $region10: #{_lambda_.3} parent=1 // pred_check
      _
    $region11: #{_lambda_.3} parent=1 // pred_check_branch
      %29 = sbr.rel (0) target = $region13
    $region12: #{_lambda_.3} parent=1 // pred_region
      _
    $region13: #{_lambda_.3} parent=1 // pred_fallthru
      _
    // Predicated region
    $region14: #{_lambda_.3} parent=1 // pred_check
      _
    $region15: #{_lambda_.3} parent=1 // pred_check_branch
      %31 = sbr.rel (0) target = $region17
    $region16: #{_lambda_.3} parent=1 // pred_region
      %s33 = ssub.s32 1024, 1024
      %34 = vsyncadd [#allocation5], %s33
      %s35 = sshll.u32 [#allocation4], 4
      %s36 = int_to_ptr.vmem [resolvable:$true] %s35
      %41 = dma.hbm_to_vmem [thread:$0]  %s3, 1024, %s36, [#allocation5], 64, 64, 4
    $region17: #{_lambda_.3} parent=1 // pred_fallthru
      _
    // Predicated region
    $region18: #{_lambda_.3} parent=1 // pred_check
      _
    $region19: #{_lambda_.3} parent=1 // pred_check_branch
      %43 = sbr.rel (0) target = $region21
    $region20: #{_lambda_.3} parent=1 // pred_region
      _
    $region21: #{_lambda_.3} parent=1 // pred_fallthru
      _
    // Predicated region
    $region22: #{_lambda_.3} parent=1 // pred_check
      _
    $region23: #{_lambda_.3} parent=1 // pred_check_branch
      %45 = sbr.rel (0) target = $region25
    $region24: #{_lambda_.3} parent=1 // pred_region
      %s47 = ssub.s32 2048, 2048
      %48 = vsyncadd [#allocation5], %s47
      %s49 = sshll.u32 [#allocation6], 4
      %s50 = int_to_ptr.vmem [resolvable:$true] %s49
      %55 = dma.hbm_to_vmem [thread:$0]  %s5, 2048, %s50, [#allocation5], 128, 128, 8
    $region25: #{_lambda_.3} parent=1 // pred_fallthru
      _
    // Predicated region
    $region26: #{_lambda_.3} parent=1 // pred_check
      _
    $region27: #{_lambda_.3} parent=1 // pred_check_branch
      %57 = sbr.rel (0) target = $region29
    $region28: #{_lambda_.3} parent=1 // pred_region
      _
    $region29: #{_lambda_.3} parent=1 // pred_fallthru
      _
    // Predicated region
    $region30: #{_lambda_.3} parent=1 // pred_check
      _
    $region31: #{_lambda_.3} parent=1 // pred_check_branch
      %59 = sbr.rel (0) target = $region33
    $region32: #{_lambda_.3} parent=1 // pred_region
      %60 = dma.done [#allocation3], 65536
    $region33: #{_lambda_.3} parent=1 // pred_fallthru
      _
    // Predicated region
    $region34: #{_lambda_.3} parent=1 // pred_check
      _
    $region35: #{_lambda_.3} parent=1 // pred_check_branch
      %62 = sbr.rel (0) target = $region37
    $region36: #{_lambda_.3} parent=1 // pred_region
      %63 = dma.done [#allocation5], 1024
    $region37: #{_lambda_.3} parent=1 // pred_fallthru
      _
    // Predicated region
    $region38: #{_lambda_.3} parent=1 // pred_check
      _
    $region39: #{_lambda_.3} parent=1 // pred_check_branch
      %65 = sbr.rel (0) target = $region41
    $region40: #{_lambda_.3} parent=1 // pred_region
      %66 = dma.done [#allocation5], 2048
    $region41: #{_lambda_.3} parent=1 // pred_fallthru
      _
    %v68 = vld [vmem:[%s0] sm:$0xff]
    %v69 = vld [vmem:[%s0 + $0x8] sm:$0xff]
    %v70 = vld [vmem:[%s0 + $0x10] sm:$0xff]
    %v71 = vld [vmem:[%s0 + $0x18] sm:$0xff]
    %v72 = vld [vmem:[%s0 + $0x20] sm:$0xff]
    %v73 = vld [vmem:[%s0 + $0x28] sm:$0xff]
    %v74 = vld [vmem:[%s0 + $0x30] sm:$0xff]
    %v75 = vld [vmem:[%s0 + $0x38] sm:$0xff]
    %v76 = vld [vmem:[#allocation2] sm:$0xf]
    %v77 = vld [vmem:[#allocation2 + $0x4] sm:$0xf]
    %v78 = vld [vmem:[#allocation2 + $0x8] sm:$0xf]
    %v79 = vld [vmem:[#allocation2 + $0xc] sm:$0xf]
    %v80 = vld [vmem:[#allocation2 + $0x10] sm:$0xf]
    %v81 = vld [vmem:[#allocation2 + $0x14] sm:$0xf]
    %v82 = vld [vmem:[#allocation2 + $0x18] sm:$0xf]
    %v83 = vld [vmem:[#allocation2 + $0x1c] sm:$0xf]
    %v84 = vld [vmem:[#allocation2 + $0x20] sm:$0xf]
    %v85 = vld [vmem:[#allocation2 + $0x24] sm:$0xf]
    %v86 = vld [vmem:[#allocation2 + $0x28] sm:$0xf]
    %v87 = vld [vmem:[#allocation2 + $0x2c] sm:$0xf]
    %v88 = vld [vmem:[#allocation2 + $0x30] sm:$0xf]
    %v89 = vld [vmem:[#allocation2 + $0x34] sm:$0xf]
    %v90 = vld [vmem:[#allocation2 + $0x38] sm:$0xf]
    %v91 = vld [vmem:[#allocation2 + $0x3c] sm:$0xf]
    %v92 = vld [vmem:[#allocation2 + $0x40] sm:$0xf]
    %v93 = vld [vmem:[#allocation2 + $0x44] sm:$0xf]
    %v94 = vld [vmem:[#allocation2 + $0x48] sm:$0xf]
    %v95 = vld [vmem:[#allocation2 + $0x4c] sm:$0xf]
    %v96 = vld [vmem:[#allocation2 + $0x50] sm:$0xf]
    %v97 = vld [vmem:[#allocation2 + $0x54] sm:$0xf]
    %v98 = vld [vmem:[#allocation2 + $0x58] sm:$0xf]
    %v99 = vld [vmem:[#allocation2 + $0x5c] sm:$0xf]
    %v100 = vld [vmem:[#allocation2 + $0x60] sm:$0xf]
    %v101 = vld [vmem:[#allocation2 + $0x64] sm:$0xf]
    %v102 = vld [vmem:[#allocation2 + $0x68] sm:$0xf]
    %v103 = vld [vmem:[#allocation2 + $0x6c] sm:$0xf]
    %v104 = vld [vmem:[#allocation2 + $0x70] sm:$0xf]
    %v105 = vld [vmem:[#allocation2 + $0x74] sm:$0xf]
    %v106 = vld [vmem:[#allocation2 + $0x78] sm:$0xf]
    %v107 = vld [vmem:[#allocation2 + $0x7c] sm:$0xf]
    %v108 = vld [vmem:[#allocation2 + $0x80] sm:$0xf]
    %v109 = vld [vmem:[#allocation2 + $0x84] sm:$0xf]
    %v110 = vld [vmem:[#allocation2 + $0x88] sm:$0xf]
    %v111 = vld [vmem:[#allocation2 + $0x8c] sm:$0xf]
    %v112 = vld [vmem:[#allocation2 + $0x90] sm:$0xf]
    %v113 = vld [vmem:[#allocation2 + $0x94] sm:$0xf]
    %v114 = vld [vmem:[#allocation2 + $0x98] sm:$0xf]
    %v115 = vld [vmem:[#allocation2 + $0x9c] sm:$0xf]
    %v116 = vld [vmem:[#allocation2 + $0xa0] sm:$0xf]
    %v117 = vld [vmem:[#allocation2 + $0xa4] sm:$0xf]
    %v118 = vld [vmem:[#allocation2 + $0xa8] sm:$0xf]
    %v119 = vld [vmem:[#allocation2 + $0xac] sm:$0xf]
    %v120 = vld [vmem:[#allocation2 + $0xb0] sm:$0xf]
    %v121 = vld [vmem:[#allocation2 + $0xb4] sm:$0xf]
    %v122 = vld [vmem:[#allocation2 + $0xb8] sm:$0xf]
    %v123 = vld [vmem:[#allocation2 + $0xbc] sm:$0xf]
    %v124 = vld [vmem:[#allocation2 + $0xc0] sm:$0xf]
    %v125 = vld [vmem:[#allocation2 + $0xc4] sm:$0xf]
    %v126 = vld [vmem:[#allocation2 + $0xc8] sm:$0xf]
    %v127 = vld [vmem:[#allocation2 + $0xcc] sm:$0xf]
    %v128 = vld [vmem:[#allocation2 + $0xd0] sm:$0xf]
    %v129 = vld [vmem:[#allocation2 + $0xd4] sm:$0xf]
    %v130 = vld [vmem:[#allocation2 + $0xd8] sm:$0xf]
    %v131 = vld [vmem:[#allocation2 + $0xdc] sm:$0xf]
    %v132 = vld [vmem:[#allocation2 + $0xe0] sm:$0xf]
    %v133 = vld [vmem:[#allocation2 + $0xe4] sm:$0xf]
    %v134 = vld [vmem:[#allocation2 + $0xe8] sm:$0xf]
    %v135 = vld [vmem:[#allocation2 + $0xec] sm:$0xf]
    %v136 = vld [vmem:[#allocation2 + $0xf0] sm:$0xf]
    %v137 = vld [vmem:[#allocation2 + $0xf4] sm:$0xf]
    %v138 = vld [vmem:[#allocation2 + $0xf8] sm:$0xf]
    %v139 = vld [vmem:[#allocation2 + $0xfc] sm:$0xf]
    %v140 = vld [vmem:[#allocation2 + $0x100] sm:$0xf]
    %v141 = vld [vmem:[#allocation2 + $0x104] sm:$0xf]
    %v142 = vld [vmem:[#allocation2 + $0x108] sm:$0xf]
    %v143 = vld [vmem:[#allocation2 + $0x10c] sm:$0xf]
    %v144 = vld [vmem:[#allocation2 + $0x110] sm:$0xf]
    %v145 = vld [vmem:[#allocation2 + $0x114] sm:$0xf]
    %v146 = vld [vmem:[#allocation2 + $0x118] sm:$0xf]
    %v147 = vld [vmem:[#allocation2 + $0x11c] sm:$0xf]
    %v148 = vld [vmem:[#allocation2 + $0x120] sm:$0xf]
    %v149 = vld [vmem:[#allocation2 + $0x124] sm:$0xf]
    %v150 = vld [vmem:[#allocation2 + $0x128] sm:$0xf]
    %v151 = vld [vmem:[#allocation2 + $0x12c] sm:$0xf]
    %v152 = vld [vmem:[#allocation2 + $0x130] sm:$0xf]
    %v153 = vld [vmem:[#allocation2 + $0x134] sm:$0xf]
    %v154 = vld [vmem:[#allocation2 + $0x138] sm:$0xf]
    %v155 = vld [vmem:[#allocation2 + $0x13c] sm:$0xf]
    %v156 = vld [vmem:[#allocation2 + $0x140] sm:$0xf]
    %v157 = vld [vmem:[#allocation2 + $0x144] sm:$0xf]
    %v158 = vld [vmem:[#allocation2 + $0x148] sm:$0xf]
    %v159 = vld [vmem:[#allocation2 + $0x14c] sm:$0xf]
    %v160 = vld [vmem:[#allocation2 + $0x150] sm:$0xf]
    %v161 = vld [vmem:[#allocation2 + $0x154] sm:$0xf]
    %v162 = vld [vmem:[#allocation2 + $0x158] sm:$0xf]
    %v163 = vld [vmem:[#allocation2 + $0x15c] sm:$0xf]
    %v164 = vld [vmem:[#allocation2 + $0x160] sm:$0xf]
    %v165 = vld [vmem:[#allocation2 + $0x164] sm:$0xf]
    %v166 = vld [vmem:[#allocation2 + $0x168] sm:$0xf]
    %v167 = vld [vmem:[#allocation2 + $0x16c] sm:$0xf]
    %v168 = vld [vmem:[#allocation2 + $0x170] sm:$0xf]
    %v169 = vld [vmem:[#allocation2 + $0x174] sm:$0xf]
    %v170 = vld [vmem:[#allocation2 + $0x178] sm:$0xf]
    %v171 = vld [vmem:[#allocation2 + $0x17c] sm:$0xf]
    %v172 = vld [vmem:[#allocation2 + $0x180] sm:$0xf]
    %v173 = vld [vmem:[#allocation2 + $0x184] sm:$0xf]
    %v174 = vld [vmem:[#allocation2 + $0x188] sm:$0xf]
    %v175 = vld [vmem:[#allocation2 + $0x18c] sm:$0xf]
    %v176 = vld [vmem:[#allocation2 + $0x190] sm:$0xf]
    %v177 = vld [vmem:[#allocation2 + $0x194] sm:$0xf]
    %v178 = vld [vmem:[#allocation2 + $0x198] sm:$0xf]
    %v179 = vld [vmem:[#allocation2 + $0x19c] sm:$0xf]
    %v180 = vld [vmem:[#allocation2 + $0x1a0] sm:$0xf]
    %v181 = vld [vmem:[#allocation2 + $0x1a4] sm:$0xf]
    %v182 = vld [vmem:[#allocation2 + $0x1a8] sm:$0xf]
    %v183 = vld [vmem:[#allocation2 + $0x1ac] sm:$0xf]
    %v184 = vld [vmem:[#allocation2 + $0x1b0] sm:$0xf]
    %v185 = vld [vmem:[#allocation2 + $0x1b4] sm:$0xf]
    %v186 = vld [vmem:[#allocation2 + $0x1b8] sm:$0xf]
    %v187 = vld [vmem:[#allocation2 + $0x1bc] sm:$0xf]
    %v188 = vld [vmem:[#allocation2 + $0x1c0] sm:$0xf]
    %v189 = vld [vmem:[#allocation2 + $0x1c4] sm:$0xf]
    %v190 = vld [vmem:[#allocation2 + $0x1c8] sm:$0xf]
    %v191 = vld [vmem:[#allocation2 + $0x1cc] sm:$0xf]
    %v192 = vld [vmem:[#allocation2 + $0x1d0] sm:$0xf]
    %v193 = vld [vmem:[#allocation2 + $0x1d4] sm:$0xf]
    %v194 = vld [vmem:[#allocation2 + $0x1d8] sm:$0xf]
    %v195 = vld [vmem:[#allocation2 + $0x1dc] sm:$0xf]
    %v196 = vld [vmem:[#allocation2 + $0x1e0] sm:$0xf]
    %v197 = vld [vmem:[#allocation2 + $0x1e4] sm:$0xf]
    %v198 = vld [vmem:[#allocation2 + $0x1e8] sm:$0xf]
    %v199 = vld [vmem:[#allocation2 + $0x1ec] sm:$0xf]
    %v200 = vld [vmem:[#allocation2 + $0x1f0] sm:$0xf]
    %v201 = vld [vmem:[#allocation2 + $0x1f4] sm:$0xf]
    %v202 = vld [vmem:[#allocation2 + $0x1f8] sm:$0xf]
    %v203 = vld [vmem:[#allocation2 + $0x1fc] sm:$0xf]
    %v204 = vld [vmem:[#allocation2 + $0x200] sm:$0xf]
    %v205 = vld [vmem:[#allocation2 + $0x204] sm:$0xf]
    %v206 = vld [vmem:[#allocation2 + $0x208] sm:$0xf]
    %v207 = vld [vmem:[#allocation2 + $0x20c] sm:$0xf]
    %v208 = vld [vmem:[#allocation2 + $0x210] sm:$0xf]
    %v209 = vld [vmem:[#allocation2 + $0x214] sm:$0xf]
    %v210 = vld [vmem:[#allocation2 + $0x218] sm:$0xf]
    %v211 = vld [vmem:[#allocation2 + $0x21c] sm:$0xf]
    %v212 = vld [vmem:[#allocation2 + $0x220] sm:$0xf]
    %v213 = vld [vmem:[#allocation2 + $0x224] sm:$0xf]
    %v214 = vld [vmem:[#allocation2 + $0x228] sm:$0xf]
    %v215 = vld [vmem:[#allocation2 + $0x22c] sm:$0xf]
    %v216 = vld [vmem:[#allocation2 + $0x230] sm:$0xf]
    %v217 = vld [vmem:[#allocation2 + $0x234] sm:$0xf]
    %v218 = vld [vmem:[#allocation2 + $0x238] sm:$0xf]
    %v219 = vld [vmem:[#allocation2 + $0x23c] sm:$0xf]
    %v220 = vld [vmem:[#allocation2 + $0x240] sm:$0xf]
    %v221 = vld [vmem:[#allocation2 + $0x244] sm:$0xf]
    %v222 = vld [vmem:[#allocation2 + $0x248] sm:$0xf]
    %v223 = vld [vmem:[#allocation2 + $0x24c] sm:$0xf]
    %v224 = vld [vmem:[#allocation2 + $0x250] sm:$0xf]
    %v225 = vld [vmem:[#allocation2 + $0x254] sm:$0xf]
    %v226 = vld [vmem:[#allocation2 + $0x258] sm:$0xf]
    %v227 = vld [vmem:[#allocation2 + $0x25c] sm:$0xf]
    %v228 = vld [vmem:[#allocation2 + $0x260] sm:$0xf]
    %v229 = vld [vmem:[#allocation2 + $0x264] sm:$0xf]
    %v230 = vld [vmem:[#allocation2 + $0x268] sm:$0xf]
    %v231 = vld [vmem:[#allocation2 + $0x26c] sm:$0xf]
    %v232 = vld [vmem:[#allocation2 + $0x270] sm:$0xf]
    %v233 = vld [vmem:[#allocation2 + $0x274] sm:$0xf]
    %v234 = vld [vmem:[#allocation2 + $0x278] sm:$0xf]
    %v235 = vld [vmem:[#allocation2 + $0x27c] sm:$0xf]
    %v236 = vld [vmem:[#allocation2 + $0x280] sm:$0xf]
    %v237 = vld [vmem:[#allocation2 + $0x284] sm:$0xf]
    %v238 = vld [vmem:[#allocation2 + $0x288] sm:$0xf]
    %v239 = vld [vmem:[#allocation2 + $0x28c] sm:$0xf]
    %v240 = vld [vmem:[#allocation2 + $0x290] sm:$0xf]
    %v241 = vld [vmem:[#allocation2 + $0x294] sm:$0xf]
    %v242 = vld [vmem:[#allocation2 + $0x298] sm:$0xf]
    %v243 = vld [vmem:[#allocation2 + $0x29c] sm:$0xf]
    %v244 = vld [vmem:[#allocation2 + $0x2a0] sm:$0xf]
    %v245 = vld [vmem:[#allocation2 + $0x2a4] sm:$0xf]
    %v246 = vld [vmem:[#allocation2 + $0x2a8] sm:$0xf]
    %v247 = vld [vmem:[#allocation2 + $0x2ac] sm:$0xf]
    %v248 = vld [vmem:[#allocation2 + $0x2b0] sm:$0xf]
    %v249 = vld [vmem:[#allocation2 + $0x2b4] sm:$0xf]
    %v250 = vld [vmem:[#allocation2 + $0x2b8] sm:$0xf]
    %v251 = vld [vmem:[#allocation2 + $0x2bc] sm:$0xf]
    %v252 = vld [vmem:[#allocation2 + $0x2c0] sm:$0xf]
    %v253 = vld [vmem:[#allocation2 + $0x2c4] sm:$0xf]
    %v254 = vld [vmem:[#allocation2 + $0x2c8] sm:$0xf]
    %v255 = vld [vmem:[#allocation2 + $0x2cc] sm:$0xf]
    %v256 = vld [vmem:[#allocation2 + $0x2d0] sm:$0xf]
    %v257 = vld [vmem:[#allocation2 + $0x2d4] sm:$0xf]
    %v258 = vld [vmem:[#allocation2 + $0x2d8] sm:$0xf]
    %v259 = vld [vmem:[#allocation2 + $0x2dc] sm:$0xf]
    %v260 = vld [vmem:[#allocation2 + $0x2e0] sm:$0xf]
    %v261 = vld [vmem:[#allocation2 + $0x2e4] sm:$0xf]
    %v262 = vld [vmem:[#allocation2 + $0x2e8] sm:$0xf]
    %v263 = vld [vmem:[#allocation2 + $0x2ec] sm:$0xf]
    %v264 = vld [vmem:[#allocation2 + $0x2f0] sm:$0xf]
    %v265 = vld [vmem:[#allocation2 + $0x2f4] sm:$0xf]
    %v266 = vld [vmem:[#allocation2 + $0x2f8] sm:$0xf]
    %v267 = vld [vmem:[#allocation2 + $0x2fc] sm:$0xf]
    %v268 = vld [vmem:[#allocation2 + $0x300] sm:$0xf]
    %v269 = vld [vmem:[#allocation2 + $0x304] sm:$0xf]
    %v270 = vld [vmem:[#allocation2 + $0x308] sm:$0xf]
    %v271 = vld [vmem:[#allocation2 + $0x30c] sm:$0xf]
    %v272 = vld [vmem:[#allocation2 + $0x310] sm:$0xf]
    %v273 = vld [vmem:[#allocation2 + $0x314] sm:$0xf]
    %v274 = vld [vmem:[#allocation2 + $0x318] sm:$0xf]
    %v275 = vld [vmem:[#allocation2 + $0x31c] sm:$0xf]
    %v276 = vld [vmem:[#allocation2 + $0x320] sm:$0xf]
    %v277 = vld [vmem:[#allocation2 + $0x324] sm:$0xf]
    %v278 = vld [vmem:[#allocation2 + $0x328] sm:$0xf]
    %v279 = vld [vmem:[#allocation2 + $0x32c] sm:$0xf]
    %v280 = vld [vmem:[#allocation2 + $0x330] sm:$0xf]
    %v281 = vld [vmem:[#allocation2 + $0x334] sm:$0xf]
    %v282 = vld [vmem:[#allocation2 + $0x338] sm:$0xf]
    %v283 = vld [vmem:[#allocation2 + $0x33c] sm:$0xf]
    %v284 = vld [vmem:[#allocation2 + $0x340] sm:$0xf]
    %v285 = vld [vmem:[#allocation2 + $0x344] sm:$0xf]
    %v286 = vld [vmem:[#allocation2 + $0x348] sm:$0xf]
    %v287 = vld [vmem:[#allocation2 + $0x34c] sm:$0xf]
    %v288 = vld [vmem:[#allocation2 + $0x350] sm:$0xf]
    %v289 = vld [vmem:[#allocation2 + $0x354] sm:$0xf]
    %v290 = vld [vmem:[#allocation2 + $0x358] sm:$0xf]
    %v291 = vld [vmem:[#allocation2 + $0x35c] sm:$0xf]
    %v292 = vld [vmem:[#allocation2 + $0x360] sm:$0xf]
    %v293 = vld [vmem:[#allocation2 + $0x364] sm:$0xf]
    %v294 = vld [vmem:[#allocation2 + $0x368] sm:$0xf]
    %v295 = vld [vmem:[#allocation2 + $0x36c] sm:$0xf]
    %v296 = vld [vmem:[#allocation2 + $0x370] sm:$0xf]
    %v297 = vld [vmem:[#allocation2 + $0x374] sm:$0xf]
    %v298 = vld [vmem:[#allocation2 + $0x378] sm:$0xf]
    %v299 = vld [vmem:[#allocation2 + $0x37c] sm:$0xf]
    %v300 = vld [vmem:[#allocation2 + $0x380] sm:$0xf]
    %v301 = vld [vmem:[#allocation2 + $0x384] sm:$0xf]
    %v302 = vld [vmem:[#allocation2 + $0x388] sm:$0xf]
    %v303 = vld [vmem:[#allocation2 + $0x38c] sm:$0xf]
    %v304 = vld [vmem:[#allocation2 + $0x390] sm:$0xf]
    %v305 = vld [vmem:[#allocation2 + $0x394] sm:$0xf]
    %v306 = vld [vmem:[#allocation2 + $0x398] sm:$0xf]
    %v307 = vld [vmem:[#allocation2 + $0x39c] sm:$0xf]
    %v308 = vld [vmem:[#allocation2 + $0x3a0] sm:$0xf]
    %v309 = vld [vmem:[#allocation2 + $0x3a4] sm:$0xf]
    %v310 = vld [vmem:[#allocation2 + $0x3a8] sm:$0xf]
    %v311 = vld [vmem:[#allocation2 + $0x3ac] sm:$0xf]
    %v312 = vld [vmem:[#allocation2 + $0x3b0] sm:$0xf]
    %v313 = vld [vmem:[#allocation2 + $0x3b4] sm:$0xf]
    %v314 = vld [vmem:[#allocation2 + $0x3b8] sm:$0xf]
    %v315 = vld [vmem:[#allocation2 + $0x3bc] sm:$0xf]
    %v316 = vld [vmem:[#allocation2 + $0x3c0] sm:$0xf]
    %v317 = vld [vmem:[#allocation2 + $0x3c4] sm:$0xf]
    %v318 = vld [vmem:[#allocation2 + $0x3c8] sm:$0xf]
    %v319 = vld [vmem:[#allocation2 + $0x3cc] sm:$0xf]
    %v320 = vld [vmem:[#allocation2 + $0x3d0] sm:$0xf]
    %v321 = vld [vmem:[#allocation2 + $0x3d4] sm:$0xf]
    %v322 = vld [vmem:[#allocation2 + $0x3d8] sm:$0xf]
    %v323 = vld [vmem:[#allocation2 + $0x3dc] sm:$0xf]
    %v324 = vld [vmem:[#allocation2 + $0x3e0] sm:$0xf]
    %v325 = vld [vmem:[#allocation2 + $0x3e4] sm:$0xf]
    %v326 = vld [vmem:[#allocation2 + $0x3e8] sm:$0xf]
    %v327 = vld [vmem:[#allocation2 + $0x3ec] sm:$0xf]
    %v328 = vld [vmem:[#allocation2 + $0x3f0] sm:$0xf]
    %v329 = vld [vmem:[#allocation2 + $0x3f4] sm:$0xf]
    %v330 = vld [vmem:[#allocation2 + $0x3f8] sm:$0xf]
    %v331 = vld [vmem:[#allocation2 + $0x3fc] sm:$0xf]
    %v332 = vld [vmem:[#allocation2 + $0x400] sm:$0xf]
    %v333 = vld [vmem:[#allocation2 + $0x404] sm:$0xf]
    %v334 = vld [vmem:[#allocation2 + $0x408] sm:$0xf]
    %v335 = vld [vmem:[#allocation2 + $0x40c] sm:$0xf]
    %v336 = vld [vmem:[#allocation2 + $0x410] sm:$0xf]
    %v337 = vld [vmem:[#allocation2 + $0x414] sm:$0xf]
    %v338 = vld [vmem:[#allocation2 + $0x418] sm:$0xf]
    %v339 = vld [vmem:[#allocation2 + $0x41c] sm:$0xf]
    %v340 = vld [vmem:[#allocation2 + $0x420] sm:$0xf]
    %v341 = vld [vmem:[#allocation2 + $0x424] sm:$0xf]
    %v342 = vld [vmem:[#allocation2 + $0x428] sm:$0xf]
    %v343 = vld [vmem:[#allocation2 + $0x42c] sm:$0xf]
    %v344 = vld [vmem:[#allocation2 + $0x430] sm:$0xf]
    %v345 = vld [vmem:[#allocation2 + $0x434] sm:$0xf]
    %v346 = vld [vmem:[#allocation2 + $0x438] sm:$0xf]
    %v347 = vld [vmem:[#allocation2 + $0x43c] sm:$0xf]
    %v348 = vld [vmem:[#allocation2 + $0x440] sm:$0xf]
    %v349 = vld [vmem:[#allocation2 + $0x444] sm:$0xf]
    %v350 = vld [vmem:[#allocation2 + $0x448] sm:$0xf]
    %v351 = vld [vmem:[#allocation2 + $0x44c] sm:$0xf]
    %v352 = vld [vmem:[#allocation2 + $0x450] sm:$0xf]
    %v353 = vld [vmem:[#allocation2 + $0x454] sm:$0xf]
    %v354 = vld [vmem:[#allocation2 + $0x458] sm:$0xf]
    %v355 = vld [vmem:[#allocation2 + $0x45c] sm:$0xf]
    %v356 = vld [vmem:[#allocation2 + $0x460] sm:$0xf]
    %v357 = vld [vmem:[#allocation2 + $0x464] sm:$0xf]
    %v358 = vld [vmem:[#allocation2 + $0x468] sm:$0xf]
    %v359 = vld [vmem:[#allocation2 + $0x46c] sm:$0xf]
    %v360 = vld [vmem:[#allocation2 + $0x470] sm:$0xf]
    %v361 = vld [vmem:[#allocation2 + $0x474] sm:$0xf]
    %v362 = vld [vmem:[#allocation2 + $0x478] sm:$0xf]
    %v363 = vld [vmem:[#allocation2 + $0x47c] sm:$0xf]
    %v364 = vld [vmem:[#allocation2 + $0x480] sm:$0xf]
    %v365 = vld [vmem:[#allocation2 + $0x484] sm:$0xf]
    %v366 = vld [vmem:[#allocation2 + $0x488] sm:$0xf]
    %v367 = vld [vmem:[#allocation2 + $0x48c] sm:$0xf]
    %v368 = vld [vmem:[#allocation2 + $0x490] sm:$0xf]
    %v369 = vld [vmem:[#allocation2 + $0x494] sm:$0xf]
    %v370 = vld [vmem:[#allocation2 + $0x498] sm:$0xf]
    %v371 = vld [vmem:[#allocation2 + $0x49c] sm:$0xf]
    %v372 = vld [vmem:[#allocation2 + $0x4a0] sm:$0xf]
    %v373 = vld [vmem:[#allocation2 + $0x4a4] sm:$0xf]
    %v374 = vld [vmem:[#allocation2 + $0x4a8] sm:$0xf]
    %v375 = vld [vmem:[#allocation2 + $0x4ac] sm:$0xf]
    %v376 = vld [vmem:[#allocation2 + $0x4b0] sm:$0xf]
    %v377 = vld [vmem:[#allocation2 + $0x4b4] sm:$0xf]
    %v378 = vld [vmem:[#allocation2 + $0x4b8] sm:$0xf]
    %v379 = vld [vmem:[#allocation2 + $0x4bc] sm:$0xf]
    %v380 = vld [vmem:[#allocation2 + $0x4c0] sm:$0xf]
    %v381 = vld [vmem:[#allocation2 + $0x4c4] sm:$0xf]
    %v382 = vld [vmem:[#allocation2 + $0x4c8] sm:$0xf]
    %v383 = vld [vmem:[#allocation2 + $0x4cc] sm:$0xf]
    %v384 = vld [vmem:[#allocation2 + $0x4d0] sm:$0xf]
    %v385 = vld [vmem:[#allocation2 + $0x4d4] sm:$0xf]
    %v386 = vld [vmem:[#allocation2 + $0x4d8] sm:$0xf]
    %v387 = vld [vmem:[#allocation2 + $0x4dc] sm:$0xf]
    %v388 = vld [vmem:[#allocation2 + $0x4e0] sm:$0xf]
    %v389 = vld [vmem:[#allocation2 + $0x4e4] sm:$0xf]
    %v390 = vld [vmem:[#allocation2 + $0x4e8] sm:$0xf]
    %v391 = vld [vmem:[#allocation2 + $0x4ec] sm:$0xf]
    %v392 = vld [vmem:[#allocation2 + $0x4f0] sm:$0xf]
    %v393 = vld [vmem:[#allocation2 + $0x4f4] sm:$0xf]
    %v394 = vld [vmem:[#allocation2 + $0x4f8] sm:$0xf]
    %v395 = vld [vmem:[#allocation2 + $0x4fc] sm:$0xf]
    %v396 = vld [vmem:[#allocation2 + $0x500] sm:$0xf]
    %v397 = vld [vmem:[#allocation2 + $0x504] sm:$0xf]
    %v398 = vld [vmem:[#allocation2 + $0x508] sm:$0xf]
    %v399 = vld [vmem:[#allocation2 + $0x50c] sm:$0xf]
    %v400 = vld [vmem:[#allocation2 + $0x510] sm:$0xf]
    %v401 = vld [vmem:[#allocation2 + $0x514] sm:$0xf]
    %v402 = vld [vmem:[#allocation2 + $0x518] sm:$0xf]
    %v403 = vld [vmem:[#allocation2 + $0x51c] sm:$0xf]
    %v404 = vld [vmem:[#allocation2 + $0x520] sm:$0xf]
    %v405 = vld [vmem:[#allocation2 + $0x524] sm:$0xf]
    %v406 = vld [vmem:[#allocation2 + $0x528] sm:$0xf]
    %v407 = vld [vmem:[#allocation2 + $0x52c] sm:$0xf]
    %v408 = vld [vmem:[#allocation2 + $0x530] sm:$0xf]
    %v409 = vld [vmem:[#allocation2 + $0x534] sm:$0xf]
    %v410 = vld [vmem:[#allocation2 + $0x538] sm:$0xf]
    %v411 = vld [vmem:[#allocation2 + $0x53c] sm:$0xf]
    %v412 = vld [vmem:[#allocation2 + $0x540] sm:$0xf]
    %v413 = vld [vmem:[#allocation2 + $0x544] sm:$0xf]
    %v414 = vld [vmem:[#allocation2 + $0x548] sm:$0xf]
    %v415 = vld [vmem:[#allocation2 + $0x54c] sm:$0xf]
    %v416 = vld [vmem:[#allocation2 + $0x550] sm:$0xf]
    %v417 = vld [vmem:[#allocation2 + $0x554] sm:$0xf]
    %v418 = vld [vmem:[#allocation2 + $0x558] sm:$0xf]
    %v419 = vld [vmem:[#allocation2 + $0x55c] sm:$0xf]
    %v420 = vld [vmem:[#allocation2 + $0x560] sm:$0xf]
    %v421 = vld [vmem:[#allocation2 + $0x564] sm:$0xf]
    %v422 = vld [vmem:[#allocation2 + $0x568] sm:$0xf]
    %v423 = vld [vmem:[#allocation2 + $0x56c] sm:$0xf]
    %v424 = vld [vmem:[#allocation2 + $0x570] sm:$0xf]
    %v425 = vld [vmem:[#allocation2 + $0x574] sm:$0xf]
    %v426 = vld [vmem:[#allocation2 + $0x578] sm:$0xf]
    %v427 = vld [vmem:[#allocation2 + $0x57c] sm:$0xf]
    %v428 = vld [vmem:[#allocation2 + $0x580] sm:$0xf]
    %v429 = vld [vmem:[#allocation2 + $0x584] sm:$0xf]
    %v430 = vld [vmem:[#allocation2 + $0x588] sm:$0xf]
    %v431 = vld [vmem:[#allocation2 + $0x58c] sm:$0xf]
    %v432 = vld [vmem:[#allocation2 + $0x590] sm:$0xf]
    %v433 = vld [vmem:[#allocation2 + $0x594] sm:$0xf]
    %v434 = vld [vmem:[#allocation2 + $0x598] sm:$0xf]
    %v435 = vld [vmem:[#allocation2 + $0x59c] sm:$0xf]
    %v436 = vld [vmem:[#allocation2 + $0x5a0] sm:$0xf]
    %v437 = vld [vmem:[#allocation2 + $0x5a4] sm:$0xf]
    %v438 = vld [vmem:[#allocation2 + $0x5a8] sm:$0xf]
    %v439 = vld [vmem:[#allocation2 + $0x5ac] sm:$0xf]
    %v440 = vld [vmem:[#allocation2 + $0x5b0] sm:$0xf]
    %v441 = vld [vmem:[#allocation2 + $0x5b4] sm:$0xf]
    %v442 = vld [vmem:[#allocation2 + $0x5b8] sm:$0xf]
    %v443 = vld [vmem:[#allocation2 + $0x5bc] sm:$0xf]
    %v444 = vld [vmem:[#allocation2 + $0x5c0] sm:$0xf]
    %v445 = vld [vmem:[#allocation2 + $0x5c4] sm:$0xf]
    %v446 = vld [vmem:[#allocation2 + $0x5c8] sm:$0xf]
    %v447 = vld [vmem:[#allocation2 + $0x5cc] sm:$0xf]
    %v448 = vld [vmem:[#allocation2 + $0x5d0] sm:$0xf]
    %v449 = vld [vmem:[#allocation2 + $0x5d4] sm:$0xf]
    %v450 = vld [vmem:[#allocation2 + $0x5d8] sm:$0xf]
    %v451 = vld [vmem:[#allocation2 + $0x5dc] sm:$0xf]
    %v452 = vld [vmem:[#allocation2 + $0x5e0] sm:$0xf]
    %v453 = vld [vmem:[#allocation2 + $0x5e4] sm:$0xf]
    %v454 = vld [vmem:[#allocation2 + $0x5e8] sm:$0xf]
    %v455 = vld [vmem:[#allocation2 + $0x5ec] sm:$0xf]
    %v456 = vld [vmem:[#allocation2 + $0x5f0] sm:$0xf]
    %v457 = vld [vmem:[#allocation2 + $0x5f4] sm:$0xf]
    %v458 = vld [vmem:[#allocation2 + $0x5f8] sm:$0xf]
    %v459 = vld [vmem:[#allocation2 + $0x5fc] sm:$0xf]
    %v460 = vld [vmem:[#allocation2 + $0x600] sm:$0xf]
    %v461 = vld [vmem:[#allocation2 + $0x604] sm:$0xf]
    %v462 = vld [vmem:[#allocation2 + $0x608] sm:$0xf]
    %v463 = vld [vmem:[#allocation2 + $0x60c] sm:$0xf]
    %v464 = vld [vmem:[#allocation2 + $0x610] sm:$0xf]
    %v465 = vld [vmem:[#allocation2 + $0x614] sm:$0xf]
    %v466 = vld [vmem:[#allocation2 + $0x618] sm:$0xf]
    %v467 = vld [vmem:[#allocation2 + $0x61c] sm:$0xf]
    %v468 = vld [vmem:[#allocation2 + $0x620] sm:$0xf]
    %v469 = vld [vmem:[#allocation2 + $0x624] sm:$0xf]
    %v470 = vld [vmem:[#allocation2 + $0x628] sm:$0xf]
    %v471 = vld [vmem:[#allocation2 + $0x62c] sm:$0xf]
    %v472 = vld [vmem:[#allocation2 + $0x630] sm:$0xf]
    %v473 = vld [vmem:[#allocation2 + $0x634] sm:$0xf]
    %v474 = vld [vmem:[#allocation2 + $0x638] sm:$0xf]
    %v475 = vld [vmem:[#allocation2 + $0x63c] sm:$0xf]
    %v476 = vld [vmem:[#allocation2 + $0x640] sm:$0xf]
    %v477 = vld [vmem:[#allocation2 + $0x644] sm:$0xf]
    %v478 = vld [vmem:[#allocation2 + $0x648] sm:$0xf]
    %v479 = vld [vmem:[#allocation2 + $0x64c] sm:$0xf]
    %v480 = vld [vmem:[#allocation2 + $0x650] sm:$0xf]
    %v481 = vld [vmem:[#allocation2 + $0x654] sm:$0xf]
    %v482 = vld [vmem:[#allocation2 + $0x658] sm:$0xf]
    %v483 = vld [vmem:[#allocation2 + $0x65c] sm:$0xf]
    %v484 = vld [vmem:[#allocation2 + $0x660] sm:$0xf]
    %v485 = vld [vmem:[#allocation2 + $0x664] sm:$0xf]
    %v486 = vld [vmem:[#allocation2 + $0x668] sm:$0xf]
    %v487 = vld [vmem:[#allocation2 + $0x66c] sm:$0xf]
    %v488 = vld [vmem:[#allocation2 + $0x670] sm:$0xf]
    %v489 = vld [vmem:[#allocation2 + $0x674] sm:$0xf]
    %v490 = vld [vmem:[#allocation2 + $0x678] sm:$0xf]
    %v491 = vld [vmem:[#allocation2 + $0x67c] sm:$0xf]
    %v492 = vld [vmem:[#allocation2 + $0x680] sm:$0xf]
    %v493 = vld [vmem:[#allocation2 + $0x684] sm:$0xf]
    %v494 = vld [vmem:[#allocation2 + $0x688] sm:$0xf]
    %v495 = vld [vmem:[#allocation2 + $0x68c] sm:$0xf]
    %v496 = vld [vmem:[#allocation2 + $0x690] sm:$0xf]
    %v497 = vld [vmem:[#allocation2 + $0x694] sm:$0xf]
    %v498 = vld [vmem:[#allocation2 + $0x698] sm:$0xf]
    %v499 = vld [vmem:[#allocation2 + $0x69c] sm:$0xf]
    %v500 = vld [vmem:[#allocation2 + $0x6a0] sm:$0xf]
    %v501 = vld [vmem:[#allocation2 + $0x6a4] sm:$0xf]
    %v502 = vld [vmem:[#allocation2 + $0x6a8] sm:$0xf]
    %v503 = vld [vmem:[#allocation2 + $0x6ac] sm:$0xf]
    %v504 = vld [vmem:[#allocation2 + $0x6b0] sm:$0xf]
    %v505 = vld [vmem:[#allocation2 + $0x6b4] sm:$0xf]
    %v506 = vld [vmem:[#allocation2 + $0x6b8] sm:$0xf]
    %v507 = vld [vmem:[#allocation2 + $0x6bc] sm:$0xf]
    %v508 = vld [vmem:[#allocation2 + $0x6c0] sm:$0xf]
    %v509 = vld [vmem:[#allocation2 + $0x6c4] sm:$0xf]
    %v510 = vld [vmem:[#allocation2 + $0x6c8] sm:$0xf]
    %v511 = vld [vmem:[#allocation2 + $0x6cc] sm:$0xf]
    %v512 = vld [vmem:[#allocation2 + $0x6d0] sm:$0xf]
    %v513 = vld [vmem:[#allocation2 + $0x6d4] sm:$0xf]
    %v514 = vld [vmem:[#allocation2 + $0x6d8] sm:$0xf]
    %v515 = vld [vmem:[#allocation2 + $0x6dc] sm:$0xf]
    %v516 = vld [vmem:[#allocation2 + $0x6e0] sm:$0xf]
    %v517 = vld [vmem:[#allocation2 + $0x6e4] sm:$0xf]
    %v518 = vld [vmem:[#allocation2 + $0x6e8] sm:$0xf]
    %v519 = vld [vmem:[#allocation2 + $0x6ec] sm:$0xf]
    %v520 = vld [vmem:[#allocation2 + $0x6f0] sm:$0xf]
    %v521 = vld [vmem:[#allocation2 + $0x6f4] sm:$0xf]
    %v522 = vld [vmem:[#allocation2 + $0x6f8] sm:$0xf]
    %v523 = vld [vmem:[#allocation2 + $0x6fc] sm:$0xf]
    %v524 = vld [vmem:[#allocation2 + $0x700] sm:$0xf]
    %v525 = vld [vmem:[#allocation2 + $0x704] sm:$0xf]
    %v526 = vld [vmem:[#allocation2 + $0x708] sm:$0xf]
    %v527 = vld [vmem:[#allocation2 + $0x70c] sm:$0xf]
    %v528 = vld [vmem:[#allocation2 + $0x710] sm:$0xf]
    %v529 = vld [vmem:[#allocation2 + $0x714] sm:$0xf]
    %v530 = vld [vmem:[#allocation2 + $0x718] sm:$0xf]
    %v531 = vld [vmem:[#allocation2 + $0x71c] sm:$0xf]
    %v532 = vld [vmem:[#allocation2 + $0x720] sm:$0xf]
    %v533 = vld [vmem:[#allocation2 + $0x724] sm:$0xf]
    %v534 = vld [vmem:[#allocation2 + $0x728] sm:$0xf]
    %v535 = vld [vmem:[#allocation2 + $0x72c] sm:$0xf]
    %v536 = vld [vmem:[#allocation2 + $0x730] sm:$0xf]
    %v537 = vld [vmem:[#allocation2 + $0x734] sm:$0xf]
    %v538 = vld [vmem:[#allocation2 + $0x738] sm:$0xf]
    %v539 = vld [vmem:[#allocation2 + $0x73c] sm:$0xf]
    %v540 = vld [vmem:[#allocation2 + $0x740] sm:$0xf]
    %v541 = vld [vmem:[#allocation2 + $0x744] sm:$0xf]
    %v542 = vld [vmem:[#allocation2 + $0x748] sm:$0xf]
    %v543 = vld [vmem:[#allocation2 + $0x74c] sm:$0xf]
    %v544 = vld [vmem:[#allocation2 + $0x750] sm:$0xf]
    %v545 = vld [vmem:[#allocation2 + $0x754] sm:$0xf]
    %v546 = vld [vmem:[#allocation2 + $0x758] sm:$0xf]
    %v547 = vld [vmem:[#allocation2 + $0x75c] sm:$0xf]
    %v548 = vld [vmem:[#allocation2 + $0x760] sm:$0xf]
    %v549 = vld [vmem:[#allocation2 + $0x764] sm:$0xf]
    %v550 = vld [vmem:[#allocation2 + $0x768] sm:$0xf]
    %v551 = vld [vmem:[#allocation2 + $0x76c] sm:$0xf]
    %v552 = vld [vmem:[#allocation2 + $0x770] sm:$0xf]
    %v553 = vld [vmem:[#allocation2 + $0x774] sm:$0xf]
    %v554 = vld [vmem:[#allocation2 + $0x778] sm:$0xf]
    %v555 = vld [vmem:[#allocation2 + $0x77c] sm:$0xf]
    %v556 = vld [vmem:[#allocation2 + $0x780] sm:$0xf]
    %v557 = vld [vmem:[#allocation2 + $0x784] sm:$0xf]
    %v558 = vld [vmem:[#allocation2 + $0x788] sm:$0xf]
    %v559 = vld [vmem:[#allocation2 + $0x78c] sm:$0xf]
    %v560 = vld [vmem:[#allocation2 + $0x790] sm:$0xf]
    %v561 = vld [vmem:[#allocation2 + $0x794] sm:$0xf]
    %v562 = vld [vmem:[#allocation2 + $0x798] sm:$0xf]
    %v563 = vld [vmem:[#allocation2 + $0x79c] sm:$0xf]
    %v564 = vld [vmem:[#allocation2 + $0x7a0] sm:$0xf]
    %v565 = vld [vmem:[#allocation2 + $0x7a4] sm:$0xf]
    %v566 = vld [vmem:[#allocation2 + $0x7a8] sm:$0xf]
    %v567 = vld [vmem:[#allocation2 + $0x7ac] sm:$0xf]
    %v568 = vld [vmem:[#allocation2 + $0x7b0] sm:$0xf]
    %v569 = vld [vmem:[#allocation2 + $0x7b4] sm:$0xf]
    %v570 = vld [vmem:[#allocation2 + $0x7b8] sm:$0xf]
    %v571 = vld [vmem:[#allocation2 + $0x7bc] sm:$0xf]
    %v572 = vld [vmem:[#allocation2 + $0x7c0] sm:$0xf]
    %v573 = vld [vmem:[#allocation2 + $0x7c4] sm:$0xf]
    %v574 = vld [vmem:[#allocation2 + $0x7c8] sm:$0xf]
    %v575 = vld [vmem:[#allocation2 + $0x7cc] sm:$0xf]
    %v576 = vld [vmem:[#allocation2 + $0x7d0] sm:$0xf]
    %v577 = vld [vmem:[#allocation2 + $0x7d4] sm:$0xf]
    %v578 = vld [vmem:[#allocation2 + $0x7d8] sm:$0xf]
    %v579 = vld [vmem:[#allocation2 + $0x7dc] sm:$0xf]
    %v580 = vld [vmem:[#allocation2 + $0x7e0] sm:$0xf]
    %v581 = vld [vmem:[#allocation2 + $0x7e4] sm:$0xf]
    %v582 = vld [vmem:[#allocation2 + $0x7e8] sm:$0xf]
    %v583 = vld [vmem:[#allocation2 + $0x7ec] sm:$0xf]
    %v584 = vld [vmem:[#allocation2 + $0x7f0] sm:$0xf]
    %v585 = vld [vmem:[#allocation2 + $0x7f4] sm:$0xf]
    %v586 = vld [vmem:[#allocation2 + $0x7f8] sm:$0xf]
    %v587 = vld [vmem:[#allocation2 + $0x7fc] sm:$0xf]
    %v588 = vld [vmem:[#allocation2 + $0x800] sm:$0xf]
    %v589 = vld [vmem:[#allocation2 + $0x804] sm:$0xf]
    %v590 = vld [vmem:[#allocation2 + $0x808] sm:$0xf]
    %v591 = vld [vmem:[#allocation2 + $0x80c] sm:$0xf]
    %v592 = vld [vmem:[#allocation2 + $0x810] sm:$0xf]
    %v593 = vld [vmem:[#allocation2 + $0x814] sm:$0xf]
    %v594 = vld [vmem:[#allocation2 + $0x818] sm:$0xf]
    %v595 = vld [vmem:[#allocation2 + $0x81c] sm:$0xf]
    %v596 = vld [vmem:[#allocation2 + $0x820] sm:$0xf]
    %v597 = vld [vmem:[#allocation2 + $0x824] sm:$0xf]
    %v598 = vld [vmem:[#allocation2 + $0x828] sm:$0xf]
    %v599 = vld [vmem:[#allocation2 + $0x82c] sm:$0xf]
    %v600 = vld [vmem:[#allocation2 + $0x830] sm:$0xf]
    %v601 = vld [vmem:[#allocation2 + $0x834] sm:$0xf]
    %v602 = vld [vmem:[#allocation2 + $0x838] sm:$0xf]
    %v603 = vld [vmem:[#allocation2 + $0x83c] sm:$0xf]
    %v604 = vld [vmem:[#allocation2 + $0x840] sm:$0xf]
    %v605 = vld [vmem:[#allocation2 + $0x844] sm:$0xf]
    %v606 = vld [vmem:[#allocation2 + $0x848] sm:$0xf]
    %v607 = vld [vmem:[#allocation2 + $0x84c] sm:$0xf]
    %v608 = vld [vmem:[#allocation2 + $0x850] sm:$0xf]
    %v609 = vld [vmem:[#allocation2 + $0x854] sm:$0xf]
    %v610 = vld [vmem:[#allocation2 + $0x858] sm:$0xf]
    %v611 = vld [vmem:[#allocation2 + $0x85c] sm:$0xf]
    %v612 = vld [vmem:[#allocation2 + $0x860] sm:$0xf]
    %v613 = vld [vmem:[#allocation2 + $0x864] sm:$0xf]
    %v614 = vld [vmem:[#allocation2 + $0x868] sm:$0xf]
    %v615 = vld [vmem:[#allocation2 + $0x86c] sm:$0xf]
    %v616 = vld [vmem:[#allocation2 + $0x870] sm:$0xf]
    %v617 = vld [vmem:[#allocation2 + $0x874] sm:$0xf]
    %v618 = vld [vmem:[#allocation2 + $0x878] sm:$0xf]
    %v619 = vld [vmem:[#allocation2 + $0x87c] sm:$0xf]
    %v620 = vld [vmem:[#allocation2 + $0x880] sm:$0xf]
    %v621 = vld [vmem:[#allocation2 + $0x884] sm:$0xf]
    %v622 = vld [vmem:[#allocation2 + $0x888] sm:$0xf]
    %v623 = vld [vmem:[#allocation2 + $0x88c] sm:$0xf]
    %v624 = vld [vmem:[#allocation2 + $0x890] sm:$0xf]
    %v625 = vld [vmem:[#allocation2 + $0x894] sm:$0xf]
    %v626 = vld [vmem:[#allocation2 + $0x898] sm:$0xf]
    %v627 = vld [vmem:[#allocation2 + $0x89c] sm:$0xf]
    %v628 = vld [vmem:[#allocation2 + $0x8a0] sm:$0xf]
    %v629 = vld [vmem:[#allocation2 + $0x8a4] sm:$0xf]
    %v630 = vld [vmem:[#allocation2 + $0x8a8] sm:$0xf]
    %v631 = vld [vmem:[#allocation2 + $0x8ac] sm:$0xf]
    %v632 = vld [vmem:[#allocation2 + $0x8b0] sm:$0xf]
    %v633 = vld [vmem:[#allocation2 + $0x8b4] sm:$0xf]
    %v634 = vld [vmem:[#allocation2 + $0x8b8] sm:$0xf]
    %v635 = vld [vmem:[#allocation2 + $0x8bc] sm:$0xf]
    %v636 = vld [vmem:[#allocation2 + $0x8c0] sm:$0xf]
    %v637 = vld [vmem:[#allocation2 + $0x8c4] sm:$0xf]
    %v638 = vld [vmem:[#allocation2 + $0x8c8] sm:$0xf]
    %v639 = vld [vmem:[#allocation2 + $0x8cc] sm:$0xf]
    %v640 = vld [vmem:[#allocation2 + $0x8d0] sm:$0xf]
    %v641 = vld [vmem:[#allocation2 + $0x8d4] sm:$0xf]
    %v642 = vld [vmem:[#allocation2 + $0x8d8] sm:$0xf]
    %v643 = vld [vmem:[#allocation2 + $0x8dc] sm:$0xf]
    %v644 = vld [vmem:[#allocation2 + $0x8e0] sm:$0xf]
    %v645 = vld [vmem:[#allocation2 + $0x8e4] sm:$0xf]
    %v646 = vld [vmem:[#allocation2 + $0x8e8] sm:$0xf]
    %v647 = vld [vmem:[#allocation2 + $0x8ec] sm:$0xf]
    %v648 = vld [vmem:[#allocation2 + $0x8f0] sm:$0xf]
    %v649 = vld [vmem:[#allocation2 + $0x8f4] sm:$0xf]
    %v650 = vld [vmem:[#allocation2 + $0x8f8] sm:$0xf]
    %v651 = vld [vmem:[#allocation2 + $0x8fc] sm:$0xf]
    %v652 = vld [vmem:[#allocation2 + $0x900] sm:$0xf]
    %v653 = vld [vmem:[#allocation2 + $0x904] sm:$0xf]
    %v654 = vld [vmem:[#allocation2 + $0x908] sm:$0xf]
    %v655 = vld [vmem:[#allocation2 + $0x90c] sm:$0xf]
    %v656 = vld [vmem:[#allocation2 + $0x910] sm:$0xf]
    %v657 = vld [vmem:[#allocation2 + $0x914] sm:$0xf]
    %v658 = vld [vmem:[#allocation2 + $0x918] sm:$0xf]
    %v659 = vld [vmem:[#allocation2 + $0x91c] sm:$0xf]
    %v660 = vld [vmem:[#allocation2 + $0x920] sm:$0xf]
    %v661 = vld [vmem:[#allocation2 + $0x924] sm:$0xf]
    %v662 = vld [vmem:[#allocation2 + $0x928] sm:$0xf]
    %v663 = vld [vmem:[#allocation2 + $0x92c] sm:$0xf]
    %v664 = vld [vmem:[#allocation2 + $0x930] sm:$0xf]
    %v665 = vld [vmem:[#allocation2 + $0x934] sm:$0xf]
    %v666 = vld [vmem:[#allocation2 + $0x938] sm:$0xf]
    %v667 = vld [vmem:[#allocation2 + $0x93c] sm:$0xf]
    %v668 = vld [vmem:[#allocation2 + $0x940] sm:$0xf]
    %v669 = vld [vmem:[#allocation2 + $0x944] sm:$0xf]
    %v670 = vld [vmem:[#allocation2 + $0x948] sm:$0xf]
    %v671 = vld [vmem:[#allocation2 + $0x94c] sm:$0xf]
    %v672 = vld [vmem:[#allocation2 + $0x950] sm:$0xf]
    %v673 = vld [vmem:[#allocation2 + $0x954] sm:$0xf]
    %v674 = vld [vmem:[#allocation2 + $0x958] sm:$0xf]
    %v675 = vld [vmem:[#allocation2 + $0x95c] sm:$0xf]
    %v676 = vld [vmem:[#allocation2 + $0x960] sm:$0xf]
    %v677 = vld [vmem:[#allocation2 + $0x964] sm:$0xf]
    %v678 = vld [vmem:[#allocation2 + $0x968] sm:$0xf]
    %v679 = vld [vmem:[#allocation2 + $0x96c] sm:$0xf]
    %v680 = vld [vmem:[#allocation2 + $0x970] sm:$0xf]
    %v681 = vld [vmem:[#allocation2 + $0x974] sm:$0xf]
    %v682 = vld [vmem:[#allocation2 + $0x978] sm:$0xf]
    %v683 = vld [vmem:[#allocation2 + $0x97c] sm:$0xf]
    %v684 = vld [vmem:[#allocation2 + $0x980] sm:$0xf]
    %v685 = vld [vmem:[#allocation2 + $0x984] sm:$0xf]
    %v686 = vld [vmem:[#allocation2 + $0x988] sm:$0xf]
    %v687 = vld [vmem:[#allocation2 + $0x98c] sm:$0xf]
    %v688 = vld [vmem:[#allocation2 + $0x990] sm:$0xf]
    %v689 = vld [vmem:[#allocation2 + $0x994] sm:$0xf]
    %v690 = vld [vmem:[#allocation2 + $0x998] sm:$0xf]
    %v691 = vld [vmem:[#allocation2 + $0x99c] sm:$0xf]
    %v692 = vld [vmem:[#allocation2 + $0x9a0] sm:$0xf]
    %v693 = vld [vmem:[#allocation2 + $0x9a4] sm:$0xf]
    %v694 = vld [vmem:[#allocation2 + $0x9a8] sm:$0xf]
    %v695 = vld [vmem:[#allocation2 + $0x9ac] sm:$0xf]
    %v696 = vld [vmem:[#allocation2 + $0x9b0] sm:$0xf]
    %v697 = vld [vmem:[#allocation2 + $0x9b4] sm:$0xf]
    %v698 = vld [vmem:[#allocation2 + $0x9b8] sm:$0xf]
    %v699 = vld [vmem:[#allocation2 + $0x9bc] sm:$0xf]
    %v700 = vld [vmem:[#allocation2 + $0x9c0] sm:$0xf]
    %v701 = vld [vmem:[#allocation2 + $0x9c4] sm:$0xf]
    %v702 = vld [vmem:[#allocation2 + $0x9c8] sm:$0xf]
    %v703 = vld [vmem:[#allocation2 + $0x9cc] sm:$0xf]
    %v704 = vld [vmem:[#allocation2 + $0x9d0] sm:$0xf]
    %v705 = vld [vmem:[#allocation2 + $0x9d4] sm:$0xf]
    %v706 = vld [vmem:[#allocation2 + $0x9d8] sm:$0xf]
    %v707 = vld [vmem:[#allocation2 + $0x9dc] sm:$0xf]
    %v708 = vld [vmem:[#allocation2 + $0x9e0] sm:$0xf]
    %v709 = vld [vmem:[#allocation2 + $0x9e4] sm:$0xf]
    %v710 = vld [vmem:[#allocation2 + $0x9e8] sm:$0xf]
    %v711 = vld [vmem:[#allocation2 + $0x9ec] sm:$0xf]
    %v712 = vld [vmem:[#allocation2 + $0x9f0] sm:$0xf]
    %v713 = vld [vmem:[#allocation2 + $0x9f4] sm:$0xf]
    %v714 = vld [vmem:[#allocation2 + $0x9f8] sm:$0xf]
    %v715 = vld [vmem:[#allocation2 + $0x9fc] sm:$0xf]
    %v716 = vld [vmem:[#allocation2 + $0xa00] sm:$0xf]
    %v717 = vld [vmem:[#allocation2 + $0xa04] sm:$0xf]
    %v718 = vld [vmem:[#allocation2 + $0xa08] sm:$0xf]
    %v719 = vld [vmem:[#allocation2 + $0xa0c] sm:$0xf]
    %v720 = vld [vmem:[#allocation2 + $0xa10] sm:$0xf]
    %v721 = vld [vmem:[#allocation2 + $0xa14] sm:$0xf]
    %v722 = vld [vmem:[#allocation2 + $0xa18] sm:$0xf]
    %v723 = vld [vmem:[#allocation2 + $0xa1c] sm:$0xf]
    %v724 = vld [vmem:[#allocation2 + $0xa20] sm:$0xf]
    %v725 = vld [vmem:[#allocation2 + $0xa24] sm:$0xf]
    %v726 = vld [vmem:[#allocation2 + $0xa28] sm:$0xf]
    %v727 = vld [vmem:[#allocation2 + $0xa2c] sm:$0xf]
    %v728 = vld [vmem:[#allocation2 + $0xa30] sm:$0xf]
    %v729 = vld [vmem:[#allocation2 + $0xa34] sm:$0xf]
    %v730 = vld [vmem:[#allocation2 + $0xa38] sm:$0xf]
    %v731 = vld [vmem:[#allocation2 + $0xa3c] sm:$0xf]
    %v732 = vld [vmem:[#allocation2 + $0xa40] sm:$0xf]
    %v733 = vld [vmem:[#allocation2 + $0xa44] sm:$0xf]
    %v734 = vld [vmem:[#allocation2 + $0xa48] sm:$0xf]
    %v735 = vld [vmem:[#allocation2 + $0xa4c] sm:$0xf]
    %v736 = vld [vmem:[#allocation2 + $0xa50] sm:$0xf]
    %v737 = vld [vmem:[#allocation2 + $0xa54] sm:$0xf]
    %v738 = vld [vmem:[#allocation2 + $0xa58] sm:$0xf]
    %v739 = vld [vmem:[#allocation2 + $0xa5c] sm:$0xf]
    %v740 = vld [vmem:[#allocation2 + $0xa60] sm:$0xf]
    %v741 = vld [vmem:[#allocation2 + $0xa64] sm:$0xf]
    %v742 = vld [vmem:[#allocation2 + $0xa68] sm:$0xf]
    %v743 = vld [vmem:[#allocation2 + $0xa6c] sm:$0xf]
    %v744 = vld [vmem:[#allocation2 + $0xa70] sm:$0xf]
    %v745 = vld [vmem:[#allocation2 + $0xa74] sm:$0xf]
    %v746 = vld [vmem:[#allocation2 + $0xa78] sm:$0xf]
    %v747 = vld [vmem:[#allocation2 + $0xa7c] sm:$0xf]
    %v748 = vld [vmem:[#allocation2 + $0xa80] sm:$0xf]
    %v749 = vld [vmem:[#allocation2 + $0xa84] sm:$0xf]
    %v750 = vld [vmem:[#allocation2 + $0xa88] sm:$0xf]
    %v751 = vld [vmem:[#allocation2 + $0xa8c] sm:$0xf]
    %v752 = vld [vmem:[#allocation2 + $0xa90] sm:$0xf]
    %v753 = vld [vmem:[#allocation2 + $0xa94] sm:$0xf]
    %v754 = vld [vmem:[#allocation2 + $0xa98] sm:$0xf]
    %v755 = vld [vmem:[#allocation2 + $0xa9c] sm:$0xf]
    %v756 = vld [vmem:[#allocation2 + $0xaa0] sm:$0xf]
    %v757 = vld [vmem:[#allocation2 + $0xaa4] sm:$0xf]
    %v758 = vld [vmem:[#allocation2 + $0xaa8] sm:$0xf]
    %v759 = vld [vmem:[#allocation2 + $0xaac] sm:$0xf]
    %v760 = vld [vmem:[#allocation2 + $0xab0] sm:$0xf]
    %v761 = vld [vmem:[#allocation2 + $0xab4] sm:$0xf]
    %v762 = vld [vmem:[#allocation2 + $0xab8] sm:$0xf]
    %v763 = vld [vmem:[#allocation2 + $0xabc] sm:$0xf]
    %v764 = vld [vmem:[#allocation2 + $0xac0] sm:$0xf]
    %v765 = vld [vmem:[#allocation2 + $0xac4] sm:$0xf]
    %v766 = vld [vmem:[#allocation2 + $0xac8] sm:$0xf]
    %v767 = vld [vmem:[#allocation2 + $0xacc] sm:$0xf]
    %v768 = vld [vmem:[#allocation2 + $0xad0] sm:$0xf]
    %v769 = vld [vmem:[#allocation2 + $0xad4] sm:$0xf]
    %v770 = vld [vmem:[#allocation2 + $0xad8] sm:$0xf]
    %v771 = vld [vmem:[#allocation2 + $0xadc] sm:$0xf]
    %v772 = vld [vmem:[#allocation2 + $0xae0] sm:$0xf]
    %v773 = vld [vmem:[#allocation2 + $0xae4] sm:$0xf]
    %v774 = vld [vmem:[#allocation2 + $0xae8] sm:$0xf]
    %v775 = vld [vmem:[#allocation2 + $0xaec] sm:$0xf]
    %v776 = vld [vmem:[#allocation2 + $0xaf0] sm:$0xf]
    %v777 = vld [vmem:[#allocation2 + $0xaf4] sm:$0xf]
    %v778 = vld [vmem:[#allocation2 + $0xaf8] sm:$0xf]
    %v779 = vld [vmem:[#allocation2 + $0xafc] sm:$0xf]
    %v780 = vld [vmem:[#allocation2 + $0xb00] sm:$0xf]
    %v781 = vld [vmem:[#allocation2 + $0xb04] sm:$0xf]
    %v782 = vld [vmem:[#allocation2 + $0xb08] sm:$0xf]
    %v783 = vld [vmem:[#allocation2 + $0xb0c] sm:$0xf]
    %v784 = vld [vmem:[#allocation2 + $0xb10] sm:$0xf]
    %v785 = vld [vmem:[#allocation2 + $0xb14] sm:$0xf]
    %v786 = vld [vmem:[#allocation2 + $0xb18] sm:$0xf]
    %v787 = vld [vmem:[#allocation2 + $0xb1c] sm:$0xf]
    %v788 = vld [vmem:[#allocation2 + $0xb20] sm:$0xf]
    %v789 = vld [vmem:[#allocation2 + $0xb24] sm:$0xf]
    %v790 = vld [vmem:[#allocation2 + $0xb28] sm:$0xf]
    %v791 = vld [vmem:[#allocation2 + $0xb2c] sm:$0xf]
    %v792 = vld [vmem:[#allocation2 + $0xb30] sm:$0xf]
    %v793 = vld [vmem:[#allocation2 + $0xb34] sm:$0xf]
    %v794 = vld [vmem:[#allocation2 + $0xb38] sm:$0xf]
    %v795 = vld [vmem:[#allocation2 + $0xb3c] sm:$0xf]
    %v796 = vld [vmem:[#allocation2 + $0xb40] sm:$0xf]
    %v797 = vld [vmem:[#allocation2 + $0xb44] sm:$0xf]
    %v798 = vld [vmem:[#allocation2 + $0xb48] sm:$0xf]
    %v799 = vld [vmem:[#allocation2 + $0xb4c] sm:$0xf]
    %v800 = vld [vmem:[#allocation2 + $0xb50] sm:$0xf]
    %v801 = vld [vmem:[#allocation2 + $0xb54] sm:$0xf]
    %v802 = vld [vmem:[#allocation2 + $0xb58] sm:$0xf]
    %v803 = vld [vmem:[#allocation2 + $0xb5c] sm:$0xf]
    %v804 = vld [vmem:[#allocation2 + $0xb60] sm:$0xf]
    %v805 = vld [vmem:[#allocation2 + $0xb64] sm:$0xf]
    %v806 = vld [vmem:[#allocation2 + $0xb68] sm:$0xf]
    %v807 = vld [vmem:[#allocation2 + $0xb6c] sm:$0xf]
    %v808 = vld [vmem:[#allocation2 + $0xb70] sm:$0xf]
    %v809 = vld [vmem:[#allocation2 + $0xb74] sm:$0xf]
    %v810 = vld [vmem:[#allocation2 + $0xb78] sm:$0xf]
    %v811 = vld [vmem:[#allocation2 + $0xb7c] sm:$0xf]
    %v812 = vld [vmem:[#allocation2 + $0xb80] sm:$0xf]
    %v813 = vld [vmem:[#allocation2 + $0xb84] sm:$0xf]
    %v814 = vld [vmem:[#allocation2 + $0xb88] sm:$0xf]
    %v815 = vld [vmem:[#allocation2 + $0xb8c] sm:$0xf]
    %v816 = vld [vmem:[#allocation2 + $0xb90] sm:$0xf]
    %v817 = vld [vmem:[#allocation2 + $0xb94] sm:$0xf]
    %v818 = vld [vmem:[#allocation2 + $0xb98] sm:$0xf]
    %v819 = vld [vmem:[#allocation2 + $0xb9c] sm:$0xf]
    %v820 = vld [vmem:[#allocation2 + $0xba0] sm:$0xf]
    %v821 = vld [vmem:[#allocation2 + $0xba4] sm:$0xf]
    %v822 = vld [vmem:[#allocation2 + $0xba8] sm:$0xf]
    %v823 = vld [vmem:[#allocation2 + $0xbac] sm:$0xf]
    %v824 = vld [vmem:[#allocation2 + $0xbb0] sm:$0xf]
    %v825 = vld [vmem:[#allocation2 + $0xbb4] sm:$0xf]
    %v826 = vld [vmem:[#allocation2 + $0xbb8] sm:$0xf]
    %v827 = vld [vmem:[#allocation2 + $0xbbc] sm:$0xf]
    %v828 = vld [vmem:[#allocation2 + $0xbc0] sm:$0xf]
    %v829 = vld [vmem:[#allocation2 + $0xbc4] sm:$0xf]
    %v830 = vld [vmem:[#allocation2 + $0xbc8] sm:$0xf]
    %v831 = vld [vmem:[#allocation2 + $0xbcc] sm:$0xf]
    %v832 = vld [vmem:[#allocation2 + $0xbd0] sm:$0xf]
    %v833 = vld [vmem:[#allocation2 + $0xbd4] sm:$0xf]
    %v834 = vld [vmem:[#allocation2 + $0xbd8] sm:$0xf]
    %v835 = vld [vmem:[#allocation2 + $0xbdc] sm:$0xf]
    %v836 = vld [vmem:[#allocation2 + $0xbe0] sm:$0xf]
    %v837 = vld [vmem:[#allocation2 + $0xbe4] sm:$0xf]
    %v838 = vld [vmem:[#allocation2 + $0xbe8] sm:$0xf]
    %v839 = vld [vmem:[#allocation2 + $0xbec] sm:$0xf]
    %v840 = vld [vmem:[#allocation2 + $0xbf0] sm:$0xf]
    %v841 = vld [vmem:[#allocation2 + $0xbf4] sm:$0xf]
    %v842 = vld [vmem:[#allocation2 + $0xbf8] sm:$0xf]
    %v843 = vld [vmem:[#allocation2 + $0xbfc] sm:$0xf]
    %v844 = vld [vmem:[#allocation2 + $0xc00] sm:$0xf]
    %v845 = vld [vmem:[#allocation2 + $0xc04] sm:$0xf]
    %v846 = vld [vmem:[#allocation2 + $0xc08] sm:$0xf]
    %v847 = vld [vmem:[#allocation2 + $0xc0c] sm:$0xf]
    %v848 = vld [vmem:[#allocation2 + $0xc10] sm:$0xf]
    %v849 = vld [vmem:[#allocation2 + $0xc14] sm:$0xf]
    %v850 = vld [vmem:[#allocation2 + $0xc18] sm:$0xf]
    %v851 = vld [vmem:[#allocation2 + $0xc1c] sm:$0xf]
    %v852 = vld [vmem:[#allocation2 + $0xc20] sm:$0xf]
    %v853 = vld [vmem:[#allocation2 + $0xc24] sm:$0xf]
    %v854 = vld [vmem:[#allocation2 + $0xc28] sm:$0xf]
    %v855 = vld [vmem:[#allocation2 + $0xc2c] sm:$0xf]
    %v856 = vld [vmem:[#allocation2 + $0xc30] sm:$0xf]
    %v857 = vld [vmem:[#allocation2 + $0xc34] sm:$0xf]
    %v858 = vld [vmem:[#allocation2 + $0xc38] sm:$0xf]
    %v859 = vld [vmem:[#allocation2 + $0xc3c] sm:$0xf]
    %v860 = vld [vmem:[#allocation2 + $0xc40] sm:$0xf]
    %v861 = vld [vmem:[#allocation2 + $0xc44] sm:$0xf]
    %v862 = vld [vmem:[#allocation2 + $0xc48] sm:$0xf]
    %v863 = vld [vmem:[#allocation2 + $0xc4c] sm:$0xf]
    %v864 = vld [vmem:[#allocation2 + $0xc50] sm:$0xf]
    %v865 = vld [vmem:[#allocation2 + $0xc54] sm:$0xf]
    %v866 = vld [vmem:[#allocation2 + $0xc58] sm:$0xf]
    %v867 = vld [vmem:[#allocation2 + $0xc5c] sm:$0xf]
    %v868 = vld [vmem:[#allocation2 + $0xc60] sm:$0xf]
    %v869 = vld [vmem:[#allocation2 + $0xc64] sm:$0xf]
    %v870 = vld [vmem:[#allocation2 + $0xc68] sm:$0xf]
    %v871 = vld [vmem:[#allocation2 + $0xc6c] sm:$0xf]
    %v872 = vld [vmem:[#allocation2 + $0xc70] sm:$0xf]
    %v873 = vld [vmem:[#allocation2 + $0xc74] sm:$0xf]
    %v874 = vld [vmem:[#allocation2 + $0xc78] sm:$0xf]
    %v875 = vld [vmem:[#allocation2 + $0xc7c] sm:$0xf]
    %v876 = vld [vmem:[#allocation2 + $0xc80] sm:$0xf]
    %v877 = vld [vmem:[#allocation2 + $0xc84] sm:$0xf]
    %v878 = vld [vmem:[#allocation2 + $0xc88] sm:$0xf]
    %v879 = vld [vmem:[#allocation2 + $0xc8c] sm:$0xf]
    %v880 = vld [vmem:[#allocation2 + $0xc90] sm:$0xf]
    %v881 = vld [vmem:[#allocation2 + $0xc94] sm:$0xf]
    %v882 = vld [vmem:[#allocation2 + $0xc98] sm:$0xf]
    %v883 = vld [vmem:[#allocation2 + $0xc9c] sm:$0xf]
    %v884 = vld [vmem:[#allocation2 + $0xca0] sm:$0xf]
    %v885 = vld [vmem:[#allocation2 + $0xca4] sm:$0xf]
    %v886 = vld [vmem:[#allocation2 + $0xca8] sm:$0xf]
    %v887 = vld [vmem:[#allocation2 + $0xcac] sm:$0xf]
    %v888 = vld [vmem:[#allocation2 + $0xcb0] sm:$0xf]
    %v889 = vld [vmem:[#allocation2 + $0xcb4] sm:$0xf]
    %v890 = vld [vmem:[#allocation2 + $0xcb8] sm:$0xf]
    %v891 = vld [vmem:[#allocation2 + $0xcbc] sm:$0xf]
    %v892 = vld [vmem:[#allocation2 + $0xcc0] sm:$0xf]
    %v893 = vld [vmem:[#allocation2 + $0xcc4] sm:$0xf]
    %v894 = vld [vmem:[#allocation2 + $0xcc8] sm:$0xf]
    %v895 = vld [vmem:[#allocation2 + $0xccc] sm:$0xf]
    %v896 = vld [vmem:[#allocation2 + $0xcd0] sm:$0xf]
    %v897 = vld [vmem:[#allocation2 + $0xcd4] sm:$0xf]
    %v898 = vld [vmem:[#allocation2 + $0xcd8] sm:$0xf]
    %v899 = vld [vmem:[#allocation2 + $0xcdc] sm:$0xf]
    %v900 = vld [vmem:[#allocation2 + $0xce0] sm:$0xf]
    %v901 = vld [vmem:[#allocation2 + $0xce4] sm:$0xf]
    %v902 = vld [vmem:[#allocation2 + $0xce8] sm:$0xf]
    %v903 = vld [vmem:[#allocation2 + $0xcec] sm:$0xf]
    %v904 = vld [vmem:[#allocation2 + $0xcf0] sm:$0xf]
    %v905 = vld [vmem:[#allocation2 + $0xcf4] sm:$0xf]
    %v906 = vld [vmem:[#allocation2 + $0xcf8] sm:$0xf]
    %v907 = vld [vmem:[#allocation2 + $0xcfc] sm:$0xf]
    %v908 = vld [vmem:[#allocation2 + $0xd00] sm:$0xf]
    %v909 = vld [vmem:[#allocation2 + $0xd04] sm:$0xf]
    %v910 = vld [vmem:[#allocation2 + $0xd08] sm:$0xf]
    %v911 = vld [vmem:[#allocation2 + $0xd0c] sm:$0xf]
    %v912 = vld [vmem:[#allocation2 + $0xd10] sm:$0xf]
    %v913 = vld [vmem:[#allocation2 + $0xd14] sm:$0xf]
    %v914 = vld [vmem:[#allocation2 + $0xd18] sm:$0xf]
    %v915 = vld [vmem:[#allocation2 + $0xd1c] sm:$0xf]
    %v916 = vld [vmem:[#allocation2 + $0xd20] sm:$0xf]
    %v917 = vld [vmem:[#allocation2 + $0xd24] sm:$0xf]
    %v918 = vld [vmem:[#allocation2 + $0xd28] sm:$0xf]
    %v919 = vld [vmem:[#allocation2 + $0xd2c] sm:$0xf]
    %v920 = vld [vmem:[#allocation2 + $0xd30] sm:$0xf]
    %v921 = vld [vmem:[#allocation2 + $0xd34] sm:$0xf]
    %v922 = vld [vmem:[#allocation2 + $0xd38] sm:$0xf]
    %v923 = vld [vmem:[#allocation2 + $0xd3c] sm:$0xf]
    %v924 = vld [vmem:[#allocation2 + $0xd40] sm:$0xf]
    %v925 = vld [vmem:[#allocation2 + $0xd44] sm:$0xf]
    %v926 = vld [vmem:[#allocation2 + $0xd48] sm:$0xf]
    %v927 = vld [vmem:[#allocation2 + $0xd4c] sm:$0xf]
    %v928 = vld [vmem:[#allocation2 + $0xd50] sm:$0xf]
    %v929 = vld [vmem:[#allocation2 + $0xd54] sm:$0xf]
    %v930 = vld [vmem:[#allocation2 + $0xd58] sm:$0xf]
    %v931 = vld [vmem:[#allocation2 + $0xd5c] sm:$0xf]
    %v932 = vld [vmem:[#allocation2 + $0xd60] sm:$0xf]
    %v933 = vld [vmem:[#allocation2 + $0xd64] sm:$0xf]
    %v934 = vld [vmem:[#allocation2 + $0xd68] sm:$0xf]
    %v935 = vld [vmem:[#allocation2 + $0xd6c] sm:$0xf]
    %v936 = vld [vmem:[#allocation2 + $0xd70] sm:$0xf]
    %v937 = vld [vmem:[#allocation2 + $0xd74] sm:$0xf]
    %v938 = vld [vmem:[#allocation2 + $0xd78] sm:$0xf]
    %v939 = vld [vmem:[#allocation2 + $0xd7c] sm:$0xf]
    %v940 = vld [vmem:[#allocation2 + $0xd80] sm:$0xf]
    %v941 = vld [vmem:[#allocation2 + $0xd84] sm:$0xf]
    %v942 = vld [vmem:[#allocation2 + $0xd88] sm:$0xf]
    %v943 = vld [vmem:[#allocation2 + $0xd8c] sm:$0xf]
    %v944 = vld [vmem:[#allocation2 + $0xd90] sm:$0xf]
    %v945 = vld [vmem:[#allocation2 + $0xd94] sm:$0xf]
    %v946 = vld [vmem:[#allocation2 + $0xd98] sm:$0xf]
    %v947 = vld [vmem:[#allocation2 + $0xd9c] sm:$0xf]
    %v948 = vld [vmem:[#allocation2 + $0xda0] sm:$0xf]
    %v949 = vld [vmem:[#allocation2 + $0xda4] sm:$0xf]
    %v950 = vld [vmem:[#allocation2 + $0xda8] sm:$0xf]
    %v951 = vld [vmem:[#allocation2 + $0xdac] sm:$0xf]
    %v952 = vld [vmem:[#allocation2 + $0xdb0] sm:$0xf]
    %v953 = vld [vmem:[#allocation2 + $0xdb4] sm:$0xf]
    %v954 = vld [vmem:[#allocation2 + $0xdb8] sm:$0xf]
    %v955 = vld [vmem:[#allocation2 + $0xdbc] sm:$0xf]
    %v956 = vld [vmem:[#allocation2 + $0xdc0] sm:$0xf]
    %v957 = vld [vmem:[#allocation2 + $0xdc4] sm:$0xf]
    %v958 = vld [vmem:[#allocation2 + $0xdc8] sm:$0xf]
    %v959 = vld [vmem:[#allocation2 + $0xdcc] sm:$0xf]
    %v960 = vld [vmem:[#allocation2 + $0xdd0] sm:$0xf]
    %v961 = vld [vmem:[#allocation2 + $0xdd4] sm:$0xf]
    %v962 = vld [vmem:[#allocation2 + $0xdd8] sm:$0xf]
    %v963 = vld [vmem:[#allocation2 + $0xddc] sm:$0xf]
    %v964 = vld [vmem:[#allocation2 + $0xde0] sm:$0xf]
    %v965 = vld [vmem:[#allocation2 + $0xde4] sm:$0xf]
    %v966 = vld [vmem:[#allocation2 + $0xde8] sm:$0xf]
    %v967 = vld [vmem:[#allocation2 + $0xdec] sm:$0xf]
    %v968 = vld [vmem:[#allocation2 + $0xdf0] sm:$0xf]
    %v969 = vld [vmem:[#allocation2 + $0xdf4] sm:$0xf]
    %v970 = vld [vmem:[#allocation2 + $0xdf8] sm:$0xf]
    %v971 = vld [vmem:[#allocation2 + $0xdfc] sm:$0xf]
    %v972 = vld [vmem:[#allocation2 + $0xe00] sm:$0xf]
    %v973 = vld [vmem:[#allocation2 + $0xe04] sm:$0xf]
    %v974 = vld [vmem:[#allocation2 + $0xe08] sm:$0xf]
    %v975 = vld [vmem:[#allocation2 + $0xe0c] sm:$0xf]
    %v976 = vld [vmem:[#allocation2 + $0xe10] sm:$0xf]
    %v977 = vld [vmem:[#allocation2 + $0xe14] sm:$0xf]
    %v978 = vld [vmem:[#allocation2 + $0xe18] sm:$0xf]
    %v979 = vld [vmem:[#allocation2 + $0xe1c] sm:$0xf]
    %v980 = vld [vmem:[#allocation2 + $0xe20] sm:$0xf]
    %v981 = vld [vmem:[#allocation2 + $0xe24] sm:$0xf]
    %v982 = vld [vmem:[#allocation2 + $0xe28] sm:$0xf]
    %v983 = vld [vmem:[#allocation2 + $0xe2c] sm:$0xf]
    %v984 = vld [vmem:[#allocation2 + $0xe30] sm:$0xf]
    %v985 = vld [vmem:[#allocation2 + $0xe34] sm:$0xf]
    %v986 = vld [vmem:[#allocation2 + $0xe38] sm:$0xf]
    %v987 = vld [vmem:[#allocation2 + $0xe3c] sm:$0xf]
    %v988 = vld [vmem:[#allocation2 + $0xe40] sm:$0xf]
    %v989 = vld [vmem:[#allocation2 + $0xe44] sm:$0xf]
    %v990 = vld [vmem:[#allocation2 + $0xe48] sm:$0xf]
    %v991 = vld [vmem:[#allocation2 + $0xe4c] sm:$0xf]
    %v992 = vld [vmem:[#allocation2 + $0xe50] sm:$0xf]
    %v993 = vld [vmem:[#allocation2 + $0xe54] sm:$0xf]
    %v994 = vld [vmem:[#allocation2 + $0xe58] sm:$0xf]
    %v995 = vld [vmem:[#allocation2 + $0xe5c] sm:$0xf]
    %v996 = vld [vmem:[#allocation2 + $0xe60] sm:$0xf]
    %v997 = vld [vmem:[#allocation2 + $0xe64] sm:$0xf]
    %v998 = vld [vmem:[#allocation2 + $0xe68] sm:$0xf]
    %v999 = vld [vmem:[#allocation2 + $0xe6c] sm:$0xf]
    %v1000 = vld [vmem:[#allocation2 + $0xe70] sm:$0xf]
    %v1001 = vld [vmem:[#allocation2 + $0xe74] sm:$0xf]
    %v1002 = vld [vmem:[#allocation2 + $0xe78] sm:$0xf]
    %v1003 = vld [vmem:[#allocation2 + $0xe7c] sm:$0xf]
    %v1004 = vld [vmem:[#allocation2 + $0xe80] sm:$0xf]
    %v1005 = vld [vmem:[#allocation2 + $0xe84] sm:$0xf]
    %v1006 = vld [vmem:[#allocation2 + $0xe88] sm:$0xf]
    %v1007 = vld [vmem:[#allocation2 + $0xe8c] sm:$0xf]
    %v1008 = vld [vmem:[#allocation2 + $0xe90] sm:$0xf]
    %v1009 = vld [vmem:[#allocation2 + $0xe94] sm:$0xf]
    %v1010 = vld [vmem:[#allocation2 + $0xe98] sm:$0xf]
    %v1011 = vld [vmem:[#allocation2 + $0xe9c] sm:$0xf]
    %v1012 = vld [vmem:[#allocation2 + $0xea0] sm:$0xf]
    %v1013 = vld [vmem:[#allocation2 + $0xea4] sm:$0xf]
    %v1014 = vld [vmem:[#allocation2 + $0xea8] sm:$0xf]
    %v1015 = vld [vmem:[#allocation2 + $0xeac] sm:$0xf]
    %v1016 = vld [vmem:[#allocation2 + $0xeb0] sm:$0xf]
    %v1017 = vld [vmem:[#allocation2 + $0xeb4] sm:$0xf]
    %v1018 = vld [vmem:[#allocation2 + $0xeb8] sm:$0xf]
    %v1019 = vld [vmem:[#allocation2 + $0xebc] sm:$0xf]
    %v1020 = vld [vmem:[#allocation2 + $0xec0] sm:$0xf]
    %v1021 = vld [vmem:[#allocation2 + $0xec4] sm:$0xf]
    %v1022 = vld [vmem:[#allocation2 + $0xec8] sm:$0xf]
    %v1023 = vld [vmem:[#allocation2 + $0xecc] sm:$0xf]
    %v1024 = vld [vmem:[#allocation2 + $0xed0] sm:$0xf]
    %v1025 = vld [vmem:[#allocation2 + $0xed4] sm:$0xf]
    %v1026 = vld [vmem:[#allocation2 + $0xed8] sm:$0xf]
    %v1027 = vld [vmem:[#allocation2 + $0xedc] sm:$0xf]
    %v1028 = vld [vmem:[#allocation2 + $0xee0] sm:$0xf]
    %v1029 = vld [vmem:[#allocation2 + $0xee4] sm:$0xf]
    %v1030 = vld [vmem:[#allocation2 + $0xee8] sm:$0xf]
    %v1031 = vld [vmem:[#allocation2 + $0xeec] sm:$0xf]
    %v1032 = vld [vmem:[#allocation2 + $0xef0] sm:$0xf]
    %v1033 = vld [vmem:[#allocation2 + $0xef4] sm:$0xf]
    %v1034 = vld [vmem:[#allocation2 + $0xef8] sm:$0xf]
    %v1035 = vld [vmem:[#allocation2 + $0xefc] sm:$0xf]
    %v1036 = vld [vmem:[#allocation2 + $0xf00] sm:$0xf]
    %v1037 = vld [vmem:[#allocation2 + $0xf04] sm:$0xf]
    %v1038 = vld [vmem:[#allocation2 + $0xf08] sm:$0xf]
    %v1039 = vld [vmem:[#allocation2 + $0xf0c] sm:$0xf]
    %v1040 = vld [vmem:[#allocation2 + $0xf10] sm:$0xf]
    %v1041 = vld [vmem:[#allocation2 + $0xf14] sm:$0xf]
    %v1042 = vld [vmem:[#allocation2 + $0xf18] sm:$0xf]
    %v1043 = vld [vmem:[#allocation2 + $0xf1c] sm:$0xf]
    %v1044 = vld [vmem:[#allocation2 + $0xf20] sm:$0xf]
    %v1045 = vld [vmem:[#allocation2 + $0xf24] sm:$0xf]
    %v1046 = vld [vmem:[#allocation2 + $0xf28] sm:$0xf]
    %v1047 = vld [vmem:[#allocation2 + $0xf2c] sm:$0xf]
    %v1048 = vld [vmem:[#allocation2 + $0xf30] sm:$0xf]
    %v1049 = vld [vmem:[#allocation2 + $0xf34] sm:$0xf]
    %v1050 = vld [vmem:[#allocation2 + $0xf38] sm:$0xf]
    %v1051 = vld [vmem:[#allocation2 + $0xf3c] sm:$0xf]
    %v1052 = vld [vmem:[#allocation2 + $0xf40] sm:$0xf]
    %v1053 = vld [vmem:[#allocation2 + $0xf44] sm:$0xf]
    %v1054 = vld [vmem:[#allocation2 + $0xf48] sm:$0xf]
    %v1055 = vld [vmem:[#allocation2 + $0xf4c] sm:$0xf]
    %v1056 = vld [vmem:[#allocation2 + $0xf50] sm:$0xf]
    %v1057 = vld [vmem:[#allocation2 + $0xf54] sm:$0xf]
    %v1058 = vld [vmem:[#allocation2 + $0xf58] sm:$0xf]
    %v1059 = vld [vmem:[#allocation2 + $0xf5c] sm:$0xf]
    %v1060 = vld [vmem:[#allocation2 + $0xf60] sm:$0xf]
    %v1061 = vld [vmem:[#allocation2 + $0xf64] sm:$0xf]
    %v1062 = vld [vmem:[#allocation2 + $0xf68] sm:$0xf]
    %v1063 = vld [vmem:[#allocation2 + $0xf6c] sm:$0xf]
    %v1064 = vld [vmem:[#allocation2 + $0xf70] sm:$0xf]
    %v1065 = vld [vmem:[#allocation2 + $0xf74] sm:$0xf]
    %v1066 = vld [vmem:[#allocation2 + $0xf78] sm:$0xf]
    %v1067 = vld [vmem:[#allocation2 + $0xf7c] sm:$0xf]
    %v1068 = vld [vmem:[#allocation2 + $0xf80] sm:$0xf]
    %v1069 = vld [vmem:[#allocation2 + $0xf84] sm:$0xf]
    %v1070 = vld [vmem:[#allocation2 + $0xf88] sm:$0xf]
    %v1071 = vld [vmem:[#allocation2 + $0xf8c] sm:$0xf]
    %v1072 = vld [vmem:[#allocation2 + $0xf90] sm:$0xf]
    %v1073 = vld [vmem:[#allocation2 + $0xf94] sm:$0xf]
    %v1074 = vld [vmem:[#allocation2 + $0xf98] sm:$0xf]
    %v1075 = vld [vmem:[#allocation2 + $0xf9c] sm:$0xf]
    %v1076 = vld [vmem:[#allocation2 + $0xfa0] sm:$0xf]
    %v1077 = vld [vmem:[#allocation2 + $0xfa4] sm:$0xf]
    %v1078 = vld [vmem:[#allocation2 + $0xfa8] sm:$0xf]
    %v1079 = vld [vmem:[#allocation2 + $0xfac] sm:$0xf]
    %v1080 = vld [vmem:[#allocation2 + $0xfb0] sm:$0xf]
    %v1081 = vld [vmem:[#allocation2 + $0xfb4] sm:$0xf]
    %v1082 = vld [vmem:[#allocation2 + $0xfb8] sm:$0xf]
    %v1083 = vld [vmem:[#allocation2 + $0xfbc] sm:$0xf]
    %v1084 = vld [vmem:[#allocation2 + $0xfc0] sm:$0xf]
    %v1085 = vld [vmem:[#allocation2 + $0xfc4] sm:$0xf]
    %v1086 = vld [vmem:[#allocation2 + $0xfc8] sm:$0xf]
    %v1087 = vld [vmem:[#allocation2 + $0xfcc] sm:$0xf]
    %v1088 = vld [vmem:[#allocation2 + $0xfd0] sm:$0xf]
    %v1089 = vld [vmem:[#allocation2 + $0xfd4] sm:$0xf]
    %v1090 = vld [vmem:[#allocation2 + $0xfd8] sm:$0xf]
    %v1091 = vld [vmem:[#allocation2 + $0xfdc] sm:$0xf]
    %v1092 = vld [vmem:[#allocation2 + $0xfe0] sm:$0xf]
    %v1093 = vld [vmem:[#allocation2 + $0xfe4] sm:$0xf]
    %v1094 = vld [vmem:[#allocation2 + $0xfe8] sm:$0xf]
    %v1095 = vld [vmem:[#allocation2 + $0xfec] sm:$0xf]
    %v1096 = vld [vmem:[#allocation2 + $0xff0] sm:$0xf]
    %v1097 = vld [vmem:[#allocation2 + $0xff4] sm:$0xf]
    %v1098 = vld [vmem:[#allocation2 + $0xff8] sm:$0xf]
    %v1099 = vld [vmem:[#allocation2 + $0xffc] sm:$0xf]
    %v1100 = vld [vmem:[%s2] sm:$0x1]
    %v1102 = vlaneseq
    %v1103 = vshrl.u32 %v1102, 7
    %v1104 = vsub.s32 0, %v1103
    %v1105 = vrot.slane %v1100, %v1104
    %v1115 = vcombine.high %v68, %v68
    %v1117 = vunpack.c.l.s4 1966171168
    %v1118 = vunpack.c.0.s8 %v1117
    %v1119 = vlaneseq
    %v1120 = vshrl.u32 %v1119, 7
    %v1121 = vsub.s32 %v1118, %v1120
    %v1122 = vrot.slane %v68, %v1121
    %v1124 = vunpack.c.l.s4 1966171168
    %v1125 = vunpack.c.0.s8 %v1124
    %v1126 = vlaneseq
    %v1127 = vshrl.u32 %v1126, 7
    %v1128 = vsub.s32 %v1125, %v1127
    %v1129 = vrot.slane %v1115, %v1128
    %v1130 = vcombine.high %v1122, %v1122
    %v1131 = vcombine.high %v1129, %v1129
    %v1133 = vunpack.c.l.s4 1966171168
    %v1134 = vunpack.c.0.s8 %v1133
    %v1135 = vlaneseq
    %v1136 = vshrl.u32 %v1135, 7
    %v1137 = vsub.s32 %v1134, %v1136
    %v1138 = vrot.slane %v1122, %v1137
    %v1140 = vunpack.c.l.s4 1966171168
    %v1141 = vunpack.c.0.s8 %v1140
    %v1142 = vlaneseq
    %v1143 = vshrl.u32 %v1142, 7
    %v1144 = vsub.s32 %v1141, %v1143
    %v1145 = vrot.slane %v1129, %v1144
    %v1147 = vunpack.c.l.s4 1966171168
    %v1148 = vunpack.c.0.s8 %v1147
    %v1149 = vlaneseq
    %v1150 = vshrl.u32 %v1149, 7
    %v1151 = vsub.s32 %v1148, %v1150
    %v1152 = vrot.slane %v1130, %v1151
    %v1154 = vunpack.c.l.s4 1966171168
    %v1155 = vunpack.c.0.s8 %v1154
    %v1156 = vlaneseq
    %v1157 = vshrl.u32 %v1156, 7
    %v1158 = vsub.s32 %v1155, %v1157
    %v1159 = vrot.slane %v1131, %v1158
    %v1160 = vcombine.high %v1138, %v1138
    %v1161 = vcombine.high %v1145, %v1145
    %v1162 = vcombine.high %v1152, %v1152
    %v1163 = vcombine.high %v1159, %v1159
    %v1164 = vcombine.high %v69, %v69
    %v1166 = vunpack.c.l.s4 1966171168
    %v1167 = vunpack.c.0.s8 %v1166
    %v1168 = vlaneseq
    %v1169 = vshrl.u32 %v1168, 7
    %v1170 = vsub.s32 %v1167, %v1169
    %v1171 = vrot.slane %v69, %v1170
    %v1173 = vunpack.c.l.s4 1966171168
    %v1174 = vunpack.c.0.s8 %v1173
    %v1175 = vlaneseq
    %v1176 = vshrl.u32 %v1175, 7
    %v1177 = vsub.s32 %v1174, %v1176
    %v1178 = vrot.slane %v1164, %v1177
    %v1179 = vcombine.high %v1171, %v1171
    %v1180 = vcombine.high %v1178, %v1178
    %v1182 = vunpack.c.l.s4 1966171168
    %v1183 = vunpack.c.0.s8 %v1182
    %v1184 = vlaneseq
    %v1185 = vshrl.u32 %v1184, 7
    %v1186 = vsub.s32 %v1183, %v1185
    %v1187 = vrot.slane %v1171, %v1186
    %v1189 = vunpack.c.l.s4 1966171168
    %v1190 = vunpack.c.0.s8 %v1189
    %v1191 = vlaneseq
    %v1192 = vshrl.u32 %v1191, 7
    %v1193 = vsub.s32 %v1190, %v1192
    %v1194 = vrot.slane %v1178, %v1193
    %v1196 = vunpack.c.l.s4 1966171168
    %v1197 = vunpack.c.0.s8 %v1196
    %v1198 = vlaneseq
    %v1199 = vshrl.u32 %v1198, 7
    %v1200 = vsub.s32 %v1197, %v1199
    %v1201 = vrot.slane %v1179, %v1200
    %v1203 = vunpack.c.l.s4 1966171168
    %v1204 = vunpack.c.0.s8 %v1203
    %v1205 = vlaneseq
    %v1206 = vshrl.u32 %v1205, 7
    %v1207 = vsub.s32 %v1204, %v1206
    %v1208 = vrot.slane %v1180, %v1207
    %v1209 = vcombine.high %v1187, %v1187
    %v1210 = vcombine.high %v1194, %v1194
    %v1211 = vcombine.high %v1201, %v1201
    %v1212 = vcombine.high %v1208, %v1208
    %v1213 = vcombine.high %v70, %v70
    %v1215 = vunpack.c.l.s4 1966171168
    %v1216 = vunpack.c.0.s8 %v1215
    %v1217 = vlaneseq
    %v1218 = vshrl.u32 %v1217, 7
    %v1219 = vsub.s32 %v1216, %v1218
    %v1220 = vrot.slane %v70, %v1219
    %v1222 = vunpack.c.l.s4 1966171168
    %v1223 = vunpack.c.0.s8 %v1222
    %v1224 = vlaneseq
    %v1225 = vshrl.u32 %v1224, 7
    %v1226 = vsub.s32 %v1223, %v1225
    %v1227 = vrot.slane %v1213, %v1226
    %v1228 = vcombine.high %v1220, %v1220
    %v1229 = vcombine.high %v1227, %v1227
    %v1231 = vunpack.c.l.s4 1966171168
    %v1232 = vunpack.c.0.s8 %v1231
    %v1233 = vlaneseq
    %v1234 = vshrl.u32 %v1233, 7
    %v1235 = vsub.s32 %v1232, %v1234
    %v1236 = vrot.slane %v1220, %v1235
    %v1238 = vunpack.c.l.s4 1966171168
    %v1239 = vunpack.c.0.s8 %v1238
    %v1240 = vlaneseq
    %v1241 = vshrl.u32 %v1240, 7
    %v1242 = vsub.s32 %v1239, %v1241
    %v1243 = vrot.slane %v1227, %v1242
    %v1245 = vunpack.c.l.s4 1966171168
    %v1246 = vunpack.c.0.s8 %v1245
    %v1247 = vlaneseq
    %v1248 = vshrl.u32 %v1247, 7
    %v1249 = vsub.s32 %v1246, %v1248
    %v1250 = vrot.slane %v1228, %v1249
    %v1252 = vunpack.c.l.s4 1966171168
    %v1253 = vunpack.c.0.s8 %v1252
    %v1254 = vlaneseq
    %v1255 = vshrl.u32 %v1254, 7
    %v1256 = vsub.s32 %v1253, %v1255
    %v1257 = vrot.slane %v1229, %v1256
    %v1258 = vcombine.high %v1236, %v1236
    %v1259 = vcombine.high %v1243, %v1243
    %v1260 = vcombine.high %v1250, %v1250
    %v1261 = vcombine.high %v1257, %v1257
    %v1262 = vcombine.high %v71, %v71
    %v1264 = vunpack.c.l.s4 1966171168
    %v1265 = vunpack.c.0.s8 %v1264
    %v1266 = vlaneseq
    %v1267 = vshrl.u32 %v1266, 7
    %v1268 = vsub.s32 %v1265, %v1267
    %v1269 = vrot.slane %v71, %v1268
    %v1271 = vunpack.c.l.s4 1966171168
    %v1272 = vunpack.c.0.s8 %v1271
    %v1273 = vlaneseq
    %v1274 = vshrl.u32 %v1273, 7
    %v1275 = vsub.s32 %v1272, %v1274
    %v1276 = vrot.slane %v1262, %v1275
    %v1277 = vcombine.high %v1269, %v1269
    %v1278 = vcombine.high %v1276, %v1276
    %v1280 = vunpack.c.l.s4 1966171168
    %v1281 = vunpack.c.0.s8 %v1280
    %v1282 = vlaneseq
    %v1283 = vshrl.u32 %v1282, 7
    %v1284 = vsub.s32 %v1281, %v1283
    %v1285 = vrot.slane %v1269, %v1284
    %v1287 = vunpack.c.l.s4 1966171168
    %v1288 = vunpack.c.0.s8 %v1287
    %v1289 = vlaneseq
    %v1290 = vshrl.u32 %v1289, 7
    %v1291 = vsub.s32 %v1288, %v1290
    %v1292 = vrot.slane %v1276, %v1291
    %v1294 = vunpack.c.l.s4 1966171168
    %v1295 = vunpack.c.0.s8 %v1294
    %v1296 = vlaneseq
    %v1297 = vshrl.u32 %v1296, 7
    %v1298 = vsub.s32 %v1295, %v1297
    %v1299 = vrot.slane %v1277, %v1298
    %v1301 = vunpack.c.l.s4 1966171168
    %v1302 = vunpack.c.0.s8 %v1301
    %v1303 = vlaneseq
    %v1304 = vshrl.u32 %v1303, 7
    %v1305 = vsub.s32 %v1302, %v1304
    %v1306 = vrot.slane %v1278, %v1305
    %v1307 = vcombine.high %v1285, %v1285
    %v1308 = vcombine.high %v1292, %v1292
    %v1309 = vcombine.high %v1299, %v1299
    %v1310 = vcombine.high %v1306, %v1306
    %v1311 = vcombine.high %v72, %v72
    %v1313 = vunpack.c.l.s4 1966171168
    %v1314 = vunpack.c.0.s8 %v1313
    %v1315 = vlaneseq
    %v1316 = vshrl.u32 %v1315, 7
    %v1317 = vsub.s32 %v1314, %v1316
    %v1318 = vrot.slane %v72, %v1317
    %v1320 = vunpack.c.l.s4 1966171168
    %v1321 = vunpack.c.0.s8 %v1320
    %v1322 = vlaneseq
    %v1323 = vshrl.u32 %v1322, 7
    %v1324 = vsub.s32 %v1321, %v1323
    %v1325 = vrot.slane %v1311, %v1324
    %v1326 = vcombine.high %v1318, %v1318
    %v1327 = vcombine.high %v1325, %v1325
    %v1329 = vunpack.c.l.s4 1966171168
    %v1330 = vunpack.c.0.s8 %v1329
    %v1331 = vlaneseq
    %v1332 = vshrl.u32 %v1331, 7
    %v1333 = vsub.s32 %v1330, %v1332
    %v1334 = vrot.slane %v1318, %v1333
    %v1336 = vunpack.c.l.s4 1966171168
    %v1337 = vunpack.c.0.s8 %v1336
    %v1338 = vlaneseq
    %v1339 = vshrl.u32 %v1338, 7
    %v1340 = vsub.s32 %v1337, %v1339
    %v1341 = vrot.slane %v1325, %v1340
    %v1343 = vunpack.c.l.s4 1966171168
    %v1344 = vunpack.c.0.s8 %v1343
    %v1345 = vlaneseq
    %v1346 = vshrl.u32 %v1345, 7
    %v1347 = vsub.s32 %v1344, %v1346
    %v1348 = vrot.slane %v1326, %v1347
    %v1350 = vunpack.c.l.s4 1966171168
    %v1351 = vunpack.c.0.s8 %v1350
    %v1352 = vlaneseq
    %v1353 = vshrl.u32 %v1352, 7
    %v1354 = vsub.s32 %v1351, %v1353
    %v1355 = vrot.slane %v1327, %v1354
    %v1356 = vcombine.high %v1334, %v1334
    %v1357 = vcombine.high %v1341, %v1341
    %v1358 = vcombine.high %v1348, %v1348
    %v1359 = vcombine.high %v1355, %v1355
    %v1360 = vcombine.high %v73, %v73
    %v1362 = vunpack.c.l.s4 1966171168
    %v1363 = vunpack.c.0.s8 %v1362
    %v1364 = vlaneseq
    %v1365 = vshrl.u32 %v1364, 7
    %v1366 = vsub.s32 %v1363, %v1365
    %v1367 = vrot.slane %v73, %v1366
    %v1369 = vunpack.c.l.s4 1966171168
    %v1370 = vunpack.c.0.s8 %v1369
    %v1371 = vlaneseq
    %v1372 = vshrl.u32 %v1371, 7
    %v1373 = vsub.s32 %v1370, %v1372
    %v1374 = vrot.slane %v1360, %v1373
    %v1375 = vcombine.high %v1367, %v1367
    %v1376 = vcombine.high %v1374, %v1374
    %v1378 = vunpack.c.l.s4 1966171168
    %v1379 = vunpack.c.0.s8 %v1378
    %v1380 = vlaneseq
    %v1381 = vshrl.u32 %v1380, 7
    %v1382 = vsub.s32 %v1379, %v1381
    %v1383 = vrot.slane %v1367, %v1382
    %v1385 = vunpack.c.l.s4 1966171168
    %v1386 = vunpack.c.0.s8 %v1385
    %v1387 = vlaneseq
    %v1388 = vshrl.u32 %v1387, 7
    %v1389 = vsub.s32 %v1386, %v1388
    %v1390 = vrot.slane %v1374, %v1389
    %v1392 = vunpack.c.l.s4 1966171168
    %v1393 = vunpack.c.0.s8 %v1392
    %v1394 = vlaneseq
    %v1395 = vshrl.u32 %v1394, 7
    %v1396 = vsub.s32 %v1393, %v1395
    %v1397 = vrot.slane %v1375, %v1396
    %v1399 = vunpack.c.l.s4 1966171168
    %v1400 = vunpack.c.0.s8 %v1399
    %v1401 = vlaneseq
    %v1402 = vshrl.u32 %v1401, 7
    %v1403 = vsub.s32 %v1400, %v1402
    %v1404 = vrot.slane %v1376, %v1403
    %v1405 = vcombine.high %v1383, %v1383
    %v1406 = vcombine.high %v1390, %v1390
    %v1407 = vcombine.high %v1397, %v1397
    %v1408 = vcombine.high %v1404, %v1404
    %v1409 = vcombine.high %v74, %v74
    %v1411 = vunpack.c.l.s4 1966171168
    %v1412 = vunpack.c.0.s8 %v1411
    %v1413 = vlaneseq
    %v1414 = vshrl.u32 %v1413, 7
    %v1415 = vsub.s32 %v1412, %v1414
    %v1416 = vrot.slane %v74, %v1415
    %v1418 = vunpack.c.l.s4 1966171168
    %v1419 = vunpack.c.0.s8 %v1418
    %v1420 = vlaneseq
    %v1421 = vshrl.u32 %v1420, 7
    %v1422 = vsub.s32 %v1419, %v1421
    %v1423 = vrot.slane %v1409, %v1422
    %v1424 = vcombine.high %v1416, %v1416
    %v1425 = vcombine.high %v1423, %v1423
    %v1427 = vunpack.c.l.s4 1966171168
    %v1428 = vunpack.c.0.s8 %v1427
    %v1429 = vlaneseq
    %v1430 = vshrl.u32 %v1429, 7
    %v1431 = vsub.s32 %v1428, %v1430
    %v1432 = vrot.slane %v1416, %v1431
    %v1434 = vunpack.c.l.s4 1966171168
    %v1435 = vunpack.c.0.s8 %v1434
    %v1436 = vlaneseq
    %v1437 = vshrl.u32 %v1436, 7
    %v1438 = vsub.s32 %v1435, %v1437
    %v1439 = vrot.slane %v1423, %v1438
    %v1441 = vunpack.c.l.s4 1966171168
    %v1442 = vunpack.c.0.s8 %v1441
    %v1443 = vlaneseq
    %v1444 = vshrl.u32 %v1443, 7
    %v1445 = vsub.s32 %v1442, %v1444
    %v1446 = vrot.slane %v1424, %v1445
    %v1448 = vunpack.c.l.s4 1966171168
    %v1449 = vunpack.c.0.s8 %v1448
    %v1450 = vlaneseq
    %v1451 = vshrl.u32 %v1450, 7
    %v1452 = vsub.s32 %v1449, %v1451
    %v1453 = vrot.slane %v1425, %v1452
    %v1454 = vcombine.high %v1432, %v1432
    %v1455 = vcombine.high %v1439, %v1439
    %v1456 = vcombine.high %v1446, %v1446
    %v1457 = vcombine.high %v1453, %v1453
    %v1458 = vcombine.high %v75, %v75
    %v1460 = vunpack.c.l.s4 1966171168
    %v1461 = vunpack.c.0.s8 %v1460
    %v1462 = vlaneseq
    %v1463 = vshrl.u32 %v1462, 7
    %v1464 = vsub.s32 %v1461, %v1463
    %v1465 = vrot.slane %v75, %v1464
    %v1467 = vunpack.c.l.s4 1966171168
    %v1468 = vunpack.c.0.s8 %v1467
    %v1469 = vlaneseq
    %v1470 = vshrl.u32 %v1469, 7
    %v1471 = vsub.s32 %v1468, %v1470
    %v1472 = vrot.slane %v1458, %v1471
    %v1473 = vcombine.high %v1465, %v1465
    %v1474 = vcombine.high %v1472, %v1472
    %v1476 = vunpack.c.l.s4 1966171168
    %v1477 = vunpack.c.0.s8 %v1476
    %v1478 = vlaneseq
    %v1479 = vshrl.u32 %v1478, 7
    %v1480 = vsub.s32 %v1477, %v1479
    %v1481 = vrot.slane %v1465, %v1480
    %v1483 = vunpack.c.l.s4 1966171168
    %v1484 = vunpack.c.0.s8 %v1483
    %v1485 = vlaneseq
    %v1486 = vshrl.u32 %v1485, 7
    %v1487 = vsub.s32 %v1484, %v1486
    %v1488 = vrot.slane %v1472, %v1487
    %v1490 = vunpack.c.l.s4 1966171168
    %v1491 = vunpack.c.0.s8 %v1490
    %v1492 = vlaneseq
    %v1493 = vshrl.u32 %v1492, 7
    %v1494 = vsub.s32 %v1491, %v1493
    %v1495 = vrot.slane %v1473, %v1494
    %v1497 = vunpack.c.l.s4 1966171168
    %v1498 = vunpack.c.0.s8 %v1497
    %v1499 = vlaneseq
    %v1500 = vshrl.u32 %v1499, 7
    %v1501 = vsub.s32 %v1498, %v1500
    %v1502 = vrot.slane %v1474, %v1501
    %v1503 = vcombine.high %v1481, %v1481
    %v1504 = vcombine.high %v1488, %v1488
    %v1505 = vcombine.high %v1495, %v1495
    %v1506 = vcombine.high %v1502, %v1502
    %v2595 = vunpack.c.l.b16 %v76
    %v2596 = vunpack.c.l.b16 %v77
    %v2597 = vunpack.c.l.b16 %v78
    %v2598 = vunpack.c.l.b16 %v79
    %v2599 = vunpack.c.l.b16 %v80
    %v2600 = vunpack.c.l.b16 %v81
    %v2601 = vunpack.c.l.b16 %v82
    %v2602 = vunpack.c.l.b16 %v83
    %v2603 = vunpack.c.l.b16 %v84
    %v2604 = vunpack.c.l.b16 %v85
    %v2605 = vunpack.c.l.b16 %v86
    %v2606 = vunpack.c.l.b16 %v87
    %v2607 = vunpack.c.l.b16 %v88
    %v2608 = vunpack.c.l.b16 %v89
    %v2609 = vunpack.c.l.b16 %v90
    %v2610 = vunpack.c.l.b16 %v91
    %v2611 = vunpack.c.l.b16 %v92
    %v2612 = vunpack.c.l.b16 %v93
    %v2613 = vunpack.c.l.b16 %v94
    %v2614 = vunpack.c.l.b16 %v95
    %v2615 = vunpack.c.l.b16 %v96
    %v2616 = vunpack.c.l.b16 %v97
    %v2617 = vunpack.c.l.b16 %v98
    %v2618 = vunpack.c.l.b16 %v99
    %v2619 = vunpack.c.l.b16 %v100
    %v2620 = vunpack.c.l.b16 %v101
    %v2621 = vunpack.c.l.b16 %v102
    %v2622 = vunpack.c.l.b16 %v103
    %v2623 = vunpack.c.l.b16 %v104
    %v2624 = vunpack.c.l.b16 %v105
    %v2625 = vunpack.c.l.b16 %v106
    %v2626 = vunpack.c.l.b16 %v107
    %v2627 = vunpack.c.l.b16 %v108
    %v2628 = vunpack.c.l.b16 %v109
    %v2629 = vunpack.c.l.b16 %v110
    %v2630 = vunpack.c.l.b16 %v111
    %v2631 = vunpack.c.l.b16 %v112
    %v2632 = vunpack.c.l.b16 %v113
    %v2633 = vunpack.c.l.b16 %v114
    %v2634 = vunpack.c.l.b16 %v115
    %v2635 = vunpack.c.l.b16 %v116
    %v2636 = vunpack.c.l.b16 %v117
    %v2637 = vunpack.c.l.b16 %v118
    %v2638 = vunpack.c.l.b16 %v119
    %v2639 = vunpack.c.l.b16 %v120
    %v2640 = vunpack.c.l.b16 %v121
    %v2641 = vunpack.c.l.b16 %v122
    %v2642 = vunpack.c.l.b16 %v123
    %v2643 = vunpack.c.l.b16 %v124
    %v2644 = vunpack.c.l.b16 %v125
    %v2645 = vunpack.c.l.b16 %v126
    %v2646 = vunpack.c.l.b16 %v127
    %v2647 = vunpack.c.l.b16 %v128
    %v2648 = vunpack.c.l.b16 %v129
    %v2649 = vunpack.c.l.b16 %v130
    %v2650 = vunpack.c.l.b16 %v131
    %v2651 = vunpack.c.l.b16 %v132
    %v2652 = vunpack.c.l.b16 %v133
    %v2653 = vunpack.c.l.b16 %v134
    %v2654 = vunpack.c.l.b16 %v135
    %v2655 = vunpack.c.l.b16 %v136
    %v2656 = vunpack.c.l.b16 %v137
    %v2657 = vunpack.c.l.b16 %v138
    %v2658 = vunpack.c.l.b16 %v139
    %v2659 = vunpack.c.l.b16 %v140
    %v2660 = vunpack.c.l.b16 %v141
    %v2661 = vunpack.c.l.b16 %v142
    %v2662 = vunpack.c.l.b16 %v143
    %v2663 = vunpack.c.l.b16 %v144
    %v2664 = vunpack.c.l.b16 %v145
    %v2665 = vunpack.c.l.b16 %v146
    %v2666 = vunpack.c.l.b16 %v147
    %v2667 = vunpack.c.l.b16 %v148
    %v2668 = vunpack.c.l.b16 %v149
    %v2669 = vunpack.c.l.b16 %v150
    %v2670 = vunpack.c.l.b16 %v151
    %v2671 = vunpack.c.l.b16 %v152
    %v2672 = vunpack.c.l.b16 %v153
    %v2673 = vunpack.c.l.b16 %v154
    %v2674 = vunpack.c.l.b16 %v155
    %v2675 = vunpack.c.l.b16 %v156
    %v2676 = vunpack.c.l.b16 %v157
    %v2677 = vunpack.c.l.b16 %v158
    %v2678 = vunpack.c.l.b16 %v159
    %v2679 = vunpack.c.l.b16 %v160
    %v2680 = vunpack.c.l.b16 %v161
    %v2681 = vunpack.c.l.b16 %v162
    %v2682 = vunpack.c.l.b16 %v163
    %v2683 = vunpack.c.l.b16 %v164
    %v2684 = vunpack.c.l.b16 %v165
    %v2685 = vunpack.c.l.b16 %v166
    %v2686 = vunpack.c.l.b16 %v167
    %v2687 = vunpack.c.l.b16 %v168
    %v2688 = vunpack.c.l.b16 %v169
    %v2689 = vunpack.c.l.b16 %v170
    %v2690 = vunpack.c.l.b16 %v171
    %v2691 = vunpack.c.l.b16 %v172
    %v2692 = vunpack.c.l.b16 %v173
    %v2693 = vunpack.c.l.b16 %v174
    %v2694 = vunpack.c.l.b16 %v175
    %v2695 = vunpack.c.l.b16 %v176
    %v2696 = vunpack.c.l.b16 %v177
    %v2697 = vunpack.c.l.b16 %v178
    %v2698 = vunpack.c.l.b16 %v179
    %v2699 = vunpack.c.l.b16 %v180
    %v2700 = vunpack.c.l.b16 %v181
    %v2701 = vunpack.c.l.b16 %v182
    %v2702 = vunpack.c.l.b16 %v183
    %v2703 = vunpack.c.l.b16 %v184
    %v2704 = vunpack.c.l.b16 %v185
    %v2705 = vunpack.c.l.b16 %v186
    %v2706 = vunpack.c.l.b16 %v187
    %v2707 = vunpack.c.l.b16 %v188
    %v2708 = vunpack.c.l.b16 %v189
    %v2709 = vunpack.c.l.b16 %v190
    %v2710 = vunpack.c.l.b16 %v191
    %v2711 = vunpack.c.l.b16 %v192
    %v2712 = vunpack.c.l.b16 %v193
    %v2713 = vunpack.c.l.b16 %v194
    %v2714 = vunpack.c.l.b16 %v195
    %v2715 = vunpack.c.l.b16 %v196
    %v2716 = vunpack.c.l.b16 %v197
    %v2717 = vunpack.c.l.b16 %v198
    %v2718 = vunpack.c.l.b16 %v199
    %v2719 = vunpack.c.l.b16 %v200
    %v2720 = vunpack.c.l.b16 %v201
    %v2721 = vunpack.c.l.b16 %v202
    %v2722 = vunpack.c.l.b16 %v203
    %v2723 = vunpack.c.l.b16 %v204
    %v2724 = vunpack.c.l.b16 %v205
    %v2725 = vunpack.c.l.b16 %v206
    %v2726 = vunpack.c.l.b16 %v207
    %v2727 = vunpack.c.l.b16 %v208
    %v2728 = vunpack.c.l.b16 %v209
    %v2729 = vunpack.c.l.b16 %v210
    %v2730 = vunpack.c.l.b16 %v211
    %v2731 = vunpack.c.l.b16 %v212
    %v2732 = vunpack.c.l.b16 %v213
    %v2733 = vunpack.c.l.b16 %v214
    %v2734 = vunpack.c.l.b16 %v215
    %v2735 = vunpack.c.l.b16 %v216
    %v2736 = vunpack.c.l.b16 %v217
    %v2737 = vunpack.c.l.b16 %v218
    %v2738 = vunpack.c.l.b16 %v219
    %v2739 = vunpack.c.l.b16 %v220
    %v2740 = vunpack.c.l.b16 %v221
    %v2741 = vunpack.c.l.b16 %v222
    %v2742 = vunpack.c.l.b16 %v223
    %v2743 = vunpack.c.l.b16 %v224
    %v2744 = vunpack.c.l.b16 %v225
    %v2745 = vunpack.c.l.b16 %v226
    %v2746 = vunpack.c.l.b16 %v227
    %v2747 = vunpack.c.l.b16 %v228
    %v2748 = vunpack.c.l.b16 %v229
    %v2749 = vunpack.c.l.b16 %v230
    %v2750 = vunpack.c.l.b16 %v231
    %v2751 = vunpack.c.l.b16 %v232
    %v2752 = vunpack.c.l.b16 %v233
    %v2753 = vunpack.c.l.b16 %v234
    %v2754 = vunpack.c.l.b16 %v235
    %v2755 = vunpack.c.l.b16 %v236
    %v2756 = vunpack.c.l.b16 %v237
    %v2757 = vunpack.c.l.b16 %v238
    %v2758 = vunpack.c.l.b16 %v239
    %v2759 = vunpack.c.l.b16 %v240
    %v2760 = vunpack.c.l.b16 %v241
    %v2761 = vunpack.c.l.b16 %v242
    %v2762 = vunpack.c.l.b16 %v243
    %v2763 = vunpack.c.l.b16 %v244
    %v2764 = vunpack.c.l.b16 %v245
    %v2765 = vunpack.c.l.b16 %v246
    %v2766 = vunpack.c.l.b16 %v247
    %v2767 = vunpack.c.l.b16 %v248
    %v2768 = vunpack.c.l.b16 %v249
    %v2769 = vunpack.c.l.b16 %v250
    %v2770 = vunpack.c.l.b16 %v251
    %v2771 = vunpack.c.l.b16 %v252
    %v2772 = vunpack.c.l.b16 %v253
    %v2773 = vunpack.c.l.b16 %v254
    %v2774 = vunpack.c.l.b16 %v255
    %v2775 = vunpack.c.l.b16 %v256
    %v2776 = vunpack.c.l.b16 %v257
    %v2777 = vunpack.c.l.b16 %v258
    %v2778 = vunpack.c.l.b16 %v259
    %v2779 = vunpack.c.l.b16 %v260
    %v2780 = vunpack.c.l.b16 %v261
    %v2781 = vunpack.c.l.b16 %v262
    %v2782 = vunpack.c.l.b16 %v263
    %v2783 = vunpack.c.l.b16 %v264
    %v2784 = vunpack.c.l.b16 %v265
    %v2785 = vunpack.c.l.b16 %v266
    %v2786 = vunpack.c.l.b16 %v267
    %v2787 = vunpack.c.l.b16 %v268
    %v2788 = vunpack.c.l.b16 %v269
    %v2789 = vunpack.c.l.b16 %v270
    %v2790 = vunpack.c.l.b16 %v271
    %v2791 = vunpack.c.l.b16 %v272
    %v2792 = vunpack.c.l.b16 %v273
    %v2793 = vunpack.c.l.b16 %v274
    %v2794 = vunpack.c.l.b16 %v275
    %v2795 = vunpack.c.l.b16 %v276
    %v2796 = vunpack.c.l.b16 %v277
    %v2797 = vunpack.c.l.b16 %v278
    %v2798 = vunpack.c.l.b16 %v279
    %v2799 = vunpack.c.l.b16 %v280
    %v2800 = vunpack.c.l.b16 %v281
    %v2801 = vunpack.c.l.b16 %v282
    %v2802 = vunpack.c.l.b16 %v283
    %v2803 = vunpack.c.l.b16 %v284
    %v2804 = vunpack.c.l.b16 %v285
    %v2805 = vunpack.c.l.b16 %v286
    %v2806 = vunpack.c.l.b16 %v287
    %v2807 = vunpack.c.l.b16 %v288
    %v2808 = vunpack.c.l.b16 %v289
    %v2809 = vunpack.c.l.b16 %v290
    %v2810 = vunpack.c.l.b16 %v291
    %v2811 = vunpack.c.l.b16 %v292
    %v2812 = vunpack.c.l.b16 %v293
    %v2813 = vunpack.c.l.b16 %v294
    %v2814 = vunpack.c.l.b16 %v295
    %v2815 = vunpack.c.l.b16 %v296
    %v2816 = vunpack.c.l.b16 %v297
    %v2817 = vunpack.c.l.b16 %v298
    %v2818 = vunpack.c.l.b16 %v299
    %v2819 = vunpack.c.l.b16 %v300
    %v2820 = vunpack.c.l.b16 %v301
    %v2821 = vunpack.c.l.b16 %v302
    %v2822 = vunpack.c.l.b16 %v303
    %v2823 = vunpack.c.l.b16 %v304
    %v2824 = vunpack.c.l.b16 %v305
    %v2825 = vunpack.c.l.b16 %v306
    %v2826 = vunpack.c.l.b16 %v307
    %v2827 = vunpack.c.l.b16 %v308
    %v2828 = vunpack.c.l.b16 %v309
    %v2829 = vunpack.c.l.b16 %v310
    %v2830 = vunpack.c.l.b16 %v311
    %v2831 = vunpack.c.l.b16 %v312
    %v2832 = vunpack.c.l.b16 %v313
    %v2833 = vunpack.c.l.b16 %v314
    %v2834 = vunpack.c.l.b16 %v315
    %v2835 = vunpack.c.l.b16 %v316
    %v2836 = vunpack.c.l.b16 %v317
    %v2837 = vunpack.c.l.b16 %v318
    %v2838 = vunpack.c.l.b16 %v319
    %v2839 = vunpack.c.l.b16 %v320
    %v2840 = vunpack.c.l.b16 %v321
    %v2841 = vunpack.c.l.b16 %v322
    %v2842 = vunpack.c.l.b16 %v323
    %v2843 = vunpack.c.l.b16 %v324
    %v2844 = vunpack.c.l.b16 %v325
    %v2845 = vunpack.c.l.b16 %v326
    %v2846 = vunpack.c.l.b16 %v327
    %v2847 = vunpack.c.l.b16 %v328
    %v2848 = vunpack.c.l.b16 %v329
    %v2849 = vunpack.c.l.b16 %v330
    %v2850 = vunpack.c.l.b16 %v331
    %v2851 = vunpack.c.l.b16 %v332
    %v2852 = vunpack.c.l.b16 %v333
    %v2853 = vunpack.c.l.b16 %v334
    %v2854 = vunpack.c.l.b16 %v335
    %v2855 = vunpack.c.l.b16 %v336
    %v2856 = vunpack.c.l.b16 %v337
    %v2857 = vunpack.c.l.b16 %v338
    %v2858 = vunpack.c.l.b16 %v339
    %v2859 = vunpack.c.l.b16 %v340
    %v2860 = vunpack.c.l.b16 %v341
    %v2861 = vunpack.c.l.b16 %v342
    %v2862 = vunpack.c.l.b16 %v343
    %v2863 = vunpack.c.l.b16 %v344
    %v2864 = vunpack.c.l.b16 %v345
    %v2865 = vunpack.c.l.b16 %v346
    %v2866 = vunpack.c.l.b16 %v347
    %v2867 = vunpack.c.l.b16 %v348
    %v2868 = vunpack.c.l.b16 %v349
    %v2869 = vunpack.c.l.b16 %v350
    %v2870 = vunpack.c.l.b16 %v351
    %v2871 = vunpack.c.l.b16 %v352
    %v2872 = vunpack.c.l.b16 %v353
    %v2873 = vunpack.c.l.b16 %v354
    %v2874 = vunpack.c.l.b16 %v355
    %v2875 = vunpack.c.l.b16 %v356
    %v2876 = vunpack.c.l.b16 %v357
    %v2877 = vunpack.c.l.b16 %v358
    %v2878 = vunpack.c.l.b16 %v359
    %v2879 = vunpack.c.l.b16 %v360
    %v2880 = vunpack.c.l.b16 %v361
    %v2881 = vunpack.c.l.b16 %v362
    %v2882 = vunpack.c.l.b16 %v363
    %v2883 = vunpack.c.l.b16 %v364
    %v2884 = vunpack.c.l.b16 %v365
    %v2885 = vunpack.c.l.b16 %v366
    %v2886 = vunpack.c.l.b16 %v367
    %v2887 = vunpack.c.l.b16 %v368
    %v2888 = vunpack.c.l.b16 %v369
    %v2889 = vunpack.c.l.b16 %v370
    %v2890 = vunpack.c.l.b16 %v371
    %v2891 = vunpack.c.l.b16 %v372
    %v2892 = vunpack.c.l.b16 %v373
    %v2893 = vunpack.c.l.b16 %v374
    %v2894 = vunpack.c.l.b16 %v375
    %v2895 = vunpack.c.l.b16 %v376
    %v2896 = vunpack.c.l.b16 %v377
    %v2897 = vunpack.c.l.b16 %v378
    %v2898 = vunpack.c.l.b16 %v379
    %v2899 = vunpack.c.l.b16 %v380
    %v2900 = vunpack.c.l.b16 %v381
    %v2901 = vunpack.c.l.b16 %v382
    %v2902 = vunpack.c.l.b16 %v383
    %v2903 = vunpack.c.l.b16 %v384
    %v2904 = vunpack.c.l.b16 %v385
    %v2905 = vunpack.c.l.b16 %v386
    %v2906 = vunpack.c.l.b16 %v387
    %v2907 = vunpack.c.l.b16 %v388
    %v2908 = vunpack.c.l.b16 %v389
    %v2909 = vunpack.c.l.b16 %v390
    %v2910 = vunpack.c.l.b16 %v391
    %v2911 = vunpack.c.l.b16 %v392
    %v2912 = vunpack.c.l.b16 %v393
    %v2913 = vunpack.c.l.b16 %v394
    %v2914 = vunpack.c.l.b16 %v395
    %v2915 = vunpack.c.l.b16 %v396
    %v2916 = vunpack.c.l.b16 %v397
    %v2917 = vunpack.c.l.b16 %v398
    %v2918 = vunpack.c.l.b16 %v399
    %v2919 = vunpack.c.l.b16 %v400
    %v2920 = vunpack.c.l.b16 %v401
    %v2921 = vunpack.c.l.b16 %v402
    %v2922 = vunpack.c.l.b16 %v403
    %v2923 = vunpack.c.l.b16 %v404
    %v2924 = vunpack.c.l.b16 %v405
    %v2925 = vunpack.c.l.b16 %v406
    %v2926 = vunpack.c.l.b16 %v407
    %v2927 = vunpack.c.l.b16 %v408
    %v2928 = vunpack.c.l.b16 %v409
    %v2929 = vunpack.c.l.b16 %v410
    %v2930 = vunpack.c.l.b16 %v411
    %v2931 = vunpack.c.l.b16 %v412
    %v2932 = vunpack.c.l.b16 %v413
    %v2933 = vunpack.c.l.b16 %v414
    %v2934 = vunpack.c.l.b16 %v415
    %v2935 = vunpack.c.l.b16 %v416
    %v2936 = vunpack.c.l.b16 %v417
    %v2937 = vunpack.c.l.b16 %v418
    %v2938 = vunpack.c.l.b16 %v419
    %v2939 = vunpack.c.l.b16 %v420
    %v2940 = vunpack.c.l.b16 %v421
    %v2941 = vunpack.c.l.b16 %v422
    %v2942 = vunpack.c.l.b16 %v423
    %v2943 = vunpack.c.l.b16 %v424
    %v2944 = vunpack.c.l.b16 %v425
    %v2945 = vunpack.c.l.b16 %v426
    %v2946 = vunpack.c.l.b16 %v427
    %v2947 = vunpack.c.l.b16 %v428
    %v2948 = vunpack.c.l.b16 %v429
    %v2949 = vunpack.c.l.b16 %v430
    %v2950 = vunpack.c.l.b16 %v431
    %v2951 = vunpack.c.l.b16 %v432
    %v2952 = vunpack.c.l.b16 %v433
    %v2953 = vunpack.c.l.b16 %v434
    %v2954 = vunpack.c.l.b16 %v435
    %v2955 = vunpack.c.l.b16 %v436
    %v2956 = vunpack.c.l.b16 %v437
    %v2957 = vunpack.c.l.b16 %v438
    %v2958 = vunpack.c.l.b16 %v439
    %v2959 = vunpack.c.l.b16 %v440
    %v2960 = vunpack.c.l.b16 %v441
    %v2961 = vunpack.c.l.b16 %v442
    %v2962 = vunpack.c.l.b16 %v443
    %v2963 = vunpack.c.l.b16 %v444
    %v2964 = vunpack.c.l.b16 %v445
    %v2965 = vunpack.c.l.b16 %v446
    %v2966 = vunpack.c.l.b16 %v447
    %v2967 = vunpack.c.l.b16 %v448
    %v2968 = vunpack.c.l.b16 %v449
    %v2969 = vunpack.c.l.b16 %v450
    %v2970 = vunpack.c.l.b16 %v451
    %v2971 = vunpack.c.l.b16 %v452
    %v2972 = vunpack.c.l.b16 %v453
    %v2973 = vunpack.c.l.b16 %v454
    %v2974 = vunpack.c.l.b16 %v455
    %v2975 = vunpack.c.l.b16 %v456
    %v2976 = vunpack.c.l.b16 %v457
    %v2977 = vunpack.c.l.b16 %v458
    %v2978 = vunpack.c.l.b16 %v459
    %v2979 = vunpack.c.l.b16 %v460
    %v2980 = vunpack.c.l.b16 %v461
    %v2981 = vunpack.c.l.b16 %v462
    %v2982 = vunpack.c.l.b16 %v463
    %v2983 = vunpack.c.l.b16 %v464
    %v2984 = vunpack.c.l.b16 %v465
    %v2985 = vunpack.c.l.b16 %v466
    %v2986 = vunpack.c.l.b16 %v467
    %v2987 = vunpack.c.l.b16 %v468
    %v2988 = vunpack.c.l.b16 %v469
    %v2989 = vunpack.c.l.b16 %v470
    %v2990 = vunpack.c.l.b16 %v471
    %v2991 = vunpack.c.l.b16 %v472
    %v2992 = vunpack.c.l.b16 %v473
    %v2993 = vunpack.c.l.b16 %v474
    %v2994 = vunpack.c.l.b16 %v475
    %v2995 = vunpack.c.l.b16 %v476
    %v2996 = vunpack.c.l.b16 %v477
    %v2997 = vunpack.c.l.b16 %v478
    %v2998 = vunpack.c.l.b16 %v479
    %v2999 = vunpack.c.l.b16 %v480
    %v3000 = vunpack.c.l.b16 %v481
    %v3001 = vunpack.c.l.b16 %v482
    %v3002 = vunpack.c.l.b16 %v483
    %v3003 = vunpack.c.l.b16 %v484
    %v3004 = vunpack.c.l.b16 %v485
    %v3005 = vunpack.c.l.b16 %v486
    %v3006 = vunpack.c.l.b16 %v487
    %v3007 = vunpack.c.l.b16 %v488
    %v3008 = vunpack.c.l.b16 %v489
    %v3009 = vunpack.c.l.b16 %v490
    %v3010 = vunpack.c.l.b16 %v491
    %v3011 = vunpack.c.l.b16 %v492
    %v3012 = vunpack.c.l.b16 %v493
    %v3013 = vunpack.c.l.b16 %v494
    %v3014 = vunpack.c.l.b16 %v495
    %v3015 = vunpack.c.l.b16 %v496
    %v3016 = vunpack.c.l.b16 %v497
    %v3017 = vunpack.c.l.b16 %v498
    %v3018 = vunpack.c.l.b16 %v499
    %v3019 = vunpack.c.l.b16 %v500
    %v3020 = vunpack.c.l.b16 %v501
    %v3021 = vunpack.c.l.b16 %v502
    %v3022 = vunpack.c.l.b16 %v503
    %v3023 = vunpack.c.l.b16 %v504
    %v3024 = vunpack.c.l.b16 %v505
    %v3025 = vunpack.c.l.b16 %v506
    %v3026 = vunpack.c.l.b16 %v507
    %v3027 = vunpack.c.l.b16 %v508
    %v3028 = vunpack.c.l.b16 %v509
    %v3029 = vunpack.c.l.b16 %v510
    %v3030 = vunpack.c.l.b16 %v511
    %v3031 = vunpack.c.l.b16 %v512
    %v3032 = vunpack.c.l.b16 %v513
    %v3033 = vunpack.c.l.b16 %v514
    %v3034 = vunpack.c.l.b16 %v515
    %v3035 = vunpack.c.l.b16 %v516
    %v3036 = vunpack.c.l.b16 %v517
    %v3037 = vunpack.c.l.b16 %v518
    %v3038 = vunpack.c.l.b16 %v519
    %v3039 = vunpack.c.l.b16 %v520
    %v3040 = vunpack.c.l.b16 %v521
    %v3041 = vunpack.c.l.b16 %v522
    %v3042 = vunpack.c.l.b16 %v523
    %v3043 = vunpack.c.l.b16 %v524
    %v3044 = vunpack.c.l.b16 %v525
    %v3045 = vunpack.c.l.b16 %v526
    %v3046 = vunpack.c.l.b16 %v527
    %v3047 = vunpack.c.l.b16 %v528
    %v3048 = vunpack.c.l.b16 %v529
    %v3049 = vunpack.c.l.b16 %v530
    %v3050 = vunpack.c.l.b16 %v531
    %v3051 = vunpack.c.l.b16 %v532
    %v3052 = vunpack.c.l.b16 %v533
    %v3053 = vunpack.c.l.b16 %v534
    %v3054 = vunpack.c.l.b16 %v535
    %v3055 = vunpack.c.l.b16 %v536
    %v3056 = vunpack.c.l.b16 %v537
    %v3057 = vunpack.c.l.b16 %v538
    %v3058 = vunpack.c.l.b16 %v539
    %v3059 = vunpack.c.l.b16 %v540
    %v3060 = vunpack.c.l.b16 %v541
    %v3061 = vunpack.c.l.b16 %v542
    %v3062 = vunpack.c.l.b16 %v543
    %v3063 = vunpack.c.l.b16 %v544
    %v3064 = vunpack.c.l.b16 %v545
    %v3065 = vunpack.c.l.b16 %v546
    %v3066 = vunpack.c.l.b16 %v547
    %v3067 = vunpack.c.l.b16 %v548
    %v3068 = vunpack.c.l.b16 %v549
    %v3069 = vunpack.c.l.b16 %v550
    %v3070 = vunpack.c.l.b16 %v551
    %v3071 = vunpack.c.l.b16 %v552
    %v3072 = vunpack.c.l.b16 %v553
    %v3073 = vunpack.c.l.b16 %v554
    %v3074 = vunpack.c.l.b16 %v555
    %v3075 = vunpack.c.l.b16 %v556
    %v3076 = vunpack.c.l.b16 %v557
    %v3077 = vunpack.c.l.b16 %v558
    %v3078 = vunpack.c.l.b16 %v559
    %v3079 = vunpack.c.l.b16 %v560
    %v3080 = vunpack.c.l.b16 %v561
    %v3081 = vunpack.c.l.b16 %v562
    %v3082 = vunpack.c.l.b16 %v563
    %v3083 = vunpack.c.l.b16 %v564
    %v3084 = vunpack.c.l.b16 %v565
    %v3085 = vunpack.c.l.b16 %v566
    %v3086 = vunpack.c.l.b16 %v567
    %v3087 = vunpack.c.l.b16 %v568
    %v3088 = vunpack.c.l.b16 %v569
    %v3089 = vunpack.c.l.b16 %v570
    %v3090 = vunpack.c.l.b16 %v571
    %v3091 = vunpack.c.l.b16 %v572
    %v3092 = vunpack.c.l.b16 %v573
    %v3093 = vunpack.c.l.b16 %v574
    %v3094 = vunpack.c.l.b16 %v575
    %v3095 = vunpack.c.l.b16 %v576
    %v3096 = vunpack.c.l.b16 %v577
    %v3097 = vunpack.c.l.b16 %v578
    %v3098 = vunpack.c.l.b16 %v579
    %v3099 = vunpack.c.l.b16 %v580
    %v3100 = vunpack.c.l.b16 %v581
    %v3101 = vunpack.c.l.b16 %v582
    %v3102 = vunpack.c.l.b16 %v583
    %v3103 = vunpack.c.l.b16 %v584
    %v3104 = vunpack.c.l.b16 %v585
    %v3105 = vunpack.c.l.b16 %v586
    %v3106 = vunpack.c.l.b16 %v587
    %v3107 = vunpack.c.l.b16 %v588
    %v3108 = vunpack.c.l.b16 %v589
    %v3109 = vunpack.c.l.b16 %v590
    %v3110 = vunpack.c.l.b16 %v591
    %v3111 = vunpack.c.l.b16 %v592
    %v3112 = vunpack.c.l.b16 %v593
    %v3113 = vunpack.c.l.b16 %v594
    %v3114 = vunpack.c.l.b16 %v595
    %v3115 = vunpack.c.l.b16 %v596
    %v3116 = vunpack.c.l.b16 %v597
    %v3117 = vunpack.c.l.b16 %v598
    %v3118 = vunpack.c.l.b16 %v599
    %v3119 = vunpack.c.l.b16 %v600
    %v3120 = vunpack.c.l.b16 %v601
    %v3121 = vunpack.c.l.b16 %v602
    %v3122 = vunpack.c.l.b16 %v603
    %v3123 = vunpack.c.l.b16 %v604
    %v3124 = vunpack.c.l.b16 %v605
    %v3125 = vunpack.c.l.b16 %v606
    %v3126 = vunpack.c.l.b16 %v607
    %v3127 = vunpack.c.l.b16 %v608
    %v3128 = vunpack.c.l.b16 %v609
    %v3129 = vunpack.c.l.b16 %v610
    %v3130 = vunpack.c.l.b16 %v611
    %v3131 = vunpack.c.l.b16 %v612
    %v3132 = vunpack.c.l.b16 %v613
    %v3133 = vunpack.c.l.b16 %v614
    %v3134 = vunpack.c.l.b16 %v615
    %v3135 = vunpack.c.l.b16 %v616
    %v3136 = vunpack.c.l.b16 %v617
    %v3137 = vunpack.c.l.b16 %v618
    %v3138 = vunpack.c.l.b16 %v619
    %v3139 = vunpack.c.l.b16 %v620
    %v3140 = vunpack.c.l.b16 %v621
    %v3141 = vunpack.c.l.b16 %v622
    %v3142 = vunpack.c.l.b16 %v623
    %v3143 = vunpack.c.l.b16 %v624
    %v3144 = vunpack.c.l.b16 %v625
    %v3145 = vunpack.c.l.b16 %v626
    %v3146 = vunpack.c.l.b16 %v627
    %v3147 = vunpack.c.l.b16 %v628
    %v3148 = vunpack.c.l.b16 %v629
    %v3149 = vunpack.c.l.b16 %v630
    %v3150 = vunpack.c.l.b16 %v631
    %v3151 = vunpack.c.l.b16 %v632
    %v3152 = vunpack.c.l.b16 %v633
    %v3153 = vunpack.c.l.b16 %v634
    %v3154 = vunpack.c.l.b16 %v635
    %v3155 = vunpack.c.l.b16 %v636
    %v3156 = vunpack.c.l.b16 %v637
    %v3157 = vunpack.c.l.b16 %v638
    %v3158 = vunpack.c.l.b16 %v639
    %v3159 = vunpack.c.l.b16 %v640
    %v3160 = vunpack.c.l.b16 %v641
    %v3161 = vunpack.c.l.b16 %v642
    %v3162 = vunpack.c.l.b16 %v643
    %v3163 = vunpack.c.l.b16 %v644
    %v3164 = vunpack.c.l.b16 %v645
    %v3165 = vunpack.c.l.b16 %v646
    %v3166 = vunpack.c.l.b16 %v647
    %v3167 = vunpack.c.l.b16 %v648
    %v3168 = vunpack.c.l.b16 %v649
    %v3169 = vunpack.c.l.b16 %v650
    %v3170 = vunpack.c.l.b16 %v651
    %v3171 = vunpack.c.l.b16 %v652
    %v3172 = vunpack.c.l.b16 %v653
    %v3173 = vunpack.c.l.b16 %v654
    %v3174 = vunpack.c.l.b16 %v655
    %v3175 = vunpack.c.l.b16 %v656
    %v3176 = vunpack.c.l.b16 %v657
    %v3177 = vunpack.c.l.b16 %v658
    %v3178 = vunpack.c.l.b16 %v659
    %v3179 = vunpack.c.l.b16 %v660
    %v3180 = vunpack.c.l.b16 %v661
    %v3181 = vunpack.c.l.b16 %v662
    %v3182 = vunpack.c.l.b16 %v663
    %v3183 = vunpack.c.l.b16 %v664
    %v3184 = vunpack.c.l.b16 %v665
    %v3185 = vunpack.c.l.b16 %v666
    %v3186 = vunpack.c.l.b16 %v667
    %v3187 = vunpack.c.l.b16 %v668
    %v3188 = vunpack.c.l.b16 %v669
    %v3189 = vunpack.c.l.b16 %v670
    %v3190 = vunpack.c.l.b16 %v671
    %v3191 = vunpack.c.l.b16 %v672
    %v3192 = vunpack.c.l.b16 %v673
    %v3193 = vunpack.c.l.b16 %v674
    %v3194 = vunpack.c.l.b16 %v675
    %v3195 = vunpack.c.l.b16 %v676
    %v3196 = vunpack.c.l.b16 %v677
    %v3197 = vunpack.c.l.b16 %v678
    %v3198 = vunpack.c.l.b16 %v679
    %v3199 = vunpack.c.l.b16 %v680
    %v3200 = vunpack.c.l.b16 %v681
    %v3201 = vunpack.c.l.b16 %v682
    %v3202 = vunpack.c.l.b16 %v683
    %v3203 = vunpack.c.l.b16 %v684
    %v3204 = vunpack.c.l.b16 %v685
    %v3205 = vunpack.c.l.b16 %v686
    %v3206 = vunpack.c.l.b16 %v687
    %v3207 = vunpack.c.l.b16 %v688
    %v3208 = vunpack.c.l.b16 %v689
    %v3209 = vunpack.c.l.b16 %v690
    %v3210 = vunpack.c.l.b16 %v691
    %v3211 = vunpack.c.l.b16 %v692
    %v3212 = vunpack.c.l.b16 %v693
    %v3213 = vunpack.c.l.b16 %v694
    %v3214 = vunpack.c.l.b16 %v695
    %v3215 = vunpack.c.l.b16 %v696
    %v3216 = vunpack.c.l.b16 %v697
    %v3217 = vunpack.c.l.b16 %v698
    %v3218 = vunpack.c.l.b16 %v699
    %v3219 = vunpack.c.l.b16 %v700
    %v3220 = vunpack.c.l.b16 %v701
    %v3221 = vunpack.c.l.b16 %v702
    %v3222 = vunpack.c.l.b16 %v703
    %v3223 = vunpack.c.l.b16 %v704
    %v3224 = vunpack.c.l.b16 %v705
    %v3225 = vunpack.c.l.b16 %v706
    %v3226 = vunpack.c.l.b16 %v707
    %v3227 = vunpack.c.l.b16 %v708
    %v3228 = vunpack.c.l.b16 %v709
    %v3229 = vunpack.c.l.b16 %v710
    %v3230 = vunpack.c.l.b16 %v711
    %v3231 = vunpack.c.l.b16 %v712
    %v3232 = vunpack.c.l.b16 %v713
    %v3233 = vunpack.c.l.b16 %v714
    %v3234 = vunpack.c.l.b16 %v715
    %v3235 = vunpack.c.l.b16 %v716
    %v3236 = vunpack.c.l.b16 %v717
    %v3237 = vunpack.c.l.b16 %v718
    %v3238 = vunpack.c.l.b16 %v719
    %v3239 = vunpack.c.l.b16 %v720
    %v3240 = vunpack.c.l.b16 %v721
    %v3241 = vunpack.c.l.b16 %v722
    %v3242 = vunpack.c.l.b16 %v723
    %v3243 = vunpack.c.l.b16 %v724
    %v3244 = vunpack.c.l.b16 %v725
    %v3245 = vunpack.c.l.b16 %v726
    %v3246 = vunpack.c.l.b16 %v727
    %v3247 = vunpack.c.l.b16 %v728
    %v3248 = vunpack.c.l.b16 %v729
    %v3249 = vunpack.c.l.b16 %v730
    %v3250 = vunpack.c.l.b16 %v731
    %v3251 = vunpack.c.l.b16 %v732
    %v3252 = vunpack.c.l.b16 %v733
    %v3253 = vunpack.c.l.b16 %v734
    %v3254 = vunpack.c.l.b16 %v735
    %v3255 = vunpack.c.l.b16 %v736
    %v3256 = vunpack.c.l.b16 %v737
    %v3257 = vunpack.c.l.b16 %v738
    %v3258 = vunpack.c.l.b16 %v739
    %v3259 = vunpack.c.l.b16 %v740
    %v3260 = vunpack.c.l.b16 %v741
    %v3261 = vunpack.c.l.b16 %v742
    %v3262 = vunpack.c.l.b16 %v743
    %v3263 = vunpack.c.l.b16 %v744
    %v3264 = vunpack.c.l.b16 %v745
    %v3265 = vunpack.c.l.b16 %v746
    %v3266 = vunpack.c.l.b16 %v747
    %v3267 = vunpack.c.l.b16 %v748
    %v3268 = vunpack.c.l.b16 %v749
    %v3269 = vunpack.c.l.b16 %v750
    %v3270 = vunpack.c.l.b16 %v751
    %v3271 = vunpack.c.l.b16 %v752
    %v3272 = vunpack.c.l.b16 %v753
    %v3273 = vunpack.c.l.b16 %v754
    %v3274 = vunpack.c.l.b16 %v755
    %v3275 = vunpack.c.l.b16 %v756
    %v3276 = vunpack.c.l.b16 %v757
    %v3277 = vunpack.c.l.b16 %v758
    %v3278 = vunpack.c.l.b16 %v759
    %v3279 = vunpack.c.l.b16 %v760
    %v3280 = vunpack.c.l.b16 %v761
    %v3281 = vunpack.c.l.b16 %v762
    %v3282 = vunpack.c.l.b16 %v763
    %v3283 = vunpack.c.l.b16 %v764
    %v3284 = vunpack.c.l.b16 %v765
    %v3285 = vunpack.c.l.b16 %v766
    %v3286 = vunpack.c.l.b16 %v767
    %v3287 = vunpack.c.l.b16 %v768
    %v3288 = vunpack.c.l.b16 %v769
    %v3289 = vunpack.c.l.b16 %v770
    %v3290 = vunpack.c.l.b16 %v771
    %v3291 = vunpack.c.l.b16 %v772
    %v3292 = vunpack.c.l.b16 %v773
    %v3293 = vunpack.c.l.b16 %v774
    %v3294 = vunpack.c.l.b16 %v775
    %v3295 = vunpack.c.l.b16 %v776
    %v3296 = vunpack.c.l.b16 %v777
    %v3297 = vunpack.c.l.b16 %v778
    %v3298 = vunpack.c.l.b16 %v779
    %v3299 = vunpack.c.l.b16 %v780
    %v3300 = vunpack.c.l.b16 %v781
    %v3301 = vunpack.c.l.b16 %v782
    %v3302 = vunpack.c.l.b16 %v783
    %v3303 = vunpack.c.l.b16 %v784
    %v3304 = vunpack.c.l.b16 %v785
    %v3305 = vunpack.c.l.b16 %v786
    %v3306 = vunpack.c.l.b16 %v787
    %v3307 = vunpack.c.l.b16 %v788
    %v3308 = vunpack.c.l.b16 %v789
    %v3309 = vunpack.c.l.b16 %v790
    %v3310 = vunpack.c.l.b16 %v791
    %v3311 = vunpack.c.l.b16 %v792
    %v3312 = vunpack.c.l.b16 %v793
    %v3313 = vunpack.c.l.b16 %v794
    %v3314 = vunpack.c.l.b16 %v795
    %v3315 = vunpack.c.l.b16 %v796
    %v3316 = vunpack.c.l.b16 %v797
    %v3317 = vunpack.c.l.b16 %v798
    %v3318 = vunpack.c.l.b16 %v799
    %v3319 = vunpack.c.l.b16 %v800
    %v3320 = vunpack.c.l.b16 %v801
    %v3321 = vunpack.c.l.b16 %v802
    %v3322 = vunpack.c.l.b16 %v803
    %v3323 = vunpack.c.l.b16 %v804
    %v3324 = vunpack.c.l.b16 %v805
    %v3325 = vunpack.c.l.b16 %v806
    %v3326 = vunpack.c.l.b16 %v807
    %v3327 = vunpack.c.l.b16 %v808
    %v3328 = vunpack.c.l.b16 %v809
    %v3329 = vunpack.c.l.b16 %v810
    %v3330 = vunpack.c.l.b16 %v811
    %v3331 = vunpack.c.l.b16 %v812
    %v3332 = vunpack.c.l.b16 %v813
    %v3333 = vunpack.c.l.b16 %v814
    %v3334 = vunpack.c.l.b16 %v815
    %v3335 = vunpack.c.l.b16 %v816
    %v3336 = vunpack.c.l.b16 %v817
    %v3337 = vunpack.c.l.b16 %v818
    %v3338 = vunpack.c.l.b16 %v819
    %v3339 = vunpack.c.l.b16 %v820
    %v3340 = vunpack.c.l.b16 %v821
    %v3341 = vunpack.c.l.b16 %v822
    %v3342 = vunpack.c.l.b16 %v823
    %v3343 = vunpack.c.l.b16 %v824
    %v3344 = vunpack.c.l.b16 %v825
    %v3345 = vunpack.c.l.b16 %v826
    %v3346 = vunpack.c.l.b16 %v827
    %v3347 = vunpack.c.l.b16 %v828
    %v3348 = vunpack.c.l.b16 %v829
    %v3349 = vunpack.c.l.b16 %v830
    %v3350 = vunpack.c.l.b16 %v831
    %v3351 = vunpack.c.l.b16 %v832
    %v3352 = vunpack.c.l.b16 %v833
    %v3353 = vunpack.c.l.b16 %v834
    %v3354 = vunpack.c.l.b16 %v835
    %v3355 = vunpack.c.l.b16 %v836
    %v3356 = vunpack.c.l.b16 %v837
    %v3357 = vunpack.c.l.b16 %v838
    %v3358 = vunpack.c.l.b16 %v839
    %v3359 = vunpack.c.l.b16 %v840
    %v3360 = vunpack.c.l.b16 %v841
    %v3361 = vunpack.c.l.b16 %v842
    %v3362 = vunpack.c.l.b16 %v843
    %v3363 = vunpack.c.l.b16 %v844
    %v3364 = vunpack.c.l.b16 %v845
    %v3365 = vunpack.c.l.b16 %v846
    %v3366 = vunpack.c.l.b16 %v847
    %v3367 = vunpack.c.l.b16 %v848
    %v3368 = vunpack.c.l.b16 %v849
    %v3369 = vunpack.c.l.b16 %v850
    %v3370 = vunpack.c.l.b16 %v851
    %v3371 = vunpack.c.l.b16 %v852
    %v3372 = vunpack.c.l.b16 %v853
    %v3373 = vunpack.c.l.b16 %v854
    %v3374 = vunpack.c.l.b16 %v855
    %v3375 = vunpack.c.l.b16 %v856
    %v3376 = vunpack.c.l.b16 %v857
    %v3377 = vunpack.c.l.b16 %v858
    %v3378 = vunpack.c.l.b16 %v859
    %v3379 = vunpack.c.l.b16 %v860
    %v3380 = vunpack.c.l.b16 %v861
    %v3381 = vunpack.c.l.b16 %v862
    %v3382 = vunpack.c.l.b16 %v863
    %v3383 = vunpack.c.l.b16 %v864
    %v3384 = vunpack.c.l.b16 %v865
    %v3385 = vunpack.c.l.b16 %v866
    %v3386 = vunpack.c.l.b16 %v867
    %v3387 = vunpack.c.l.b16 %v868
    %v3388 = vunpack.c.l.b16 %v869
    %v3389 = vunpack.c.l.b16 %v870
    %v3390 = vunpack.c.l.b16 %v871
    %v3391 = vunpack.c.l.b16 %v872
    %v3392 = vunpack.c.l.b16 %v873
    %v3393 = vunpack.c.l.b16 %v874
    %v3394 = vunpack.c.l.b16 %v875
    %v3395 = vunpack.c.l.b16 %v876
    %v3396 = vunpack.c.l.b16 %v877
    %v3397 = vunpack.c.l.b16 %v878
    %v3398 = vunpack.c.l.b16 %v879
    %v3399 = vunpack.c.l.b16 %v880
    %v3400 = vunpack.c.l.b16 %v881
    %v3401 = vunpack.c.l.b16 %v882
    %v3402 = vunpack.c.l.b16 %v883
    %v3403 = vunpack.c.l.b16 %v884
    %v3404 = vunpack.c.l.b16 %v885
    %v3405 = vunpack.c.l.b16 %v886
    %v3406 = vunpack.c.l.b16 %v887
    %v3407 = vunpack.c.l.b16 %v888
    %v3408 = vunpack.c.l.b16 %v889
    %v3409 = vunpack.c.l.b16 %v890
    %v3410 = vunpack.c.l.b16 %v891
    %v3411 = vunpack.c.l.b16 %v892
    %v3412 = vunpack.c.l.b16 %v893
    %v3413 = vunpack.c.l.b16 %v894
    %v3414 = vunpack.c.l.b16 %v895
    %v3415 = vunpack.c.l.b16 %v896
    %v3416 = vunpack.c.l.b16 %v897
    %v3417 = vunpack.c.l.b16 %v898
    %v3418 = vunpack.c.l.b16 %v899
    %v3419 = vunpack.c.l.b16 %v900
    %v3420 = vunpack.c.l.b16 %v901
    %v3421 = vunpack.c.l.b16 %v902
    %v3422 = vunpack.c.l.b16 %v903
    %v3423 = vunpack.c.l.b16 %v904
    %v3424 = vunpack.c.l.b16 %v905
    %v3425 = vunpack.c.l.b16 %v906
    %v3426 = vunpack.c.l.b16 %v907
    %v3427 = vunpack.c.l.b16 %v908
    %v3428 = vunpack.c.l.b16 %v909
    %v3429 = vunpack.c.l.b16 %v910
    %v3430 = vunpack.c.l.b16 %v911
    %v3431 = vunpack.c.l.b16 %v912
    %v3432 = vunpack.c.l.b16 %v913
    %v3433 = vunpack.c.l.b16 %v914
    %v3434 = vunpack.c.l.b16 %v915
    %v3435 = vunpack.c.l.b16 %v916
    %v3436 = vunpack.c.l.b16 %v917
    %v3437 = vunpack.c.l.b16 %v918
    %v3438 = vunpack.c.l.b16 %v919
    %v3439 = vunpack.c.l.b16 %v920
    %v3440 = vunpack.c.l.b16 %v921
    %v3441 = vunpack.c.l.b16 %v922
    %v3442 = vunpack.c.l.b16 %v923
    %v3443 = vunpack.c.l.b16 %v924
    %v3444 = vunpack.c.l.b16 %v925
    %v3445 = vunpack.c.l.b16 %v926
    %v3446 = vunpack.c.l.b16 %v927
    %v3447 = vunpack.c.l.b16 %v928
    %v3448 = vunpack.c.l.b16 %v929
    %v3449 = vunpack.c.l.b16 %v930
    %v3450 = vunpack.c.l.b16 %v931
    %v3451 = vunpack.c.l.b16 %v932
    %v3452 = vunpack.c.l.b16 %v933
    %v3453 = vunpack.c.l.b16 %v934
    %v3454 = vunpack.c.l.b16 %v935
    %v3455 = vunpack.c.l.b16 %v936
    %v3456 = vunpack.c.l.b16 %v937
    %v3457 = vunpack.c.l.b16 %v938
    %v3458 = vunpack.c.l.b16 %v939
    %v3459 = vunpack.c.l.b16 %v940
    %v3460 = vunpack.c.l.b16 %v941
    %v3461 = vunpack.c.l.b16 %v942
    %v3462 = vunpack.c.l.b16 %v943
    %v3463 = vunpack.c.l.b16 %v944
    %v3464 = vunpack.c.l.b16 %v945
    %v3465 = vunpack.c.l.b16 %v946
    %v3466 = vunpack.c.l.b16 %v947
    %v3467 = vunpack.c.l.b16 %v948
    %v3468 = vunpack.c.l.b16 %v949
    %v3469 = vunpack.c.l.b16 %v950
    %v3470 = vunpack.c.l.b16 %v951
    %v3471 = vunpack.c.l.b16 %v952
    %v3472 = vunpack.c.l.b16 %v953
    %v3473 = vunpack.c.l.b16 %v954
    %v3474 = vunpack.c.l.b16 %v955
    %v3475 = vunpack.c.l.b16 %v956
    %v3476 = vunpack.c.l.b16 %v957
    %v3477 = vunpack.c.l.b16 %v958
    %v3478 = vunpack.c.l.b16 %v959
    %v3479 = vunpack.c.l.b16 %v960
    %v3480 = vunpack.c.l.b16 %v961
    %v3481 = vunpack.c.l.b16 %v962
    %v3482 = vunpack.c.l.b16 %v963
    %v3483 = vunpack.c.l.b16 %v964
    %v3484 = vunpack.c.l.b16 %v965
    %v3485 = vunpack.c.l.b16 %v966
    %v3486 = vunpack.c.l.b16 %v967
    %v3487 = vunpack.c.l.b16 %v968
    %v3488 = vunpack.c.l.b16 %v969
    %v3489 = vunpack.c.l.b16 %v970
    %v3490 = vunpack.c.l.b16 %v971
    %v3491 = vunpack.c.l.b16 %v972
    %v3492 = vunpack.c.l.b16 %v973
    %v3493 = vunpack.c.l.b16 %v974
    %v3494 = vunpack.c.l.b16 %v975
    %v3495 = vunpack.c.l.b16 %v976
    %v3496 = vunpack.c.l.b16 %v977
    %v3497 = vunpack.c.l.b16 %v978
    %v3498 = vunpack.c.l.b16 %v979
    %v3499 = vunpack.c.l.b16 %v980
    %v3500 = vunpack.c.l.b16 %v981
    %v3501 = vunpack.c.l.b16 %v982
    %v3502 = vunpack.c.l.b16 %v983
    %v3503 = vunpack.c.l.b16 %v984
    %v3504 = vunpack.c.l.b16 %v985
    %v3505 = vunpack.c.l.b16 %v986
    %v3506 = vunpack.c.l.b16 %v987
    %v3507 = vunpack.c.l.b16 %v988
    %v3508 = vunpack.c.l.b16 %v989
    %v3509 = vunpack.c.l.b16 %v990
    %v3510 = vunpack.c.l.b16 %v991
    %v3511 = vunpack.c.l.b16 %v992
    %v3512 = vunpack.c.l.b16 %v993
    %v3513 = vunpack.c.l.b16 %v994
    %v3514 = vunpack.c.l.b16 %v995
    %v3515 = vunpack.c.l.b16 %v996
    %v3516 = vunpack.c.l.b16 %v997
    %v3517 = vunpack.c.l.b16 %v998
    %v3518 = vunpack.c.l.b16 %v999
    %v3519 = vunpack.c.l.b16 %v1000
    %v3520 = vunpack.c.l.b16 %v1001
    %v3521 = vunpack.c.l.b16 %v1002
    %v3522 = vunpack.c.l.b16 %v1003
    %v3523 = vunpack.c.l.b16 %v1004
    %v3524 = vunpack.c.l.b16 %v1005
    %v3525 = vunpack.c.l.b16 %v1006
    %v3526 = vunpack.c.l.b16 %v1007
    %v3527 = vunpack.c.l.b16 %v1008
    %v3528 = vunpack.c.l.b16 %v1009
    %v3529 = vunpack.c.l.b16 %v1010
    %v3530 = vunpack.c.l.b16 %v1011
    %v3531 = vunpack.c.l.b16 %v1012
    %v3532 = vunpack.c.l.b16 %v1013
    %v3533 = vunpack.c.l.b16 %v1014
    %v3534 = vunpack.c.l.b16 %v1015
    %v3535 = vunpack.c.l.b16 %v1016
    %v3536 = vunpack.c.l.b16 %v1017
    %v3537 = vunpack.c.l.b16 %v1018
    %v3538 = vunpack.c.l.b16 %v1019
    %v3539 = vunpack.c.l.b16 %v1020
    %v3540 = vunpack.c.l.b16 %v1021
    %v3541 = vunpack.c.l.b16 %v1022
    %v3542 = vunpack.c.l.b16 %v1023
    %v3543 = vunpack.c.l.b16 %v1024
    %v3544 = vunpack.c.l.b16 %v1025
    %v3545 = vunpack.c.l.b16 %v1026
    %v3546 = vunpack.c.l.b16 %v1027
    %v3547 = vunpack.c.l.b16 %v1028
    %v3548 = vunpack.c.l.b16 %v1029
    %v3549 = vunpack.c.l.b16 %v1030
    %v3550 = vunpack.c.l.b16 %v1031
    %v3551 = vunpack.c.l.b16 %v1032
    %v3552 = vunpack.c.l.b16 %v1033
    %v3553 = vunpack.c.l.b16 %v1034
    %v3554 = vunpack.c.l.b16 %v1035
    %v3555 = vunpack.c.l.b16 %v1036
    %v3556 = vunpack.c.l.b16 %v1037
    %v3557 = vunpack.c.l.b16 %v1038
    %v3558 = vunpack.c.l.b16 %v1039
    %v3559 = vunpack.c.l.b16 %v1040
    %v3560 = vunpack.c.l.b16 %v1041
    %v3561 = vunpack.c.l.b16 %v1042
    %v3562 = vunpack.c.l.b16 %v1043
    %v3563 = vunpack.c.l.b16 %v1044
    %v3564 = vunpack.c.l.b16 %v1045
    %v3565 = vunpack.c.l.b16 %v1046
    %v3566 = vunpack.c.l.b16 %v1047
    %v3567 = vunpack.c.l.b16 %v1048
    %v3568 = vunpack.c.l.b16 %v1049
    %v3569 = vunpack.c.l.b16 %v1050
    %v3570 = vunpack.c.l.b16 %v1051
    %v3571 = vunpack.c.l.b16 %v1052
    %v3572 = vunpack.c.l.b16 %v1053
    %v3573 = vunpack.c.l.b16 %v1054
    %v3574 = vunpack.c.l.b16 %v1055
    %v3575 = vunpack.c.l.b16 %v1056
    %v3576 = vunpack.c.l.b16 %v1057
    %v3577 = vunpack.c.l.b16 %v1058
    %v3578 = vunpack.c.l.b16 %v1059
    %v3579 = vunpack.c.l.b16 %v1060
    %v3580 = vunpack.c.l.b16 %v1061
    %v3581 = vunpack.c.l.b16 %v1062
    %v3582 = vunpack.c.l.b16 %v1063
    %v3583 = vunpack.c.l.b16 %v1064
    %v3584 = vunpack.c.l.b16 %v1065
    %v3585 = vunpack.c.l.b16 %v1066
    %v3586 = vunpack.c.l.b16 %v1067
    %v3587 = vunpack.c.l.b16 %v1068
    %v3588 = vunpack.c.l.b16 %v1069
    %v3589 = vunpack.c.l.b16 %v1070
    %v3590 = vunpack.c.l.b16 %v1071
    %v3591 = vunpack.c.l.b16 %v1072
    %v3592 = vunpack.c.l.b16 %v1073
    %v3593 = vunpack.c.l.b16 %v1074
    %v3594 = vunpack.c.l.b16 %v1075
    %v3595 = vunpack.c.l.b16 %v1076
    %v3596 = vunpack.c.l.b16 %v1077
    %v3597 = vunpack.c.l.b16 %v1078
    %v3598 = vunpack.c.l.b16 %v1079
    %v3599 = vunpack.c.l.b16 %v1080
    %v3600 = vunpack.c.l.b16 %v1081
    %v3601 = vunpack.c.l.b16 %v1082
    %v3602 = vunpack.c.l.b16 %v1083
    %v3603 = vunpack.c.l.b16 %v1084
    %v3604 = vunpack.c.l.b16 %v1085
    %v3605 = vunpack.c.l.b16 %v1086
    %v3606 = vunpack.c.l.b16 %v1087
    %v3607 = vunpack.c.l.b16 %v1088
    %v3608 = vunpack.c.l.b16 %v1089
    %v3609 = vunpack.c.l.b16 %v1090
    %v3610 = vunpack.c.l.b16 %v1091
    %v3611 = vunpack.c.l.b16 %v1092
    %v3612 = vunpack.c.l.b16 %v1093
    %v3613 = vunpack.c.l.b16 %v1094
    %v3614 = vunpack.c.l.b16 %v1095
    %v3615 = vunpack.c.l.b16 %v1096
    %v3616 = vunpack.c.l.b16 %v1097
    %v3617 = vunpack.c.l.b16 %v1098
    %v3618 = vunpack.c.l.b16 %v1099
    %v3619 = vpack.c.b16 %v2596, %v2595
    %v3620 = vpack.c.b16 %v2598, %v2597
    %v3621 = vpack.c.b16 %v2600, %v2599
    %v3622 = vpack.c.b16 %v2602, %v2601
    %v3623 = vpack.c.b16 %v2604, %v2603
    %v3624 = vpack.c.b16 %v2606, %v2605
    %v3625 = vpack.c.b16 %v2608, %v2607
    %v3626 = vpack.c.b16 %v2610, %v2609
    %v3627 = vpack.c.b16 %v2612, %v2611
    %v3628 = vpack.c.b16 %v2614, %v2613
    %v3629 = vpack.c.b16 %v2616, %v2615
    %v3630 = vpack.c.b16 %v2618, %v2617
    %v3631 = vpack.c.b16 %v2620, %v2619
    %v3632 = vpack.c.b16 %v2622, %v2621
    %v3633 = vpack.c.b16 %v2624, %v2623
    %v3634 = vpack.c.b16 %v2626, %v2625
    %v3635 = vpack.c.b16 %v2628, %v2627
    %v3636 = vpack.c.b16 %v2630, %v2629
    %v3637 = vpack.c.b16 %v2632, %v2631
    %v3638 = vpack.c.b16 %v2634, %v2633
    %v3639 = vpack.c.b16 %v2636, %v2635
    %v3640 = vpack.c.b16 %v2638, %v2637
    %v3641 = vpack.c.b16 %v2640, %v2639
    %v3642 = vpack.c.b16 %v2642, %v2641
    %v3643 = vpack.c.b16 %v2644, %v2643
    %v3644 = vpack.c.b16 %v2646, %v2645
    %v3645 = vpack.c.b16 %v2648, %v2647
    %v3646 = vpack.c.b16 %v2650, %v2649
    %v3647 = vpack.c.b16 %v2652, %v2651
    %v3648 = vpack.c.b16 %v2654, %v2653
    %v3649 = vpack.c.b16 %v2656, %v2655
    %v3650 = vpack.c.b16 %v2658, %v2657
    %v3651 = vpack.c.b16 %v2660, %v2659
    %v3652 = vpack.c.b16 %v2662, %v2661
    %v3653 = vpack.c.b16 %v2664, %v2663
    %v3654 = vpack.c.b16 %v2666, %v2665
    %v3655 = vpack.c.b16 %v2668, %v2667
    %v3656 = vpack.c.b16 %v2670, %v2669
    %v3657 = vpack.c.b16 %v2672, %v2671
    %v3658 = vpack.c.b16 %v2674, %v2673
    %v3659 = vpack.c.b16 %v2676, %v2675
    %v3660 = vpack.c.b16 %v2678, %v2677
    %v3661 = vpack.c.b16 %v2680, %v2679
    %v3662 = vpack.c.b16 %v2682, %v2681
    %v3663 = vpack.c.b16 %v2684, %v2683
    %v3664 = vpack.c.b16 %v2686, %v2685
    %v3665 = vpack.c.b16 %v2688, %v2687
    %v3666 = vpack.c.b16 %v2690, %v2689
    %v3667 = vpack.c.b16 %v2692, %v2691
    %v3668 = vpack.c.b16 %v2694, %v2693
    %v3669 = vpack.c.b16 %v2696, %v2695
    %v3670 = vpack.c.b16 %v2698, %v2697
    %v3671 = vpack.c.b16 %v2700, %v2699
    %v3672 = vpack.c.b16 %v2702, %v2701
    %v3673 = vpack.c.b16 %v2704, %v2703
    %v3674 = vpack.c.b16 %v2706, %v2705
    %v3675 = vpack.c.b16 %v2708, %v2707
    %v3676 = vpack.c.b16 %v2710, %v2709
    %v3677 = vpack.c.b16 %v2712, %v2711
    %v3678 = vpack.c.b16 %v2714, %v2713
    %v3679 = vpack.c.b16 %v2716, %v2715
    %v3680 = vpack.c.b16 %v2718, %v2717
    %v3681 = vpack.c.b16 %v2720, %v2719
    %v3682 = vpack.c.b16 %v2722, %v2721
    %v3683 = vpack.c.b16 %v2724, %v2723
    %v3684 = vpack.c.b16 %v2726, %v2725
    %v3685 = vpack.c.b16 %v2728, %v2727
    %v3686 = vpack.c.b16 %v2730, %v2729
    %v3687 = vpack.c.b16 %v2732, %v2731
    %v3688 = vpack.c.b16 %v2734, %v2733
    %v3689 = vpack.c.b16 %v2736, %v2735
    %v3690 = vpack.c.b16 %v2738, %v2737
    %v3691 = vpack.c.b16 %v2740, %v2739
    %v3692 = vpack.c.b16 %v2742, %v2741
    %v3693 = vpack.c.b16 %v2744, %v2743
    %v3694 = vpack.c.b16 %v2746, %v2745
    %v3695 = vpack.c.b16 %v2748, %v2747
    %v3696 = vpack.c.b16 %v2750, %v2749
    %v3697 = vpack.c.b16 %v2752, %v2751
    %v3698 = vpack.c.b16 %v2754, %v2753
    %v3699 = vpack.c.b16 %v2756, %v2755
    %v3700 = vpack.c.b16 %v2758, %v2757
    %v3701 = vpack.c.b16 %v2760, %v2759
    %v3702 = vpack.c.b16 %v2762, %v2761
    %v3703 = vpack.c.b16 %v2764, %v2763
    %v3704 = vpack.c.b16 %v2766, %v2765
    %v3705 = vpack.c.b16 %v2768, %v2767
    %v3706 = vpack.c.b16 %v2770, %v2769
    %v3707 = vpack.c.b16 %v2772, %v2771
    %v3708 = vpack.c.b16 %v2774, %v2773
    %v3709 = vpack.c.b16 %v2776, %v2775
    %v3710 = vpack.c.b16 %v2778, %v2777
    %v3711 = vpack.c.b16 %v2780, %v2779
    %v3712 = vpack.c.b16 %v2782, %v2781
    %v3713 = vpack.c.b16 %v2784, %v2783
    %v3714 = vpack.c.b16 %v2786, %v2785
    %v3715 = vpack.c.b16 %v2788, %v2787
    %v3716 = vpack.c.b16 %v2790, %v2789
    %v3717 = vpack.c.b16 %v2792, %v2791
    %v3718 = vpack.c.b16 %v2794, %v2793
    %v3719 = vpack.c.b16 %v2796, %v2795
    %v3720 = vpack.c.b16 %v2798, %v2797
    %v3721 = vpack.c.b16 %v2800, %v2799
    %v3722 = vpack.c.b16 %v2802, %v2801
    %v3723 = vpack.c.b16 %v2804, %v2803
    %v3724 = vpack.c.b16 %v2806, %v2805
    %v3725 = vpack.c.b16 %v2808, %v2807
    %v3726 = vpack.c.b16 %v2810, %v2809
    %v3727 = vpack.c.b16 %v2812, %v2811
    %v3728 = vpack.c.b16 %v2814, %v2813
    %v3729 = vpack.c.b16 %v2816, %v2815
    %v3730 = vpack.c.b16 %v2818, %v2817
    %v3731 = vpack.c.b16 %v2820, %v2819
    %v3732 = vpack.c.b16 %v2822, %v2821
    %v3733 = vpack.c.b16 %v2824, %v2823
    %v3734 = vpack.c.b16 %v2826, %v2825
    %v3735 = vpack.c.b16 %v2828, %v2827
    %v3736 = vpack.c.b16 %v2830, %v2829
    %v3737 = vpack.c.b16 %v2832, %v2831
    %v3738 = vpack.c.b16 %v2834, %v2833
    %v3739 = vpack.c.b16 %v2836, %v2835
    %v3740 = vpack.c.b16 %v2838, %v2837
    %v3741 = vpack.c.b16 %v2840, %v2839
    %v3742 = vpack.c.b16 %v2842, %v2841
    %v3743 = vpack.c.b16 %v2844, %v2843
    %v3744 = vpack.c.b16 %v2846, %v2845
    %v3745 = vpack.c.b16 %v2848, %v2847
    %v3746 = vpack.c.b16 %v2850, %v2849
    %v3747 = vpack.c.b16 %v2852, %v2851
    %v3748 = vpack.c.b16 %v2854, %v2853
    %v3749 = vpack.c.b16 %v2856, %v2855
    %v3750 = vpack.c.b16 %v2858, %v2857
    %v3751 = vpack.c.b16 %v2860, %v2859
    %v3752 = vpack.c.b16 %v2862, %v2861
    %v3753 = vpack.c.b16 %v2864, %v2863
    %v3754 = vpack.c.b16 %v2866, %v2865
    %v3755 = vpack.c.b16 %v2868, %v2867
    %v3756 = vpack.c.b16 %v2870, %v2869
    %v3757 = vpack.c.b16 %v2872, %v2871
    %v3758 = vpack.c.b16 %v2874, %v2873
    %v3759 = vpack.c.b16 %v2876, %v2875
    %v3760 = vpack.c.b16 %v2878, %v2877
    %v3761 = vpack.c.b16 %v2880, %v2879
    %v3762 = vpack.c.b16 %v2882, %v2881
    %v3763 = vpack.c.b16 %v2884, %v2883
    %v3764 = vpack.c.b16 %v2886, %v2885
    %v3765 = vpack.c.b16 %v2888, %v2887
    %v3766 = vpack.c.b16 %v2890, %v2889
    %v3767 = vpack.c.b16 %v2892, %v2891
    %v3768 = vpack.c.b16 %v2894, %v2893
    %v3769 = vpack.c.b16 %v2896, %v2895
    %v3770 = vpack.c.b16 %v2898, %v2897
    %v3771 = vpack.c.b16 %v2900, %v2899
    %v3772 = vpack.c.b16 %v2902, %v2901
    %v3773 = vpack.c.b16 %v2904, %v2903
    %v3774 = vpack.c.b16 %v2906, %v2905
    %v3775 = vpack.c.b16 %v2908, %v2907
    %v3776 = vpack.c.b16 %v2910, %v2909
    %v3777 = vpack.c.b16 %v2912, %v2911
    %v3778 = vpack.c.b16 %v2914, %v2913
    %v3779 = vpack.c.b16 %v2916, %v2915
    %v3780 = vpack.c.b16 %v2918, %v2917
    %v3781 = vpack.c.b16 %v2920, %v2919
    %v3782 = vpack.c.b16 %v2922, %v2921
    %v3783 = vpack.c.b16 %v2924, %v2923
    %v3784 = vpack.c.b16 %v2926, %v2925
    %v3785 = vpack.c.b16 %v2928, %v2927
    %v3786 = vpack.c.b16 %v2930, %v2929
    %v3787 = vpack.c.b16 %v2932, %v2931
    %v3788 = vpack.c.b16 %v2934, %v2933
    %v3789 = vpack.c.b16 %v2936, %v2935
    %v3790 = vpack.c.b16 %v2938, %v2937
    %v3791 = vpack.c.b16 %v2940, %v2939
    %v3792 = vpack.c.b16 %v2942, %v2941
    %v3793 = vpack.c.b16 %v2944, %v2943
    %v3794 = vpack.c.b16 %v2946, %v2945
    %v3795 = vpack.c.b16 %v2948, %v2947
    %v3796 = vpack.c.b16 %v2950, %v2949
    %v3797 = vpack.c.b16 %v2952, %v2951
    %v3798 = vpack.c.b16 %v2954, %v2953
    %v3799 = vpack.c.b16 %v2956, %v2955
    %v3800 = vpack.c.b16 %v2958, %v2957
    %v3801 = vpack.c.b16 %v2960, %v2959
    %v3802 = vpack.c.b16 %v2962, %v2961
    %v3803 = vpack.c.b16 %v2964, %v2963
    %v3804 = vpack.c.b16 %v2966, %v2965
    %v3805 = vpack.c.b16 %v2968, %v2967
    %v3806 = vpack.c.b16 %v2970, %v2969
    %v3807 = vpack.c.b16 %v2972, %v2971
    %v3808 = vpack.c.b16 %v2974, %v2973
    %v3809 = vpack.c.b16 %v2976, %v2975
    %v3810 = vpack.c.b16 %v2978, %v2977
    %v3811 = vpack.c.b16 %v2980, %v2979
    %v3812 = vpack.c.b16 %v2982, %v2981
    %v3813 = vpack.c.b16 %v2984, %v2983
    %v3814 = vpack.c.b16 %v2986, %v2985
    %v3815 = vpack.c.b16 %v2988, %v2987
    %v3816 = vpack.c.b16 %v2990, %v2989
    %v3817 = vpack.c.b16 %v2992, %v2991
    %v3818 = vpack.c.b16 %v2994, %v2993
    %v3819 = vpack.c.b16 %v2996, %v2995
    %v3820 = vpack.c.b16 %v2998, %v2997
    %v3821 = vpack.c.b16 %v3000, %v2999
    %v3822 = vpack.c.b16 %v3002, %v3001
    %v3823 = vpack.c.b16 %v3004, %v3003
    %v3824 = vpack.c.b16 %v3006, %v3005
    %v3825 = vpack.c.b16 %v3008, %v3007
    %v3826 = vpack.c.b16 %v3010, %v3009
    %v3827 = vpack.c.b16 %v3012, %v3011
    %v3828 = vpack.c.b16 %v3014, %v3013
    %v3829 = vpack.c.b16 %v3016, %v3015
    %v3830 = vpack.c.b16 %v3018, %v3017
    %v3831 = vpack.c.b16 %v3020, %v3019
    %v3832 = vpack.c.b16 %v3022, %v3021
    %v3833 = vpack.c.b16 %v3024, %v3023
    %v3834 = vpack.c.b16 %v3026, %v3025
    %v3835 = vpack.c.b16 %v3028, %v3027
    %v3836 = vpack.c.b16 %v3030, %v3029
    %v3837 = vpack.c.b16 %v3032, %v3031
    %v3838 = vpack.c.b16 %v3034, %v3033
    %v3839 = vpack.c.b16 %v3036, %v3035
    %v3840 = vpack.c.b16 %v3038, %v3037
    %v3841 = vpack.c.b16 %v3040, %v3039
    %v3842 = vpack.c.b16 %v3042, %v3041
    %v3843 = vpack.c.b16 %v3044, %v3043
    %v3844 = vpack.c.b16 %v3046, %v3045
    %v3845 = vpack.c.b16 %v3048, %v3047
    %v3846 = vpack.c.b16 %v3050, %v3049
    %v3847 = vpack.c.b16 %v3052, %v3051
    %v3848 = vpack.c.b16 %v3054, %v3053
    %v3849 = vpack.c.b16 %v3056, %v3055
    %v3850 = vpack.c.b16 %v3058, %v3057
    %v3851 = vpack.c.b16 %v3060, %v3059
    %v3852 = vpack.c.b16 %v3062, %v3061
    %v3853 = vpack.c.b16 %v3064, %v3063
    %v3854 = vpack.c.b16 %v3066, %v3065
    %v3855 = vpack.c.b16 %v3068, %v3067
    %v3856 = vpack.c.b16 %v3070, %v3069
    %v3857 = vpack.c.b16 %v3072, %v3071
    %v3858 = vpack.c.b16 %v3074, %v3073
    %v3859 = vpack.c.b16 %v3076, %v3075
    %v3860 = vpack.c.b16 %v3078, %v3077
    %v3861 = vpack.c.b16 %v3080, %v3079
    %v3862 = vpack.c.b16 %v3082, %v3081
    %v3863 = vpack.c.b16 %v3084, %v3083
    %v3864 = vpack.c.b16 %v3086, %v3085
    %v3865 = vpack.c.b16 %v3088, %v3087
    %v3866 = vpack.c.b16 %v3090, %v3089
    %v3867 = vpack.c.b16 %v3092, %v3091
    %v3868 = vpack.c.b16 %v3094, %v3093
    %v3869 = vpack.c.b16 %v3096, %v3095
    %v3870 = vpack.c.b16 %v3098, %v3097
    %v3871 = vpack.c.b16 %v3100, %v3099
    %v3872 = vpack.c.b16 %v3102, %v3101
    %v3873 = vpack.c.b16 %v3104, %v3103
    %v3874 = vpack.c.b16 %v3106, %v3105
    %v3875 = vpack.c.b16 %v3108, %v3107
    %v3876 = vpack.c.b16 %v3110, %v3109
    %v3877 = vpack.c.b16 %v3112, %v3111
    %v3878 = vpack.c.b16 %v3114, %v3113
    %v3879 = vpack.c.b16 %v3116, %v3115
    %v3880 = vpack.c.b16 %v3118, %v3117
    %v3881 = vpack.c.b16 %v3120, %v3119
    %v3882 = vpack.c.b16 %v3122, %v3121
    %v3883 = vpack.c.b16 %v3124, %v3123
    %v3884 = vpack.c.b16 %v3126, %v3125
    %v3885 = vpack.c.b16 %v3128, %v3127
    %v3886 = vpack.c.b16 %v3130, %v3129
    %v3887 = vpack.c.b16 %v3132, %v3131
    %v3888 = vpack.c.b16 %v3134, %v3133
    %v3889 = vpack.c.b16 %v3136, %v3135
    %v3890 = vpack.c.b16 %v3138, %v3137
    %v3891 = vpack.c.b16 %v3140, %v3139
    %v3892 = vpack.c.b16 %v3142, %v3141
    %v3893 = vpack.c.b16 %v3144, %v3143
    %v3894 = vpack.c.b16 %v3146, %v3145
    %v3895 = vpack.c.b16 %v3148, %v3147
    %v3896 = vpack.c.b16 %v3150, %v3149
    %v3897 = vpack.c.b16 %v3152, %v3151
    %v3898 = vpack.c.b16 %v3154, %v3153
    %v3899 = vpack.c.b16 %v3156, %v3155
    %v3900 = vpack.c.b16 %v3158, %v3157
    %v3901 = vpack.c.b16 %v3160, %v3159
    %v3902 = vpack.c.b16 %v3162, %v3161
    %v3903 = vpack.c.b16 %v3164, %v3163
    %v3904 = vpack.c.b16 %v3166, %v3165
    %v3905 = vpack.c.b16 %v3168, %v3167
    %v3906 = vpack.c.b16 %v3170, %v3169
    %v3907 = vpack.c.b16 %v3172, %v3171
    %v3908 = vpack.c.b16 %v3174, %v3173
    %v3909 = vpack.c.b16 %v3176, %v3175
    %v3910 = vpack.c.b16 %v3178, %v3177
    %v3911 = vpack.c.b16 %v3180, %v3179
    %v3912 = vpack.c.b16 %v3182, %v3181
    %v3913 = vpack.c.b16 %v3184, %v3183
    %v3914 = vpack.c.b16 %v3186, %v3185
    %v3915 = vpack.c.b16 %v3188, %v3187
    %v3916 = vpack.c.b16 %v3190, %v3189
    %v3917 = vpack.c.b16 %v3192, %v3191
    %v3918 = vpack.c.b16 %v3194, %v3193
    %v3919 = vpack.c.b16 %v3196, %v3195
    %v3920 = vpack.c.b16 %v3198, %v3197
    %v3921 = vpack.c.b16 %v3200, %v3199
    %v3922 = vpack.c.b16 %v3202, %v3201
    %v3923 = vpack.c.b16 %v3204, %v3203
    %v3924 = vpack.c.b16 %v3206, %v3205
    %v3925 = vpack.c.b16 %v3208, %v3207
    %v3926 = vpack.c.b16 %v3210, %v3209
    %v3927 = vpack.c.b16 %v3212, %v3211
    %v3928 = vpack.c.b16 %v3214, %v3213
    %v3929 = vpack.c.b16 %v3216, %v3215
    %v3930 = vpack.c.b16 %v3218, %v3217
    %v3931 = vpack.c.b16 %v3220, %v3219
    %v3932 = vpack.c.b16 %v3222, %v3221
    %v3933 = vpack.c.b16 %v3224, %v3223
    %v3934 = vpack.c.b16 %v3226, %v3225
    %v3935 = vpack.c.b16 %v3228, %v3227
    %v3936 = vpack.c.b16 %v3230, %v3229
    %v3937 = vpack.c.b16 %v3232, %v3231
    %v3938 = vpack.c.b16 %v3234, %v3233
    %v3939 = vpack.c.b16 %v3236, %v3235
    %v3940 = vpack.c.b16 %v3238, %v3237
    %v3941 = vpack.c.b16 %v3240, %v3239
    %v3942 = vpack.c.b16 %v3242, %v3241
    %v3943 = vpack.c.b16 %v3244, %v3243
    %v3944 = vpack.c.b16 %v3246, %v3245
    %v3945 = vpack.c.b16 %v3248, %v3247
    %v3946 = vpack.c.b16 %v3250, %v3249
    %v3947 = vpack.c.b16 %v3252, %v3251
    %v3948 = vpack.c.b16 %v3254, %v3253
    %v3949 = vpack.c.b16 %v3256, %v3255
    %v3950 = vpack.c.b16 %v3258, %v3257
    %v3951 = vpack.c.b16 %v3260, %v3259
    %v3952 = vpack.c.b16 %v3262, %v3261
    %v3953 = vpack.c.b16 %v3264, %v3263
    %v3954 = vpack.c.b16 %v3266, %v3265
    %v3955 = vpack.c.b16 %v3268, %v3267
    %v3956 = vpack.c.b16 %v3270, %v3269
    %v3957 = vpack.c.b16 %v3272, %v3271
    %v3958 = vpack.c.b16 %v3274, %v3273
    %v3959 = vpack.c.b16 %v3276, %v3275
    %v3960 = vpack.c.b16 %v3278, %v3277
    %v3961 = vpack.c.b16 %v3280, %v3279
    %v3962 = vpack.c.b16 %v3282, %v3281
    %v3963 = vpack.c.b16 %v3284, %v3283
    %v3964 = vpack.c.b16 %v3286, %v3285
    %v3965 = vpack.c.b16 %v3288, %v3287
    %v3966 = vpack.c.b16 %v3290, %v3289
    %v3967 = vpack.c.b16 %v3292, %v3291
    %v3968 = vpack.c.b16 %v3294, %v3293
    %v3969 = vpack.c.b16 %v3296, %v3295
    %v3970 = vpack.c.b16 %v3298, %v3297
    %v3971 = vpack.c.b16 %v3300, %v3299
    %v3972 = vpack.c.b16 %v3302, %v3301
    %v3973 = vpack.c.b16 %v3304, %v3303
    %v3974 = vpack.c.b16 %v3306, %v3305
    %v3975 = vpack.c.b16 %v3308, %v3307
    %v3976 = vpack.c.b16 %v3310, %v3309
    %v3977 = vpack.c.b16 %v3312, %v3311
    %v3978 = vpack.c.b16 %v3314, %v3313
    %v3979 = vpack.c.b16 %v3316, %v3315
    %v3980 = vpack.c.b16 %v3318, %v3317
    %v3981 = vpack.c.b16 %v3320, %v3319
    %v3982 = vpack.c.b16 %v3322, %v3321
    %v3983 = vpack.c.b16 %v3324, %v3323
    %v3984 = vpack.c.b16 %v3326, %v3325
    %v3985 = vpack.c.b16 %v3328, %v3327
    %v3986 = vpack.c.b16 %v3330, %v3329
    %v3987 = vpack.c.b16 %v3332, %v3331
    %v3988 = vpack.c.b16 %v3334, %v3333
    %v3989 = vpack.c.b16 %v3336, %v3335
    %v3990 = vpack.c.b16 %v3338, %v3337
    %v3991 = vpack.c.b16 %v3340, %v3339
    %v3992 = vpack.c.b16 %v3342, %v3341
    %v3993 = vpack.c.b16 %v3344, %v3343
    %v3994 = vpack.c.b16 %v3346, %v3345
    %v3995 = vpack.c.b16 %v3348, %v3347
    %v3996 = vpack.c.b16 %v3350, %v3349
    %v3997 = vpack.c.b16 %v3352, %v3351
    %v3998 = vpack.c.b16 %v3354, %v3353
    %v3999 = vpack.c.b16 %v3356, %v3355
    %v4000 = vpack.c.b16 %v3358, %v3357
    %v4001 = vpack.c.b16 %v3360, %v3359
    %v4002 = vpack.c.b16 %v3362, %v3361
    %v4003 = vpack.c.b16 %v3364, %v3363
    %v4004 = vpack.c.b16 %v3366, %v3365
    %v4005 = vpack.c.b16 %v3368, %v3367
    %v4006 = vpack.c.b16 %v3370, %v3369
    %v4007 = vpack.c.b16 %v3372, %v3371
    %v4008 = vpack.c.b16 %v3374, %v3373
    %v4009 = vpack.c.b16 %v3376, %v3375
    %v4010 = vpack.c.b16 %v3378, %v3377
    %v4011 = vpack.c.b16 %v3380, %v3379
    %v4012 = vpack.c.b16 %v3382, %v3381
    %v4013 = vpack.c.b16 %v3384, %v3383
    %v4014 = vpack.c.b16 %v3386, %v3385
    %v4015 = vpack.c.b16 %v3388, %v3387
    %v4016 = vpack.c.b16 %v3390, %v3389
    %v4017 = vpack.c.b16 %v3392, %v3391
    %v4018 = vpack.c.b16 %v3394, %v3393
    %v4019 = vpack.c.b16 %v3396, %v3395
    %v4020 = vpack.c.b16 %v3398, %v3397
    %v4021 = vpack.c.b16 %v3400, %v3399
    %v4022 = vpack.c.b16 %v3402, %v3401
    %v4023 = vpack.c.b16 %v3404, %v3403
    %v4024 = vpack.c.b16 %v3406, %v3405
    %v4025 = vpack.c.b16 %v3408, %v3407
    %v4026 = vpack.c.b16 %v3410, %v3409
    %v4027 = vpack.c.b16 %v3412, %v3411
    %v4028 = vpack.c.b16 %v3414, %v3413
    %v4029 = vpack.c.b16 %v3416, %v3415
    %v4030 = vpack.c.b16 %v3418, %v3417
    %v4031 = vpack.c.b16 %v3420, %v3419
    %v4032 = vpack.c.b16 %v3422, %v3421
    %v4033 = vpack.c.b16 %v3424, %v3423
    %v4034 = vpack.c.b16 %v3426, %v3425
    %v4035 = vpack.c.b16 %v3428, %v3427
    %v4036 = vpack.c.b16 %v3430, %v3429
    %v4037 = vpack.c.b16 %v3432, %v3431
    %v4038 = vpack.c.b16 %v3434, %v3433
    %v4039 = vpack.c.b16 %v3436, %v3435
    %v4040 = vpack.c.b16 %v3438, %v3437
    %v4041 = vpack.c.b16 %v3440, %v3439
    %v4042 = vpack.c.b16 %v3442, %v3441
    %v4043 = vpack.c.b16 %v3444, %v3443
    %v4044 = vpack.c.b16 %v3446, %v3445
    %v4045 = vpack.c.b16 %v3448, %v3447
    %v4046 = vpack.c.b16 %v3450, %v3449
    %v4047 = vpack.c.b16 %v3452, %v3451
    %v4048 = vpack.c.b16 %v3454, %v3453
    %v4049 = vpack.c.b16 %v3456, %v3455
    %v4050 = vpack.c.b16 %v3458, %v3457
    %v4051 = vpack.c.b16 %v3460, %v3459
    %v4052 = vpack.c.b16 %v3462, %v3461
    %v4053 = vpack.c.b16 %v3464, %v3463
    %v4054 = vpack.c.b16 %v3466, %v3465
    %v4055 = vpack.c.b16 %v3468, %v3467
    %v4056 = vpack.c.b16 %v3470, %v3469
    %v4057 = vpack.c.b16 %v3472, %v3471
    %v4058 = vpack.c.b16 %v3474, %v3473
    %v4059 = vpack.c.b16 %v3476, %v3475
    %v4060 = vpack.c.b16 %v3478, %v3477
    %v4061 = vpack.c.b16 %v3480, %v3479
    %v4062 = vpack.c.b16 %v3482, %v3481
    %v4063 = vpack.c.b16 %v3484, %v3483
    %v4064 = vpack.c.b16 %v3486, %v3485
    %v4065 = vpack.c.b16 %v3488, %v3487
    %v4066 = vpack.c.b16 %v3490, %v3489
    %v4067 = vpack.c.b16 %v3492, %v3491
    %v4068 = vpack.c.b16 %v3494, %v3493
    %v4069 = vpack.c.b16 %v3496, %v3495
    %v4070 = vpack.c.b16 %v3498, %v3497
    %v4071 = vpack.c.b16 %v3500, %v3499
    %v4072 = vpack.c.b16 %v3502, %v3501
    %v4073 = vpack.c.b16 %v3504, %v3503
    %v4074 = vpack.c.b16 %v3506, %v3505
    %v4075 = vpack.c.b16 %v3508, %v3507
    %v4076 = vpack.c.b16 %v3510, %v3509
    %v4077 = vpack.c.b16 %v3512, %v3511
    %v4078 = vpack.c.b16 %v3514, %v3513
    %v4079 = vpack.c.b16 %v3516, %v3515
    %v4080 = vpack.c.b16 %v3518, %v3517
    %v4081 = vpack.c.b16 %v3520, %v3519
    %v4082 = vpack.c.b16 %v3522, %v3521
    %v4083 = vpack.c.b16 %v3524, %v3523
    %v4084 = vpack.c.b16 %v3526, %v3525
    %v4085 = vpack.c.b16 %v3528, %v3527
    %v4086 = vpack.c.b16 %v3530, %v3529
    %v4087 = vpack.c.b16 %v3532, %v3531
    %v4088 = vpack.c.b16 %v3534, %v3533
    %v4089 = vpack.c.b16 %v3536, %v3535
    %v4090 = vpack.c.b16 %v3538, %v3537
    %v4091 = vpack.c.b16 %v3540, %v3539
    %v4092 = vpack.c.b16 %v3542, %v3541
    %v4093 = vpack.c.b16 %v3544, %v3543
    %v4094 = vpack.c.b16 %v3546, %v3545
    %v4095 = vpack.c.b16 %v3548, %v3547
    %v4096 = vpack.c.b16 %v3550, %v3549
    %v4097 = vpack.c.b16 %v3552, %v3551
    %v4098 = vpack.c.b16 %v3554, %v3553
    %v4099 = vpack.c.b16 %v3556, %v3555
    %v4100 = vpack.c.b16 %v3558, %v3557
    %v4101 = vpack.c.b16 %v3560, %v3559
    %v4102 = vpack.c.b16 %v3562, %v3561
    %v4103 = vpack.c.b16 %v3564, %v3563
    %v4104 = vpack.c.b16 %v3566, %v3565
    %v4105 = vpack.c.b16 %v3568, %v3567
    %v4106 = vpack.c.b16 %v3570, %v3569
    %v4107 = vpack.c.b16 %v3572, %v3571
    %v4108 = vpack.c.b16 %v3574, %v3573
    %v4109 = vpack.c.b16 %v3576, %v3575
    %v4110 = vpack.c.b16 %v3578, %v3577
    %v4111 = vpack.c.b16 %v3580, %v3579
    %v4112 = vpack.c.b16 %v3582, %v3581
    %v4113 = vpack.c.b16 %v3584, %v3583
    %v4114 = vpack.c.b16 %v3586, %v3585
    %v4115 = vpack.c.b16 %v3588, %v3587
    %v4116 = vpack.c.b16 %v3590, %v3589
    %v4117 = vpack.c.b16 %v3592, %v3591
    %v4118 = vpack.c.b16 %v3594, %v3593
    %v4119 = vpack.c.b16 %v3596, %v3595
    %v4120 = vpack.c.b16 %v3598, %v3597
    %v4121 = vpack.c.b16 %v3600, %v3599
    %v4122 = vpack.c.b16 %v3602, %v3601
    %v4123 = vpack.c.b16 %v3604, %v3603
    %v4124 = vpack.c.b16 %v3606, %v3605
    %v4125 = vpack.c.b16 %v3608, %v3607
    %v4126 = vpack.c.b16 %v3610, %v3609
    %v4127 = vpack.c.b16 %v3612, %v3611
    %v4128 = vpack.c.b16 %v3614, %v3613
    %v4129 = vpack.c.b16 %v3616, %v3615
    %v4130 = vpack.c.b16 %v3618, %v3617
    %4643 = vmatprep.subr.bf16.mxu0 0
    %4644 = vmatpush1.bf16.msra.mxu0 %v3626
    %4645 = vmatprep.subr.bf16.mxu0 0
    %4646 = vmatpush1.bf16.msra.mxu0 %v3625
    %4647 = vmatprep.subr.bf16.mxu0 0
    %4648 = vmatpush1.bf16.msra.mxu0 %v3624
    %4649 = vmatprep.subr.bf16.mxu0 0
    %4650 = vmatpush1.bf16.msra.mxu0 %v3623
    %4651 = vmatprep.subr.bf16.mxu0 0
    %4652 = vmatpush1.bf16.msra.mxu0 %v3622
    %4653 = vmatprep.subr.bf16.mxu0 0
    %4654 = vmatpush1.bf16.msra.mxu0 %v3621
    %4655 = vmatprep.subr.bf16.mxu0 0
    %4656 = vmatpush1.bf16.msra.mxu0 %v3620
    %4657 = vmatprep.subr.bf16.mxu0 0
    %4658 = vmatpush1.bf16.msra.mxu0 %v3619
    %4659 = vmatprep.subr.bf16.mxu0 0
    %4660 = vmatpush2.bf16.msra.mxu0 %v3634
    %4661 = vmatprep.subr.bf16.mxu0 0
    %4662 = vmatpush2.bf16.msra.mxu0 %v3633
    %4663 = vmatprep.subr.bf16.mxu0 0
    %4664 = vmatpush2.bf16.msra.mxu0 %v3632
    %4665 = vmatprep.subr.bf16.mxu0 0
    %4666 = vmatpush2.bf16.msra.mxu0 %v3631
    %4667 = vmatprep.subr.bf16.mxu0 0
    %4668 = vmatpush2.bf16.msra.mxu0 %v3630
    %4669 = vmatprep.subr.bf16.mxu0 0
    %4670 = vmatpush2.bf16.msra.mxu0 %v3629
    %4671 = vmatprep.subr.bf16.mxu0 0
    %4672 = vmatpush2.bf16.msra.mxu0 %v3628
    %4673 = vmatprep.subr.bf16.mxu0 0
    %4674 = vmatpush2.bf16.msra.mxu0 %v3627
    %4675 = vmatprep.mubr.bf16.mxu0 %v1152
    %4676 = vmatmul.mubr.bf16.gmra.mxu0 %v1138
    %v4677 = vpop.f32.mrf.mxu0
    %v4678 = vadd.f32 %v1105, %v4677
    %v4679 = vpop.f32.mrf.mxu0
    %v4680 = vpop.f32.mrf.mxu0
    %v4681 = vpop.f32.mrf.mxu0
    %4682 = vdwg.mxu0
    %4683 = vmatprep.subr.bf16.mxu0 0
    %4684 = vmatpush1.bf16.msra.mxu0 %v3642
    %4685 = vmatprep.subr.bf16.mxu0 0
    %4686 = vmatpush1.bf16.msra.mxu0 %v3641
    %4687 = vmatprep.subr.bf16.mxu0 0
    %4688 = vmatpush1.bf16.msra.mxu0 %v3640
    %4689 = vmatprep.subr.bf16.mxu0 0
    %4690 = vmatpush1.bf16.msra.mxu0 %v3639
    %4691 = vmatprep.subr.bf16.mxu0 0
    %4692 = vmatpush1.bf16.msra.mxu0 %v3638
    %4693 = vmatprep.subr.bf16.mxu0 0
    %4694 = vmatpush1.bf16.msra.mxu0 %v3637
    %4695 = vmatprep.subr.bf16.mxu0 0
    %4696 = vmatpush1.bf16.msra.mxu0 %v3636
    %4697 = vmatprep.subr.bf16.mxu0 0
    %4698 = vmatpush1.bf16.msra.mxu0 %v3635
    %4699 = vmatprep.subr.bf16.mxu0 0
    %4700 = vmatpush2.bf16.msra.mxu0 %v3650
    %4701 = vmatprep.subr.bf16.mxu0 0
    %4702 = vmatpush2.bf16.msra.mxu0 %v3649
    %4703 = vmatprep.subr.bf16.mxu0 0
    %4704 = vmatpush2.bf16.msra.mxu0 %v3648
    %4705 = vmatprep.subr.bf16.mxu0 0
    %4706 = vmatpush2.bf16.msra.mxu0 %v3647
    %4707 = vmatprep.subr.bf16.mxu0 0
    %4708 = vmatpush2.bf16.msra.mxu0 %v3646
    %4709 = vmatprep.subr.bf16.mxu0 0
    %4710 = vmatpush2.bf16.msra.mxu0 %v3645
    %4711 = vmatprep.subr.bf16.mxu0 0
    %4712 = vmatpush2.bf16.msra.mxu0 %v3644
    %4713 = vmatprep.subr.bf16.mxu0 0
    %4714 = vmatpush2.bf16.msra.mxu0 %v3643
    %4715 = vmatprep.mubr.bf16.mxu0 %v1162
    %4716 = vmatmul.mubr.bf16.gmra.mxu0 %v1160
    %v4717 = vpop.f32.mrf.mxu0
    %v4718 = vadd.f32 %v4678, %v4717
    %v4719 = vpop.f32.mrf.mxu0
    %v4720 = vpop.f32.mrf.mxu0
    %v4721 = vpop.f32.mrf.mxu0
    %4722 = vdwg.mxu0
    %4723 = vmatprep.subr.bf16.mxu0 0
    %4724 = vmatpush1.bf16.msra.mxu0 %v3658
    %4725 = vmatprep.subr.bf16.mxu0 0
    %4726 = vmatpush1.bf16.msra.mxu0 %v3657
    %4727 = vmatprep.subr.bf16.mxu0 0
    %4728 = vmatpush1.bf16.msra.mxu0 %v3656
    %4729 = vmatprep.subr.bf16.mxu0 0
    %4730 = vmatpush1.bf16.msra.mxu0 %v3655
    %4731 = vmatprep.subr.bf16.mxu0 0
    %4732 = vmatpush1.bf16.msra.mxu0 %v3654
    %4733 = vmatprep.subr.bf16.mxu0 0
    %4734 = vmatpush1.bf16.msra.mxu0 %v3653
    %4735 = vmatprep.subr.bf16.mxu0 0
    %4736 = vmatpush1.bf16.msra.mxu0 %v3652
    %4737 = vmatprep.subr.bf16.mxu0 0
    %4738 = vmatpush1.bf16.msra.mxu0 %v3651
    %4739 = vmatprep.subr.bf16.mxu0 0
    %4740 = vmatpush2.bf16.msra.mxu0 %v3666
    %4741 = vmatprep.subr.bf16.mxu0 0
    %4742 = vmatpush2.bf16.msra.mxu0 %v3665
    %4743 = vmatprep.subr.bf16.mxu0 0
    %4744 = vmatpush2.bf16.msra.mxu0 %v3664
    %4745 = vmatprep.subr.bf16.mxu0 0
    %4746 = vmatpush2.bf16.msra.mxu0 %v3663
    %4747 = vmatprep.subr.bf16.mxu0 0
    %4748 = vmatpush2.bf16.msra.mxu0 %v3662
    %4749 = vmatprep.subr.bf16.mxu0 0
    %4750 = vmatpush2.bf16.msra.mxu0 %v3661
    %4751 = vmatprep.subr.bf16.mxu0 0
    %4752 = vmatpush2.bf16.msra.mxu0 %v3660
    %4753 = vmatprep.subr.bf16.mxu0 0
    %4754 = vmatpush2.bf16.msra.mxu0 %v3659
    %4755 = vmatprep.mubr.bf16.mxu0 %v1159
    %4756 = vmatmul.mubr.bf16.gmra.mxu0 %v1145
    %v4757 = vpop.f32.mrf.mxu0
    %v4758 = vadd.f32 %v4718, %v4757
    %v4759 = vpop.f32.mrf.mxu0
    %v4760 = vpop.f32.mrf.mxu0
    %v4761 = vpop.f32.mrf.mxu0
    %4762 = vdwg.mxu0
    %4763 = vmatprep.subr.bf16.mxu0 0
    %4764 = vmatpush1.bf16.msra.mxu0 %v3674
    %4765 = vmatprep.subr.bf16.mxu0 0
    %4766 = vmatpush1.bf16.msra.mxu0 %v3673
    %4767 = vmatprep.subr.bf16.mxu0 0
    %4768 = vmatpush1.bf16.msra.mxu0 %v3672
    %4769 = vmatprep.subr.bf16.mxu0 0
    %4770 = vmatpush1.bf16.msra.mxu0 %v3671
    %4771 = vmatprep.subr.bf16.mxu0 0
    %4772 = vmatpush1.bf16.msra.mxu0 %v3670
    %4773 = vmatprep.subr.bf16.mxu0 0
    %4774 = vmatpush1.bf16.msra.mxu0 %v3669
    %4775 = vmatprep.subr.bf16.mxu0 0
    %4776 = vmatpush1.bf16.msra.mxu0 %v3668
    %4777 = vmatprep.subr.bf16.mxu0 0
    %4778 = vmatpush1.bf16.msra.mxu0 %v3667
    %4779 = vmatprep.subr.bf16.mxu0 0
    %4780 = vmatpush2.bf16.msra.mxu0 %v3682
    %4781 = vmatprep.subr.bf16.mxu0 0
    %4782 = vmatpush2.bf16.msra.mxu0 %v3681
    %4783 = vmatprep.subr.bf16.mxu0 0
    %4784 = vmatpush2.bf16.msra.mxu0 %v3680
    %4785 = vmatprep.subr.bf16.mxu0 0
    %4786 = vmatpush2.bf16.msra.mxu0 %v3679
    %4787 = vmatprep.subr.bf16.mxu0 0
    %4788 = vmatpush2.bf16.msra.mxu0 %v3678
    %4789 = vmatprep.subr.bf16.mxu0 0
    %4790 = vmatpush2.bf16.msra.mxu0 %v3677
    %4791 = vmatprep.subr.bf16.mxu0 0
    %4792 = vmatpush2.bf16.msra.mxu0 %v3676
    %4793 = vmatprep.subr.bf16.mxu0 0
    %4794 = vmatpush2.bf16.msra.mxu0 %v3675
    %4795 = vmatprep.mubr.bf16.mxu0 %v1163
    %4796 = vmatmul.mubr.bf16.gmra.mxu0 %v1161
    %v4797 = vpop.f32.mrf.mxu0
    %v4798 = vadd.f32 %v4758, %v4797
    %v4799 = vpop.f32.mrf.mxu0
    %v4800 = vpop.f32.mrf.mxu0
    %v4801 = vpop.f32.mrf.mxu0
    %4802 = vdwg.mxu0
    %4803 = vmatprep.subr.bf16.mxu0 0
    %4804 = vmatpush1.bf16.msra.mxu0 %v3690
    %4805 = vmatprep.subr.bf16.mxu0 0
    %4806 = vmatpush1.bf16.msra.mxu0 %v3689
    %4807 = vmatprep.subr.bf16.mxu0 0
    %4808 = vmatpush1.bf16.msra.mxu0 %v3688
    %4809 = vmatprep.subr.bf16.mxu0 0
    %4810 = vmatpush1.bf16.msra.mxu0 %v3687
    %4811 = vmatprep.subr.bf16.mxu0 0
    %4812 = vmatpush1.bf16.msra.mxu0 %v3686
    %4813 = vmatprep.subr.bf16.mxu0 0
    %4814 = vmatpush1.bf16.msra.mxu0 %v3685
    %4815 = vmatprep.subr.bf16.mxu0 0
    %4816 = vmatpush1.bf16.msra.mxu0 %v3684
    %4817 = vmatprep.subr.bf16.mxu0 0
    %4818 = vmatpush1.bf16.msra.mxu0 %v3683
    %4819 = vmatprep.subr.bf16.mxu0 0
    %4820 = vmatpush2.bf16.msra.mxu0 %v3698
    %4821 = vmatprep.subr.bf16.mxu0 0
    %4822 = vmatpush2.bf16.msra.mxu0 %v3697
    %4823 = vmatprep.subr.bf16.mxu0 0
    %4824 = vmatpush2.bf16.msra.mxu0 %v3696
    %4825 = vmatprep.subr.bf16.mxu0 0
    %4826 = vmatpush2.bf16.msra.mxu0 %v3695
    %4827 = vmatprep.subr.bf16.mxu0 0
    %4828 = vmatpush2.bf16.msra.mxu0 %v3694
    %4829 = vmatprep.subr.bf16.mxu0 0
    %4830 = vmatpush2.bf16.msra.mxu0 %v3693
    %4831 = vmatprep.subr.bf16.mxu0 0
    %4832 = vmatpush2.bf16.msra.mxu0 %v3692
    %4833 = vmatprep.subr.bf16.mxu0 0
    %4834 = vmatpush2.bf16.msra.mxu0 %v3691
    %4835 = vmatprep.mubr.bf16.mxu0 %v1201
    %4836 = vmatmul.mubr.bf16.gmra.mxu0 %v1187
    %v4837 = vpop.f32.mrf.mxu0
    %v4838 = vadd.f32 %v4798, %v4837
    %v4839 = vpop.f32.mrf.mxu0
    %v4840 = vpop.f32.mrf.mxu0
    %v4841 = vpop.f32.mrf.mxu0
    %4842 = vdwg.mxu0
    %4843 = vmatprep.subr.bf16.mxu0 0
    %4844 = vmatpush1.bf16.msra.mxu0 %v3706
    %4845 = vmatprep.subr.bf16.mxu0 0
    %4846 = vmatpush1.bf16.msra.mxu0 %v3705
    %4847 = vmatprep.subr.bf16.mxu0 0
    %4848 = vmatpush1.bf16.msra.mxu0 %v3704
    %4849 = vmatprep.subr.bf16.mxu0 0
    %4850 = vmatpush1.bf16.msra.mxu0 %v3703
    %4851 = vmatprep.subr.bf16.mxu0 0
    %4852 = vmatpush1.bf16.msra.mxu0 %v3702
    %4853 = vmatprep.subr.bf16.mxu0 0
    %4854 = vmatpush1.bf16.msra.mxu0 %v3701
    %4855 = vmatprep.subr.bf16.mxu0 0
    %4856 = vmatpush1.bf16.msra.mxu0 %v3700
    %4857 = vmatprep.subr.bf16.mxu0 0
    %4858 = vmatpush1.bf16.msra.mxu0 %v3699
    %4859 = vmatprep.subr.bf16.mxu0 0
    %4860 = vmatpush2.bf16.msra.mxu0 %v3714
    %4861 = vmatprep.subr.bf16.mxu0 0
    %4862 = vmatpush2.bf16.msra.mxu0 %v3713
    %4863 = vmatprep.subr.bf16.mxu0 0
    %4864 = vmatpush2.bf16.msra.mxu0 %v3712
    %4865 = vmatprep.subr.bf16.mxu0 0
    %4866 = vmatpush2.bf16.msra.mxu0 %v3711
    %4867 = vmatprep.subr.bf16.mxu0 0
    %4868 = vmatpush2.bf16.msra.mxu0 %v3710
    %4869 = vmatprep.subr.bf16.mxu0 0
    %4870 = vmatpush2.bf16.msra.mxu0 %v3709
    %4871 = vmatprep.subr.bf16.mxu0 0
    %4872 = vmatpush2.bf16.msra.mxu0 %v3708
    %4873 = vmatprep.subr.bf16.mxu0 0
    %4874 = vmatpush2.bf16.msra.mxu0 %v3707
    %4875 = vmatprep.mubr.bf16.mxu0 %v1211
    %4876 = vmatmul.mubr.bf16.gmra.mxu0 %v1209
    %v4877 = vpop.f32.mrf.mxu0
    %v4878 = vadd.f32 %v4838, %v4877
    %v4879 = vpop.f32.mrf.mxu0
    %v4880 = vpop.f32.mrf.mxu0
    %v4881 = vpop.f32.mrf.mxu0
    %4882 = vdwg.mxu0
    %4883 = vmatprep.subr.bf16.mxu0 0
    %4884 = vmatpush1.bf16.msra.mxu0 %v3722
    %4885 = vmatprep.subr.bf16.mxu0 0
    %4886 = vmatpush1.bf16.msra.mxu0 %v3721
    %4887 = vmatprep.subr.bf16.mxu0 0
    %4888 = vmatpush1.bf16.msra.mxu0 %v3720
    %4889 = vmatprep.subr.bf16.mxu0 0
    %4890 = vmatpush1.bf16.msra.mxu0 %v3719
    %4891 = vmatprep.subr.bf16.mxu0 0
    %4892 = vmatpush1.bf16.msra.mxu0 %v3718
    %4893 = vmatprep.subr.bf16.mxu0 0
    %4894 = vmatpush1.bf16.msra.mxu0 %v3717
    %4895 = vmatprep.subr.bf16.mxu0 0
    %4896 = vmatpush1.bf16.msra.mxu0 %v3716
    %4897 = vmatprep.subr.bf16.mxu0 0
    %4898 = vmatpush1.bf16.msra.mxu0 %v3715
    %4899 = vmatprep.subr.bf16.mxu0 0
    %4900 = vmatpush2.bf16.msra.mxu0 %v3730
    %4901 = vmatprep.subr.bf16.mxu0 0
    %4902 = vmatpush2.bf16.msra.mxu0 %v3729
    %4903 = vmatprep.subr.bf16.mxu0 0
    %4904 = vmatpush2.bf16.msra.mxu0 %v3728
    %4905 = vmatprep.subr.bf16.mxu0 0
    %4906 = vmatpush2.bf16.msra.mxu0 %v3727
    %4907 = vmatprep.subr.bf16.mxu0 0
    %4908 = vmatpush2.bf16.msra.mxu0 %v3726
    %4909 = vmatprep.subr.bf16.mxu0 0
    %4910 = vmatpush2.bf16.msra.mxu0 %v3725
    %4911 = vmatprep.subr.bf16.mxu0 0
    %4912 = vmatpush2.bf16.msra.mxu0 %v3724
    %4913 = vmatprep.subr.bf16.mxu0 0
    %4914 = vmatpush2.bf16.msra.mxu0 %v3723
    %4915 = vmatprep.mubr.bf16.mxu0 %v1208
    %4916 = vmatmul.mubr.bf16.gmra.mxu0 %v1194
    %v4917 = vpop.f32.mrf.mxu0
    %v4918 = vadd.f32 %v4878, %v4917
    %v4919 = vpop.f32.mrf.mxu0
    %v4920 = vpop.f32.mrf.mxu0
    %v4921 = vpop.f32.mrf.mxu0
    %4922 = vdwg.mxu0
    %4923 = vmatprep.subr.bf16.mxu0 0
    %4924 = vmatpush1.bf16.msra.mxu0 %v3738
    %4925 = vmatprep.subr.bf16.mxu0 0
    %4926 = vmatpush1.bf16.msra.mxu0 %v3737
    %4927 = vmatprep.subr.bf16.mxu0 0
    %4928 = vmatpush1.bf16.msra.mxu0 %v3736
    %4929 = vmatprep.subr.bf16.mxu0 0
    %4930 = vmatpush1.bf16.msra.mxu0 %v3735
    %4931 = vmatprep.subr.bf16.mxu0 0
    %4932 = vmatpush1.bf16.msra.mxu0 %v3734
    %4933 = vmatprep.subr.bf16.mxu0 0
    %4934 = vmatpush1.bf16.msra.mxu0 %v3733
    %4935 = vmatprep.subr.bf16.mxu0 0
    %4936 = vmatpush1.bf16.msra.mxu0 %v3732
    %4937 = vmatprep.subr.bf16.mxu0 0
    %4938 = vmatpush1.bf16.msra.mxu0 %v3731
    %4939 = vmatprep.subr.bf16.mxu0 0
    %4940 = vmatpush2.bf16.msra.mxu0 %v3746
    %4941 = vmatprep.subr.bf16.mxu0 0
    %4942 = vmatpush2.bf16.msra.mxu0 %v3745
    %4943 = vmatprep.subr.bf16.mxu0 0
    %4944 = vmatpush2.bf16.msra.mxu0 %v3744
    %4945 = vmatprep.subr.bf16.mxu0 0
    %4946 = vmatpush2.bf16.msra.mxu0 %v3743
    %4947 = vmatprep.subr.bf16.mxu0 0
    %4948 = vmatpush2.bf16.msra.mxu0 %v3742
    %4949 = vmatprep.subr.bf16.mxu0 0
    %4950 = vmatpush2.bf16.msra.mxu0 %v3741
    %4951 = vmatprep.subr.bf16.mxu0 0
    %4952 = vmatpush2.bf16.msra.mxu0 %v3740
    %4953 = vmatprep.subr.bf16.mxu0 0
    %4954 = vmatpush2.bf16.msra.mxu0 %v3739
    %4955 = vmatprep.mubr.bf16.mxu0 %v1212
    %4956 = vmatmul.mubr.bf16.gmra.mxu0 %v1210
    %v4957 = vpop.f32.mrf.mxu0
    %v4958 = vadd.f32 %v4918, %v4957
    %v4959 = vpop.f32.mrf.mxu0
    %v4960 = vpop.f32.mrf.mxu0
    %v4961 = vpop.f32.mrf.mxu0
    %4962 = vdwg.mxu0
    %4963 = vmatprep.subr.bf16.mxu0 0
    %4964 = vmatpush1.bf16.msra.mxu0 %v3754
    %4965 = vmatprep.subr.bf16.mxu0 0
    %4966 = vmatpush1.bf16.msra.mxu0 %v3753
    %4967 = vmatprep.subr.bf16.mxu0 0
    %4968 = vmatpush1.bf16.msra.mxu0 %v3752
    %4969 = vmatprep.subr.bf16.mxu0 0
    %4970 = vmatpush1.bf16.msra.mxu0 %v3751
    %4971 = vmatprep.subr.bf16.mxu0 0
    %4972 = vmatpush1.bf16.msra.mxu0 %v3750
    %4973 = vmatprep.subr.bf16.mxu0 0
    %4974 = vmatpush1.bf16.msra.mxu0 %v3749
    %4975 = vmatprep.subr.bf16.mxu0 0
    %4976 = vmatpush1.bf16.msra.mxu0 %v3748
    %4977 = vmatprep.subr.bf16.mxu0 0
    %4978 = vmatpush1.bf16.msra.mxu0 %v3747
    %4979 = vmatprep.subr.bf16.mxu0 0
    %4980 = vmatpush2.bf16.msra.mxu0 %v3762
    %4981 = vmatprep.subr.bf16.mxu0 0
    %4982 = vmatpush2.bf16.msra.mxu0 %v3761
    %4983 = vmatprep.subr.bf16.mxu0 0
    %4984 = vmatpush2.bf16.msra.mxu0 %v3760
    %4985 = vmatprep.subr.bf16.mxu0 0
    %4986 = vmatpush2.bf16.msra.mxu0 %v3759
    %4987 = vmatprep.subr.bf16.mxu0 0
    %4988 = vmatpush2.bf16.msra.mxu0 %v3758
    %4989 = vmatprep.subr.bf16.mxu0 0
    %4990 = vmatpush2.bf16.msra.mxu0 %v3757
    %4991 = vmatprep.subr.bf16.mxu0 0
    %4992 = vmatpush2.bf16.msra.mxu0 %v3756
    %4993 = vmatprep.subr.bf16.mxu0 0
    %4994 = vmatpush2.bf16.msra.mxu0 %v3755
    %4995 = vmatprep.mubr.bf16.mxu0 %v1250
    %4996 = vmatmul.mubr.bf16.gmra.mxu0 %v1236
    %v4997 = vpop.f32.mrf.mxu0
    %v4998 = vadd.f32 %v4958, %v4997
    %v4999 = vpop.f32.mrf.mxu0
    %v5000 = vpop.f32.mrf.mxu0
    %v5001 = vpop.f32.mrf.mxu0
    %5002 = vdwg.mxu0
    %5003 = vmatprep.subr.bf16.mxu0 0
    %5004 = vmatpush1.bf16.msra.mxu0 %v3770
    %5005 = vmatprep.subr.bf16.mxu0 0
    %5006 = vmatpush1.bf16.msra.mxu0 %v3769
    %5007 = vmatprep.subr.bf16.mxu0 0
    %5008 = vmatpush1.bf16.msra.mxu0 %v3768
    %5009 = vmatprep.subr.bf16.mxu0 0
    %5010 = vmatpush1.bf16.msra.mxu0 %v3767
    %5011 = vmatprep.subr.bf16.mxu0 0
    %5012 = vmatpush1.bf16.msra.mxu0 %v3766
    %5013 = vmatprep.subr.bf16.mxu0 0
    %5014 = vmatpush1.bf16.msra.mxu0 %v3765
    %5015 = vmatprep.subr.bf16.mxu0 0
    %5016 = vmatpush1.bf16.msra.mxu0 %v3764
    %5017 = vmatprep.subr.bf16.mxu0 0
    %5018 = vmatpush1.bf16.msra.mxu0 %v3763
    %5019 = vmatprep.subr.bf16.mxu0 0
    %5020 = vmatpush2.bf16.msra.mxu0 %v3778
    %5021 = vmatprep.subr.bf16.mxu0 0
    %5022 = vmatpush2.bf16.msra.mxu0 %v3777
    %5023 = vmatprep.subr.bf16.mxu0 0
    %5024 = vmatpush2.bf16.msra.mxu0 %v3776
    %5025 = vmatprep.subr.bf16.mxu0 0
    %5026 = vmatpush2.bf16.msra.mxu0 %v3775
    %5027 = vmatprep.subr.bf16.mxu0 0
    %5028 = vmatpush2.bf16.msra.mxu0 %v3774
    %5029 = vmatprep.subr.bf16.mxu0 0
    %5030 = vmatpush2.bf16.msra.mxu0 %v3773
    %5031 = vmatprep.subr.bf16.mxu0 0
    %5032 = vmatpush2.bf16.msra.mxu0 %v3772
    %5033 = vmatprep.subr.bf16.mxu0 0
    %5034 = vmatpush2.bf16.msra.mxu0 %v3771
    %5035 = vmatprep.mubr.bf16.mxu0 %v1260
    %5036 = vmatmul.mubr.bf16.gmra.mxu0 %v1258
    %v5037 = vpop.f32.mrf.mxu0
    %v5038 = vadd.f32 %v4998, %v5037
    %v5039 = vpop.f32.mrf.mxu0
    %v5040 = vpop.f32.mrf.mxu0
    %v5041 = vpop.f32.mrf.mxu0
    %5042 = vdwg.mxu0
    %5043 = vmatprep.subr.bf16.mxu0 0
    %5044 = vmatpush1.bf16.msra.mxu0 %v3786
    %5045 = vmatprep.subr.bf16.mxu0 0
    %5046 = vmatpush1.bf16.msra.mxu0 %v3785
    %5047 = vmatprep.subr.bf16.mxu0 0
    %5048 = vmatpush1.bf16.msra.mxu0 %v3784
    %5049 = vmatprep.subr.bf16.mxu0 0
    %5050 = vmatpush1.bf16.msra.mxu0 %v3783
    %5051 = vmatprep.subr.bf16.mxu0 0
    %5052 = vmatpush1.bf16.msra.mxu0 %v3782
    %5053 = vmatprep.subr.bf16.mxu0 0
    %5054 = vmatpush1.bf16.msra.mxu0 %v3781
    %5055 = vmatprep.subr.bf16.mxu0 0
    %5056 = vmatpush1.bf16.msra.mxu0 %v3780
    %5057 = vmatprep.subr.bf16.mxu0 0
    %5058 = vmatpush1.bf16.msra.mxu0 %v3779
    %5059 = vmatprep.subr.bf16.mxu0 0
    %5060 = vmatpush2.bf16.msra.mxu0 %v3794
    %5061 = vmatprep.subr.bf16.mxu0 0
    %5062 = vmatpush2.bf16.msra.mxu0 %v3793
    %5063 = vmatprep.subr.bf16.mxu0 0
    %5064 = vmatpush2.bf16.msra.mxu0 %v3792
    %5065 = vmatprep.subr.bf16.mxu0 0
    %5066 = vmatpush2.bf16.msra.mxu0 %v3791
    %5067 = vmatprep.subr.bf16.mxu0 0
    %5068 = vmatpush2.bf16.msra.mxu0 %v3790
    %5069 = vmatprep.subr.bf16.mxu0 0
    %5070 = vmatpush2.bf16.msra.mxu0 %v3789
    %5071 = vmatprep.subr.bf16.mxu0 0
    %5072 = vmatpush2.bf16.msra.mxu0 %v3788
    %5073 = vmatprep.subr.bf16.mxu0 0
    %5074 = vmatpush2.bf16.msra.mxu0 %v3787
    %5075 = vmatprep.mubr.bf16.mxu0 %v1257
    %5076 = vmatmul.mubr.bf16.gmra.mxu0 %v1243
    %v5077 = vpop.f32.mrf.mxu0
    %v5078 = vadd.f32 %v5038, %v5077
    %v5079 = vpop.f32.mrf.mxu0
    %v5080 = vpop.f32.mrf.mxu0
    %v5081 = vpop.f32.mrf.mxu0
    %5082 = vdwg.mxu0
    %5083 = vmatprep.subr.bf16.mxu0 0
    %5084 = vmatpush1.bf16.msra.mxu0 %v3802
    %5085 = vmatprep.subr.bf16.mxu0 0
    %5086 = vmatpush1.bf16.msra.mxu0 %v3801
    %5087 = vmatprep.subr.bf16.mxu0 0
    %5088 = vmatpush1.bf16.msra.mxu0 %v3800
    %5089 = vmatprep.subr.bf16.mxu0 0
    %5090 = vmatpush1.bf16.msra.mxu0 %v3799
    %5091 = vmatprep.subr.bf16.mxu0 0
    %5092 = vmatpush1.bf16.msra.mxu0 %v3798
    %5093 = vmatprep.subr.bf16.mxu0 0
    %5094 = vmatpush1.bf16.msra.mxu0 %v3797
    %5095 = vmatprep.subr.bf16.mxu0 0
    %5096 = vmatpush1.bf16.msra.mxu0 %v3796
    %5097 = vmatprep.subr.bf16.mxu0 0
    %5098 = vmatpush1.bf16.msra.mxu0 %v3795
    %5099 = vmatprep.subr.bf16.mxu0 0
    %5100 = vmatpush2.bf16.msra.mxu0 %v3810
    %5101 = vmatprep.subr.bf16.mxu0 0
    %5102 = vmatpush2.bf16.msra.mxu0 %v3809
    %5103 = vmatprep.subr.bf16.mxu0 0
    %5104 = vmatpush2.bf16.msra.mxu0 %v3808
    %5105 = vmatprep.subr.bf16.mxu0 0
    %5106 = vmatpush2.bf16.msra.mxu0 %v3807
    %5107 = vmatprep.subr.bf16.mxu0 0
    %5108 = vmatpush2.bf16.msra.mxu0 %v3806
    %5109 = vmatprep.subr.bf16.mxu0 0
    %5110 = vmatpush2.bf16.msra.mxu0 %v3805
    %5111 = vmatprep.subr.bf16.mxu0 0
    %5112 = vmatpush2.bf16.msra.mxu0 %v3804
    %5113 = vmatprep.subr.bf16.mxu0 0
    %5114 = vmatpush2.bf16.msra.mxu0 %v3803
    %5115 = vmatprep.mubr.bf16.mxu0 %v1261
    %5116 = vmatmul.mubr.bf16.gmra.mxu0 %v1259
    %v5117 = vpop.f32.mrf.mxu0
    %v5118 = vadd.f32 %v5078, %v5117
    %v5119 = vpop.f32.mrf.mxu0
    %v5120 = vpop.f32.mrf.mxu0
    %v5121 = vpop.f32.mrf.mxu0
    %5122 = vdwg.mxu0
    %5123 = vmatprep.subr.bf16.mxu0 0
    %5124 = vmatpush1.bf16.msra.mxu0 %v3818
    %5125 = vmatprep.subr.bf16.mxu0 0
    %5126 = vmatpush1.bf16.msra.mxu0 %v3817
    %5127 = vmatprep.subr.bf16.mxu0 0
    %5128 = vmatpush1.bf16.msra.mxu0 %v3816
    %5129 = vmatprep.subr.bf16.mxu0 0
    %5130 = vmatpush1.bf16.msra.mxu0 %v3815
    %5131 = vmatprep.subr.bf16.mxu0 0
    %5132 = vmatpush1.bf16.msra.mxu0 %v3814
    %5133 = vmatprep.subr.bf16.mxu0 0
    %5134 = vmatpush1.bf16.msra.mxu0 %v3813
    %5135 = vmatprep.subr.bf16.mxu0 0
    %5136 = vmatpush1.bf16.msra.mxu0 %v3812
    %5137 = vmatprep.subr.bf16.mxu0 0
    %5138 = vmatpush1.bf16.msra.mxu0 %v3811
    %5139 = vmatprep.subr.bf16.mxu0 0
    %5140 = vmatpush2.bf16.msra.mxu0 %v3826
    %5141 = vmatprep.subr.bf16.mxu0 0
    %5142 = vmatpush2.bf16.msra.mxu0 %v3825
    %5143 = vmatprep.subr.bf16.mxu0 0
    %5144 = vmatpush2.bf16.msra.mxu0 %v3824
    %5145 = vmatprep.subr.bf16.mxu0 0
    %5146 = vmatpush2.bf16.msra.mxu0 %v3823
    %5147 = vmatprep.subr.bf16.mxu0 0
    %5148 = vmatpush2.bf16.msra.mxu0 %v3822
    %5149 = vmatprep.subr.bf16.mxu0 0
    %5150 = vmatpush2.bf16.msra.mxu0 %v3821
    %5151 = vmatprep.subr.bf16.mxu0 0
    %5152 = vmatpush2.bf16.msra.mxu0 %v3820
    %5153 = vmatprep.subr.bf16.mxu0 0
    %5154 = vmatpush2.bf16.msra.mxu0 %v3819
    %5155 = vmatprep.mubr.bf16.mxu0 %v1299
    %5156 = vmatmul.mubr.bf16.gmra.mxu0 %v1285
    %v5157 = vpop.f32.mrf.mxu0
    %v5158 = vadd.f32 %v5118, %v5157
    %v5159 = vpop.f32.mrf.mxu0
    %v5160 = vpop.f32.mrf.mxu0
    %v5161 = vpop.f32.mrf.mxu0
    %5162 = vdwg.mxu0
    %5163 = vmatprep.subr.bf16.mxu0 0
    %5164 = vmatpush1.bf16.msra.mxu0 %v3834
    %5165 = vmatprep.subr.bf16.mxu0 0
    %5166 = vmatpush1.bf16.msra.mxu0 %v3833
    %5167 = vmatprep.subr.bf16.mxu0 0
    %5168 = vmatpush1.bf16.msra.mxu0 %v3832
    %5169 = vmatprep.subr.bf16.mxu0 0
    %5170 = vmatpush1.bf16.msra.mxu0 %v3831
    %5171 = vmatprep.subr.bf16.mxu0 0
    %5172 = vmatpush1.bf16.msra.mxu0 %v3830
    %5173 = vmatprep.subr.bf16.mxu0 0
    %5174 = vmatpush1.bf16.msra.mxu0 %v3829
    %5175 = vmatprep.subr.bf16.mxu0 0
    %5176 = vmatpush1.bf16.msra.mxu0 %v3828
    %5177 = vmatprep.subr.bf16.mxu0 0
    %5178 = vmatpush1.bf16.msra.mxu0 %v3827
    %5179 = vmatprep.subr.bf16.mxu0 0
    %5180 = vmatpush2.bf16.msra.mxu0 %v3842
    %5181 = vmatprep.subr.bf16.mxu0 0
    %5182 = vmatpush2.bf16.msra.mxu0 %v3841
    %5183 = vmatprep.subr.bf16.mxu0 0
    %5184 = vmatpush2.bf16.msra.mxu0 %v3840
    %5185 = vmatprep.subr.bf16.mxu0 0
    %5186 = vmatpush2.bf16.msra.mxu0 %v3839
    %5187 = vmatprep.subr.bf16.mxu0 0
    %5188 = vmatpush2.bf16.msra.mxu0 %v3838
    %5189 = vmatprep.subr.bf16.mxu0 0
    %5190 = vmatpush2.bf16.msra.mxu0 %v3837
    %5191 = vmatprep.subr.bf16.mxu0 0
    %5192 = vmatpush2.bf16.msra.mxu0 %v3836
    %5193 = vmatprep.subr.bf16.mxu0 0
    %5194 = vmatpush2.bf16.msra.mxu0 %v3835
    %5195 = vmatprep.mubr.bf16.mxu0 %v1309
    %5196 = vmatmul.mubr.bf16.gmra.mxu0 %v1307
    %v5197 = vpop.f32.mrf.mxu0
    %v5198 = vadd.f32 %v5158, %v5197
    %v5199 = vpop.f32.mrf.mxu0
    %v5200 = vpop.f32.mrf.mxu0
    %v5201 = vpop.f32.mrf.mxu0
    %5202 = vdwg.mxu0
    %5203 = vmatprep.subr.bf16.mxu0 0
    %5204 = vmatpush1.bf16.msra.mxu0 %v3850
    %5205 = vmatprep.subr.bf16.mxu0 0
    %5206 = vmatpush1.bf16.msra.mxu0 %v3849
    %5207 = vmatprep.subr.bf16.mxu0 0
    %5208 = vmatpush1.bf16.msra.mxu0 %v3848
    %5209 = vmatprep.subr.bf16.mxu0 0
    %5210 = vmatpush1.bf16.msra.mxu0 %v3847
    %5211 = vmatprep.subr.bf16.mxu0 0
    %5212 = vmatpush1.bf16.msra.mxu0 %v3846
    %5213 = vmatprep.subr.bf16.mxu0 0
    %5214 = vmatpush1.bf16.msra.mxu0 %v3845
    %5215 = vmatprep.subr.bf16.mxu0 0
    %5216 = vmatpush1.bf16.msra.mxu0 %v3844
    %5217 = vmatprep.subr.bf16.mxu0 0
    %5218 = vmatpush1.bf16.msra.mxu0 %v3843
    %5219 = vmatprep.subr.bf16.mxu0 0
    %5220 = vmatpush2.bf16.msra.mxu0 %v3858
    %5221 = vmatprep.subr.bf16.mxu0 0
    %5222 = vmatpush2.bf16.msra.mxu0 %v3857
    %5223 = vmatprep.subr.bf16.mxu0 0
    %5224 = vmatpush2.bf16.msra.mxu0 %v3856
    %5225 = vmatprep.subr.bf16.mxu0 0
    %5226 = vmatpush2.bf16.msra.mxu0 %v3855
    %5227 = vmatprep.subr.bf16.mxu0 0
    %5228 = vmatpush2.bf16.msra.mxu0 %v3854
    %5229 = vmatprep.subr.bf16.mxu0 0
    %5230 = vmatpush2.bf16.msra.mxu0 %v3853
    %5231 = vmatprep.subr.bf16.mxu0 0
    %5232 = vmatpush2.bf16.msra.mxu0 %v3852
    %5233 = vmatprep.subr.bf16.mxu0 0
    %5234 = vmatpush2.bf16.msra.mxu0 %v3851
    %5235 = vmatprep.mubr.bf16.mxu0 %v1306
    %5236 = vmatmul.mubr.bf16.gmra.mxu0 %v1292
    %v5237 = vpop.f32.mrf.mxu0
    %v5238 = vadd.f32 %v5198, %v5237
    %v5239 = vpop.f32.mrf.mxu0
    %v5240 = vpop.f32.mrf.mxu0
    %v5241 = vpop.f32.mrf.mxu0
    %5242 = vdwg.mxu0
    %5243 = vmatprep.subr.bf16.mxu0 0
    %5244 = vmatpush1.bf16.msra.mxu0 %v3866
    %5245 = vmatprep.subr.bf16.mxu0 0
    %5246 = vmatpush1.bf16.msra.mxu0 %v3865
    %5247 = vmatprep.subr.bf16.mxu0 0
    %5248 = vmatpush1.bf16.msra.mxu0 %v3864
    %5249 = vmatprep.subr.bf16.mxu0 0
    %5250 = vmatpush1.bf16.msra.mxu0 %v3863
    %5251 = vmatprep.subr.bf16.mxu0 0
    %5252 = vmatpush1.bf16.msra.mxu0 %v3862
    %5253 = vmatprep.subr.bf16.mxu0 0
    %5254 = vmatpush1.bf16.msra.mxu0 %v3861
    %5255 = vmatprep.subr.bf16.mxu0 0
    %5256 = vmatpush1.bf16.msra.mxu0 %v3860
    %5257 = vmatprep.subr.bf16.mxu0 0
    %5258 = vmatpush1.bf16.msra.mxu0 %v3859
    %5259 = vmatprep.subr.bf16.mxu0 0
    %5260 = vmatpush2.bf16.msra.mxu0 %v3874
    %5261 = vmatprep.subr.bf16.mxu0 0
    %5262 = vmatpush2.bf16.msra.mxu0 %v3873
    %5263 = vmatprep.subr.bf16.mxu0 0
    %5264 = vmatpush2.bf16.msra.mxu0 %v3872
    %5265 = vmatprep.subr.bf16.mxu0 0
    %5266 = vmatpush2.bf16.msra.mxu0 %v3871
    %5267 = vmatprep.subr.bf16.mxu0 0
    %5268 = vmatpush2.bf16.msra.mxu0 %v3870
    %5269 = vmatprep.subr.bf16.mxu0 0
    %5270 = vmatpush2.bf16.msra.mxu0 %v3869
    %5271 = vmatprep.subr.bf16.mxu0 0
    %5272 = vmatpush2.bf16.msra.mxu0 %v3868
    %5273 = vmatprep.subr.bf16.mxu0 0
    %5274 = vmatpush2.bf16.msra.mxu0 %v3867
    %5275 = vmatprep.mubr.bf16.mxu0 %v1310
    %5276 = vmatmul.mubr.bf16.gmra.mxu0 %v1308
    %v5277 = vpop.f32.mrf.mxu0
    %v5278 = vadd.f32 %v5238, %v5277
    %v5279 = vpop.f32.mrf.mxu0
    %v5280 = vpop.f32.mrf.mxu0
    %v5281 = vpop.f32.mrf.mxu0
    %5282 = vdwg.mxu0
    %5283 = vmatprep.subr.bf16.mxu0 0
    %5284 = vmatpush1.bf16.msra.mxu0 %v3882
    %5285 = vmatprep.subr.bf16.mxu0 0
    %5286 = vmatpush1.bf16.msra.mxu0 %v3881
    %5287 = vmatprep.subr.bf16.mxu0 0
    %5288 = vmatpush1.bf16.msra.mxu0 %v3880
    %5289 = vmatprep.subr.bf16.mxu0 0
    %5290 = vmatpush1.bf16.msra.mxu0 %v3879
    %5291 = vmatprep.subr.bf16.mxu0 0
    %5292 = vmatpush1.bf16.msra.mxu0 %v3878
    %5293 = vmatprep.subr.bf16.mxu0 0
    %5294 = vmatpush1.bf16.msra.mxu0 %v3877
    %5295 = vmatprep.subr.bf16.mxu0 0
    %5296 = vmatpush1.bf16.msra.mxu0 %v3876
    %5297 = vmatprep.subr.bf16.mxu0 0
    %5298 = vmatpush1.bf16.msra.mxu0 %v3875
    %5299 = vmatprep.subr.bf16.mxu0 0
    %5300 = vmatpush2.bf16.msra.mxu0 %v3890
    %5301 = vmatprep.subr.bf16.mxu0 0
    %5302 = vmatpush2.bf16.msra.mxu0 %v3889
    %5303 = vmatprep.subr.bf16.mxu0 0
    %5304 = vmatpush2.bf16.msra.mxu0 %v3888
    %5305 = vmatprep.subr.bf16.mxu0 0
    %5306 = vmatpush2.bf16.msra.mxu0 %v3887
    %5307 = vmatprep.subr.bf16.mxu0 0
    %5308 = vmatpush2.bf16.msra.mxu0 %v3886
    %5309 = vmatprep.subr.bf16.mxu0 0
    %5310 = vmatpush2.bf16.msra.mxu0 %v3885
    %5311 = vmatprep.subr.bf16.mxu0 0
    %5312 = vmatpush2.bf16.msra.mxu0 %v3884
    %5313 = vmatprep.subr.bf16.mxu0 0
    %5314 = vmatpush2.bf16.msra.mxu0 %v3883
    %5315 = vmatprep.mubr.bf16.mxu0 %v1348
    %5316 = vmatmul.mubr.bf16.gmra.mxu0 %v1334
    %v5317 = vpop.f32.mrf.mxu0
    %v5318 = vadd.f32 %v5278, %v5317
    %v5319 = vpop.f32.mrf.mxu0
    %v5320 = vpop.f32.mrf.mxu0
    %v5321 = vpop.f32.mrf.mxu0
    %5322 = vdwg.mxu0
    %5323 = vmatprep.subr.bf16.mxu0 0
    %5324 = vmatpush1.bf16.msra.mxu0 %v3898
    %5325 = vmatprep.subr.bf16.mxu0 0
    %5326 = vmatpush1.bf16.msra.mxu0 %v3897
    %5327 = vmatprep.subr.bf16.mxu0 0
    %5328 = vmatpush1.bf16.msra.mxu0 %v3896
    %5329 = vmatprep.subr.bf16.mxu0 0
    %5330 = vmatpush1.bf16.msra.mxu0 %v3895
    %5331 = vmatprep.subr.bf16.mxu0 0
    %5332 = vmatpush1.bf16.msra.mxu0 %v3894
    %5333 = vmatprep.subr.bf16.mxu0 0
    %5334 = vmatpush1.bf16.msra.mxu0 %v3893
    %5335 = vmatprep.subr.bf16.mxu0 0
    %5336 = vmatpush1.bf16.msra.mxu0 %v3892
    %5337 = vmatprep.subr.bf16.mxu0 0
    %5338 = vmatpush1.bf16.msra.mxu0 %v3891
    %5339 = vmatprep.subr.bf16.mxu0 0
    %5340 = vmatpush2.bf16.msra.mxu0 %v3906
    %5341 = vmatprep.subr.bf16.mxu0 0
    %5342 = vmatpush2.bf16.msra.mxu0 %v3905
    %5343 = vmatprep.subr.bf16.mxu0 0
    %5344 = vmatpush2.bf16.msra.mxu0 %v3904
    %5345 = vmatprep.subr.bf16.mxu0 0
    %5346 = vmatpush2.bf16.msra.mxu0 %v3903
    %5347 = vmatprep.subr.bf16.mxu0 0
    %5348 = vmatpush2.bf16.msra.mxu0 %v3902
    %5349 = vmatprep.subr.bf16.mxu0 0
    %5350 = vmatpush2.bf16.msra.mxu0 %v3901
    %5351 = vmatprep.subr.bf16.mxu0 0
    %5352 = vmatpush2.bf16.msra.mxu0 %v3900
    %5353 = vmatprep.subr.bf16.mxu0 0
    %5354 = vmatpush2.bf16.msra.mxu0 %v3899
    %5355 = vmatprep.mubr.bf16.mxu0 %v1358
    %5356 = vmatmul.mubr.bf16.gmra.mxu0 %v1356
    %v5357 = vpop.f32.mrf.mxu0
    %v5358 = vadd.f32 %v5318, %v5357
    %v5359 = vpop.f32.mrf.mxu0
    %v5360 = vpop.f32.mrf.mxu0
    %v5361 = vpop.f32.mrf.mxu0
    %5362 = vdwg.mxu0
    %5363 = vmatprep.subr.bf16.mxu0 0
    %5364 = vmatpush1.bf16.msra.mxu0 %v3914
    %5365 = vmatprep.subr.bf16.mxu0 0
    %5366 = vmatpush1.bf16.msra.mxu0 %v3913
    %5367 = vmatprep.subr.bf16.mxu0 0
    %5368 = vmatpush1.bf16.msra.mxu0 %v3912
    %5369 = vmatprep.subr.bf16.mxu0 0
    %5370 = vmatpush1.bf16.msra.mxu0 %v3911
    %5371 = vmatprep.subr.bf16.mxu0 0
    %5372 = vmatpush1.bf16.msra.mxu0 %v3910
    %5373 = vmatprep.subr.bf16.mxu0 0
    %5374 = vmatpush1.bf16.msra.mxu0 %v3909
    %5375 = vmatprep.subr.bf16.mxu0 0
    %5376 = vmatpush1.bf16.msra.mxu0 %v3908
    %5377 = vmatprep.subr.bf16.mxu0 0
    %5378 = vmatpush1.bf16.msra.mxu0 %v3907
    %5379 = vmatprep.subr.bf16.mxu0 0
    %5380 = vmatpush2.bf16.msra.mxu0 %v3922
    %5381 = vmatprep.subr.bf16.mxu0 0
    %5382 = vmatpush2.bf16.msra.mxu0 %v3921
    %5383 = vmatprep.subr.bf16.mxu0 0
    %5384 = vmatpush2.bf16.msra.mxu0 %v3920
    %5385 = vmatprep.subr.bf16.mxu0 0
    %5386 = vmatpush2.bf16.msra.mxu0 %v3919
    %5387 = vmatprep.subr.bf16.mxu0 0
    %5388 = vmatpush2.bf16.msra.mxu0 %v3918
    %5389 = vmatprep.subr.bf16.mxu0 0
    %5390 = vmatpush2.bf16.msra.mxu0 %v3917
    %5391 = vmatprep.subr.bf16.mxu0 0
    %5392 = vmatpush2.bf16.msra.mxu0 %v3916
    %5393 = vmatprep.subr.bf16.mxu0 0
    %5394 = vmatpush2.bf16.msra.mxu0 %v3915
    %5395 = vmatprep.mubr.bf16.mxu0 %v1355
    %5396 = vmatmul.mubr.bf16.gmra.mxu0 %v1341
    %v5397 = vpop.f32.mrf.mxu0
    %v5398 = vadd.f32 %v5358, %v5397
    %v5399 = vpop.f32.mrf.mxu0
    %v5400 = vpop.f32.mrf.mxu0
    %v5401 = vpop.f32.mrf.mxu0
    %5402 = vdwg.mxu0
    %5403 = vmatprep.subr.bf16.mxu0 0
    %5404 = vmatpush1.bf16.msra.mxu0 %v3930
    %5405 = vmatprep.subr.bf16.mxu0 0
    %5406 = vmatpush1.bf16.msra.mxu0 %v3929
    %5407 = vmatprep.subr.bf16.mxu0 0
    %5408 = vmatpush1.bf16.msra.mxu0 %v3928
    %5409 = vmatprep.subr.bf16.mxu0 0
    %5410 = vmatpush1.bf16.msra.mxu0 %v3927
    %5411 = vmatprep.subr.bf16.mxu0 0
    %5412 = vmatpush1.bf16.msra.mxu0 %v3926
    %5413 = vmatprep.subr.bf16.mxu0 0
    %5414 = vmatpush1.bf16.msra.mxu0 %v3925
    %5415 = vmatprep.subr.bf16.mxu0 0
    %5416 = vmatpush1.bf16.msra.mxu0 %v3924
    %5417 = vmatprep.subr.bf16.mxu0 0
    %5418 = vmatpush1.bf16.msra.mxu0 %v3923
    %5419 = vmatprep.subr.bf16.mxu0 0
    %5420 = vmatpush2.bf16.msra.mxu0 %v3938
    %5421 = vmatprep.subr.bf16.mxu0 0
    %5422 = vmatpush2.bf16.msra.mxu0 %v3937
    %5423 = vmatprep.subr.bf16.mxu0 0
    %5424 = vmatpush2.bf16.msra.mxu0 %v3936
    %5425 = vmatprep.subr.bf16.mxu0 0
    %5426 = vmatpush2.bf16.msra.mxu0 %v3935
    %5427 = vmatprep.subr.bf16.mxu0 0
    %5428 = vmatpush2.bf16.msra.mxu0 %v3934
    %5429 = vmatprep.subr.bf16.mxu0 0
    %5430 = vmatpush2.bf16.msra.mxu0 %v3933
    %5431 = vmatprep.subr.bf16.mxu0 0
    %5432 = vmatpush2.bf16.msra.mxu0 %v3932
    %5433 = vmatprep.subr.bf16.mxu0 0
    %5434 = vmatpush2.bf16.msra.mxu0 %v3931
    %5435 = vmatprep.mubr.bf16.mxu0 %v1359
    %5436 = vmatmul.mubr.bf16.gmra.mxu0 %v1357
    %v5437 = vpop.f32.mrf.mxu0
    %v5438 = vadd.f32 %v5398, %v5437
    %v5439 = vpop.f32.mrf.mxu0
    %v5440 = vpop.f32.mrf.mxu0
    %v5441 = vpop.f32.mrf.mxu0
    %5442 = vdwg.mxu0
    %5443 = vmatprep.subr.bf16.mxu0 0
    %5444 = vmatpush1.bf16.msra.mxu0 %v3946
    %5445 = vmatprep.subr.bf16.mxu0 0
    %5446 = vmatpush1.bf16.msra.mxu0 %v3945
    %5447 = vmatprep.subr.bf16.mxu0 0
    %5448 = vmatpush1.bf16.msra.mxu0 %v3944
    %5449 = vmatprep.subr.bf16.mxu0 0
    %5450 = vmatpush1.bf16.msra.mxu0 %v3943
    %5451 = vmatprep.subr.bf16.mxu0 0
    %5452 = vmatpush1.bf16.msra.mxu0 %v3942
    %5453 = vmatprep.subr.bf16.mxu0 0
    %5454 = vmatpush1.bf16.msra.mxu0 %v3941
    %5455 = vmatprep.subr.bf16.mxu0 0
    %5456 = vmatpush1.bf16.msra.mxu0 %v3940
    %5457 = vmatprep.subr.bf16.mxu0 0
    %5458 = vmatpush1.bf16.msra.mxu0 %v3939
    %5459 = vmatprep.subr.bf16.mxu0 0
    %5460 = vmatpush2.bf16.msra.mxu0 %v3954
    %5461 = vmatprep.subr.bf16.mxu0 0
    %5462 = vmatpush2.bf16.msra.mxu0 %v3953
    %5463 = vmatprep.subr.bf16.mxu0 0
    %5464 = vmatpush2.bf16.msra.mxu0 %v3952
    %5465 = vmatprep.subr.bf16.mxu0 0
    %5466 = vmatpush2.bf16.msra.mxu0 %v3951
    %5467 = vmatprep.subr.bf16.mxu0 0
    %5468 = vmatpush2.bf16.msra.mxu0 %v3950
    %5469 = vmatprep.subr.bf16.mxu0 0
    %5470 = vmatpush2.bf16.msra.mxu0 %v3949
    %5471 = vmatprep.subr.bf16.mxu0 0
    %5472 = vmatpush2.bf16.msra.mxu0 %v3948
    %5473 = vmatprep.subr.bf16.mxu0 0
    %5474 = vmatpush2.bf16.msra.mxu0 %v3947
    %5475 = vmatprep.mubr.bf16.mxu0 %v1397
    %5476 = vmatmul.mubr.bf16.gmra.mxu0 %v1383
    %v5477 = vpop.f32.mrf.mxu0
    %v5478 = vadd.f32 %v5438, %v5477
    %v5479 = vpop.f32.mrf.mxu0
    %v5480 = vpop.f32.mrf.mxu0
    %v5481 = vpop.f32.mrf.mxu0
    %5482 = vdwg.mxu0
    %5483 = vmatprep.subr.bf16.mxu0 0
    %5484 = vmatpush1.bf16.msra.mxu0 %v3962
    %5485 = vmatprep.subr.bf16.mxu0 0
    %5486 = vmatpush1.bf16.msra.mxu0 %v3961
    %5487 = vmatprep.subr.bf16.mxu0 0
    %5488 = vmatpush1.bf16.msra.mxu0 %v3960
    %5489 = vmatprep.subr.bf16.mxu0 0
    %5490 = vmatpush1.bf16.msra.mxu0 %v3959
    %5491 = vmatprep.subr.bf16.mxu0 0
    %5492 = vmatpush1.bf16.msra.mxu0 %v3958
    %5493 = vmatprep.subr.bf16.mxu0 0
    %5494 = vmatpush1.bf16.msra.mxu0 %v3957
    %5495 = vmatprep.subr.bf16.mxu0 0
    %5496 = vmatpush1.bf16.msra.mxu0 %v3956
    %5497 = vmatprep.subr.bf16.mxu0 0
    %5498 = vmatpush1.bf16.msra.mxu0 %v3955
    %5499 = vmatprep.subr.bf16.mxu0 0
    %5500 = vmatpush2.bf16.msra.mxu0 %v3970
    %5501 = vmatprep.subr.bf16.mxu0 0
    %5502 = vmatpush2.bf16.msra.mxu0 %v3969
    %5503 = vmatprep.subr.bf16.mxu0 0
    %5504 = vmatpush2.bf16.msra.mxu0 %v3968
    %5505 = vmatprep.subr.bf16.mxu0 0
    %5506 = vmatpush2.bf16.msra.mxu0 %v3967
    %5507 = vmatprep.subr.bf16.mxu0 0
    %5508 = vmatpush2.bf16.msra.mxu0 %v3966
    %5509 = vmatprep.subr.bf16.mxu0 0
    %5510 = vmatpush2.bf16.msra.mxu0 %v3965
    %5511 = vmatprep.subr.bf16.mxu0 0
    %5512 = vmatpush2.bf16.msra.mxu0 %v3964
    %5513 = vmatprep.subr.bf16.mxu0 0
    %5514 = vmatpush2.bf16.msra.mxu0 %v3963
    %5515 = vmatprep.mubr.bf16.mxu0 %v1407
    %5516 = vmatmul.mubr.bf16.gmra.mxu0 %v1405
    %v5517 = vpop.f32.mrf.mxu0
    %v5518 = vadd.f32 %v5478, %v5517
    %v5519 = vpop.f32.mrf.mxu0
    %v5520 = vpop.f32.mrf.mxu0
    %v5521 = vpop.f32.mrf.mxu0
    %5522 = vdwg.mxu0
    %5523 = vmatprep.subr.bf16.mxu0 0
    %5524 = vmatpush1.bf16.msra.mxu0 %v3978
    %5525 = vmatprep.subr.bf16.mxu0 0
    %5526 = vmatpush1.bf16.msra.mxu0 %v3977
    %5527 = vmatprep.subr.bf16.mxu0 0
    %5528 = vmatpush1.bf16.msra.mxu0 %v3976
    %5529 = vmatprep.subr.bf16.mxu0 0
    %5530 = vmatpush1.bf16.msra.mxu0 %v3975
    %5531 = vmatprep.subr.bf16.mxu0 0
    %5532 = vmatpush1.bf16.msra.mxu0 %v3974
    %5533 = vmatprep.subr.bf16.mxu0 0
    %5534 = vmatpush1.bf16.msra.mxu0 %v3973
    %5535 = vmatprep.subr.bf16.mxu0 0
    %5536 = vmatpush1.bf16.msra.mxu0 %v3972
    %5537 = vmatprep.subr.bf16.mxu0 0
    %5538 = vmatpush1.bf16.msra.mxu0 %v3971
    %5539 = vmatprep.subr.bf16.mxu0 0
    %5540 = vmatpush2.bf16.msra.mxu0 %v3986
    %5541 = vmatprep.subr.bf16.mxu0 0
    %5542 = vmatpush2.bf16.msra.mxu0 %v3985
    %5543 = vmatprep.subr.bf16.mxu0 0
    %5544 = vmatpush2.bf16.msra.mxu0 %v3984
    %5545 = vmatprep.subr.bf16.mxu0 0
    %5546 = vmatpush2.bf16.msra.mxu0 %v3983
    %5547 = vmatprep.subr.bf16.mxu0 0
    %5548 = vmatpush2.bf16.msra.mxu0 %v3982
    %5549 = vmatprep.subr.bf16.mxu0 0
    %5550 = vmatpush2.bf16.msra.mxu0 %v3981
    %5551 = vmatprep.subr.bf16.mxu0 0
    %5552 = vmatpush2.bf16.msra.mxu0 %v3980
    %5553 = vmatprep.subr.bf16.mxu0 0
    %5554 = vmatpush2.bf16.msra.mxu0 %v3979
    %5555 = vmatprep.mubr.bf16.mxu0 %v1404
    %5556 = vmatmul.mubr.bf16.gmra.mxu0 %v1390
    %v5557 = vpop.f32.mrf.mxu0
    %v5558 = vadd.f32 %v5518, %v5557
    %v5559 = vpop.f32.mrf.mxu0
    %v5560 = vpop.f32.mrf.mxu0
    %v5561 = vpop.f32.mrf.mxu0
    %5562 = vdwg.mxu0
    %5563 = vmatprep.subr.bf16.mxu0 0
    %5564 = vmatpush1.bf16.msra.mxu0 %v3994
    %5565 = vmatprep.subr.bf16.mxu0 0
    %5566 = vmatpush1.bf16.msra.mxu0 %v3993
    %5567 = vmatprep.subr.bf16.mxu0 0
    %5568 = vmatpush1.bf16.msra.mxu0 %v3992
    %5569 = vmatprep.subr.bf16.mxu0 0
    %5570 = vmatpush1.bf16.msra.mxu0 %v3991
    %5571 = vmatprep.subr.bf16.mxu0 0
    %5572 = vmatpush1.bf16.msra.mxu0 %v3990
    %5573 = vmatprep.subr.bf16.mxu0 0
    %5574 = vmatpush1.bf16.msra.mxu0 %v3989
    %5575 = vmatprep.subr.bf16.mxu0 0
    %5576 = vmatpush1.bf16.msra.mxu0 %v3988
    %5577 = vmatprep.subr.bf16.mxu0 0
    %5578 = vmatpush1.bf16.msra.mxu0 %v3987
    %5579 = vmatprep.subr.bf16.mxu0 0
    %5580 = vmatpush2.bf16.msra.mxu0 %v4002
    %5581 = vmatprep.subr.bf16.mxu0 0
    %5582 = vmatpush2.bf16.msra.mxu0 %v4001
    %5583 = vmatprep.subr.bf16.mxu0 0
    %5584 = vmatpush2.bf16.msra.mxu0 %v4000
    %5585 = vmatprep.subr.bf16.mxu0 0
    %5586 = vmatpush2.bf16.msra.mxu0 %v3999
    %5587 = vmatprep.subr.bf16.mxu0 0
    %5588 = vmatpush2.bf16.msra.mxu0 %v3998
    %5589 = vmatprep.subr.bf16.mxu0 0
    %5590 = vmatpush2.bf16.msra.mxu0 %v3997
    %5591 = vmatprep.subr.bf16.mxu0 0
    %5592 = vmatpush2.bf16.msra.mxu0 %v3996
    %5593 = vmatprep.subr.bf16.mxu0 0
    %5594 = vmatpush2.bf16.msra.mxu0 %v3995
    %5595 = vmatprep.mubr.bf16.mxu0 %v1408
    %5596 = vmatmul.mubr.bf16.gmra.mxu0 %v1406
    %v5597 = vpop.f32.mrf.mxu0
    %v5598 = vadd.f32 %v5558, %v5597
    %v5599 = vpop.f32.mrf.mxu0
    %v5600 = vpop.f32.mrf.mxu0
    %v5601 = vpop.f32.mrf.mxu0
    %5602 = vdwg.mxu0
    %5603 = vmatprep.subr.bf16.mxu0 0
    %5604 = vmatpush1.bf16.msra.mxu0 %v4010
    %5605 = vmatprep.subr.bf16.mxu0 0
    %5606 = vmatpush1.bf16.msra.mxu0 %v4009
    %5607 = vmatprep.subr.bf16.mxu0 0
    %5608 = vmatpush1.bf16.msra.mxu0 %v4008
    %5609 = vmatprep.subr.bf16.mxu0 0
    %5610 = vmatpush1.bf16.msra.mxu0 %v4007
    %5611 = vmatprep.subr.bf16.mxu0 0
    %5612 = vmatpush1.bf16.msra.mxu0 %v4006
    %5613 = vmatprep.subr.bf16.mxu0 0
    %5614 = vmatpush1.bf16.msra.mxu0 %v4005
    %5615 = vmatprep.subr.bf16.mxu0 0
    %5616 = vmatpush1.bf16.msra.mxu0 %v4004
    %5617 = vmatprep.subr.bf16.mxu0 0
    %5618 = vmatpush1.bf16.msra.mxu0 %v4003
    %5619 = vmatprep.subr.bf16.mxu0 0
    %5620 = vmatpush2.bf16.msra.mxu0 %v4018
    %5621 = vmatprep.subr.bf16.mxu0 0
    %5622 = vmatpush2.bf16.msra.mxu0 %v4017
    %5623 = vmatprep.subr.bf16.mxu0 0
    %5624 = vmatpush2.bf16.msra.mxu0 %v4016
    %5625 = vmatprep.subr.bf16.mxu0 0
    %5626 = vmatpush2.bf16.msra.mxu0 %v4015
    %5627 = vmatprep.subr.bf16.mxu0 0
    %5628 = vmatpush2.bf16.msra.mxu0 %v4014
    %5629 = vmatprep.subr.bf16.mxu0 0
    %5630 = vmatpush2.bf16.msra.mxu0 %v4013
    %5631 = vmatprep.subr.bf16.mxu0 0
    %5632 = vmatpush2.bf16.msra.mxu0 %v4012
    %5633 = vmatprep.subr.bf16.mxu0 0
    %5634 = vmatpush2.bf16.msra.mxu0 %v4011
    %5635 = vmatprep.mubr.bf16.mxu0 %v1446
    %5636 = vmatmul.mubr.bf16.gmra.mxu0 %v1432
    %v5637 = vpop.f32.mrf.mxu0
    %v5638 = vadd.f32 %v5598, %v5637
    %v5639 = vpop.f32.mrf.mxu0
    %v5640 = vpop.f32.mrf.mxu0
    %v5641 = vpop.f32.mrf.mxu0
    %5642 = vdwg.mxu0
    %5643 = vmatprep.subr.bf16.mxu0 0
    %5644 = vmatpush1.bf16.msra.mxu0 %v4026
    %5645 = vmatprep.subr.bf16.mxu0 0
    %5646 = vmatpush1.bf16.msra.mxu0 %v4025
    %5647 = vmatprep.subr.bf16.mxu0 0
    %5648 = vmatpush1.bf16.msra.mxu0 %v4024
    %5649 = vmatprep.subr.bf16.mxu0 0
    %5650 = vmatpush1.bf16.msra.mxu0 %v4023
    %5651 = vmatprep.subr.bf16.mxu0 0
    %5652 = vmatpush1.bf16.msra.mxu0 %v4022
    %5653 = vmatprep.subr.bf16.mxu0 0
    %5654 = vmatpush1.bf16.msra.mxu0 %v4021
    %5655 = vmatprep.subr.bf16.mxu0 0
    %5656 = vmatpush1.bf16.msra.mxu0 %v4020
    %5657 = vmatprep.subr.bf16.mxu0 0
    %5658 = vmatpush1.bf16.msra.mxu0 %v4019
    %5659 = vmatprep.subr.bf16.mxu0 0
    %5660 = vmatpush2.bf16.msra.mxu0 %v4034
    %5661 = vmatprep.subr.bf16.mxu0 0
    %5662 = vmatpush2.bf16.msra.mxu0 %v4033
    %5663 = vmatprep.subr.bf16.mxu0 0
    %5664 = vmatpush2.bf16.msra.mxu0 %v4032
    %5665 = vmatprep.subr.bf16.mxu0 0
    %5666 = vmatpush2.bf16.msra.mxu0 %v4031
    %5667 = vmatprep.subr.bf16.mxu0 0
    %5668 = vmatpush2.bf16.msra.mxu0 %v4030
    %5669 = vmatprep.subr.bf16.mxu0 0
    %5670 = vmatpush2.bf16.msra.mxu0 %v4029
    %5671 = vmatprep.subr.bf16.mxu0 0
    %5672 = vmatpush2.bf16.msra.mxu0 %v4028
    %5673 = vmatprep.subr.bf16.mxu0 0
    %5674 = vmatpush2.bf16.msra.mxu0 %v4027
    %5675 = vmatprep.mubr.bf16.mxu0 %v1456
    %5676 = vmatmul.mubr.bf16.gmra.mxu0 %v1454
    %v5677 = vpop.f32.mrf.mxu0
    %v5678 = vadd.f32 %v5638, %v5677
    %v5679 = vpop.f32.mrf.mxu0
    %v5680 = vpop.f32.mrf.mxu0
    %v5681 = vpop.f32.mrf.mxu0
    %5682 = vdwg.mxu0
    %5683 = vmatprep.subr.bf16.mxu0 0
    %5684 = vmatpush1.bf16.msra.mxu0 %v4042
    %5685 = vmatprep.subr.bf16.mxu0 0
    %5686 = vmatpush1.bf16.msra.mxu0 %v4041
    %5687 = vmatprep.subr.bf16.mxu0 0
    %5688 = vmatpush1.bf16.msra.mxu0 %v4040
    %5689 = vmatprep.subr.bf16.mxu0 0
    %5690 = vmatpush1.bf16.msra.mxu0 %v4039
    %5691 = vmatprep.subr.bf16.mxu0 0
    %5692 = vmatpush1.bf16.msra.mxu0 %v4038
    %5693 = vmatprep.subr.bf16.mxu0 0
    %5694 = vmatpush1.bf16.msra.mxu0 %v4037
    %5695 = vmatprep.subr.bf16.mxu0 0
    %5696 = vmatpush1.bf16.msra.mxu0 %v4036
    %5697 = vmatprep.subr.bf16.mxu0 0
    %5698 = vmatpush1.bf16.msra.mxu0 %v4035
    %5699 = vmatprep.subr.bf16.mxu0 0
    %5700 = vmatpush2.bf16.msra.mxu0 %v4050
    %5701 = vmatprep.subr.bf16.mxu0 0
    %5702 = vmatpush2.bf16.msra.mxu0 %v4049
    %5703 = vmatprep.subr.bf16.mxu0 0
    %5704 = vmatpush2.bf16.msra.mxu0 %v4048
    %5705 = vmatprep.subr.bf16.mxu0 0
    %5706 = vmatpush2.bf16.msra.mxu0 %v4047
    %5707 = vmatprep.subr.bf16.mxu0 0
    %5708 = vmatpush2.bf16.msra.mxu0 %v4046
    %5709 = vmatprep.subr.bf16.mxu0 0
    %5710 = vmatpush2.bf16.msra.mxu0 %v4045
    %5711 = vmatprep.subr.bf16.mxu0 0
    %5712 = vmatpush2.bf16.msra.mxu0 %v4044
    %5713 = vmatprep.subr.bf16.mxu0 0
    %5714 = vmatpush2.bf16.msra.mxu0 %v4043
    %5715 = vmatprep.mubr.bf16.mxu0 %v1453
    %5716 = vmatmul.mubr.bf16.gmra.mxu0 %v1439
    %v5717 = vpop.f32.mrf.mxu0
    %v5718 = vadd.f32 %v5678, %v5717
    %v5719 = vpop.f32.mrf.mxu0
    %v5720 = vpop.f32.mrf.mxu0
    %v5721 = vpop.f32.mrf.mxu0
    %5722 = vdwg.mxu0
    %5723 = vmatprep.subr.bf16.mxu0 0
    %5724 = vmatpush1.bf16.msra.mxu0 %v4058
    %5725 = vmatprep.subr.bf16.mxu0 0
    %5726 = vmatpush1.bf16.msra.mxu0 %v4057
    %5727 = vmatprep.subr.bf16.mxu0 0
    %5728 = vmatpush1.bf16.msra.mxu0 %v4056
    %5729 = vmatprep.subr.bf16.mxu0 0
    %5730 = vmatpush1.bf16.msra.mxu0 %v4055
    %5731 = vmatprep.subr.bf16.mxu0 0
    %5732 = vmatpush1.bf16.msra.mxu0 %v4054
    %5733 = vmatprep.subr.bf16.mxu0 0
    %5734 = vmatpush1.bf16.msra.mxu0 %v4053
    %5735 = vmatprep.subr.bf16.mxu0 0
    %5736 = vmatpush1.bf16.msra.mxu0 %v4052
    %5737 = vmatprep.subr.bf16.mxu0 0
    %5738 = vmatpush1.bf16.msra.mxu0 %v4051
    %5739 = vmatprep.subr.bf16.mxu0 0
    %5740 = vmatpush2.bf16.msra.mxu0 %v4066
    %5741 = vmatprep.subr.bf16.mxu0 0
    %5742 = vmatpush2.bf16.msra.mxu0 %v4065
    %5743 = vmatprep.subr.bf16.mxu0 0
    %5744 = vmatpush2.bf16.msra.mxu0 %v4064
    %5745 = vmatprep.subr.bf16.mxu0 0
    %5746 = vmatpush2.bf16.msra.mxu0 %v4063
    %5747 = vmatprep.subr.bf16.mxu0 0
    %5748 = vmatpush2.bf16.msra.mxu0 %v4062
    %5749 = vmatprep.subr.bf16.mxu0 0
    %5750 = vmatpush2.bf16.msra.mxu0 %v4061
    %5751 = vmatprep.subr.bf16.mxu0 0
    %5752 = vmatpush2.bf16.msra.mxu0 %v4060
    %5753 = vmatprep.subr.bf16.mxu0 0
    %5754 = vmatpush2.bf16.msra.mxu0 %v4059
    %5755 = vmatprep.mubr.bf16.mxu0 %v1457
    %5756 = vmatmul.mubr.bf16.gmra.mxu0 %v1455
    %v5757 = vpop.f32.mrf.mxu0
    %v5758 = vadd.f32 %v5718, %v5757
    %v5759 = vpop.f32.mrf.mxu0
    %v5760 = vpop.f32.mrf.mxu0
    %v5761 = vpop.f32.mrf.mxu0
    %5762 = vdwg.mxu0
    %5763 = vmatprep.subr.bf16.mxu0 0
    %5764 = vmatpush1.bf16.msra.mxu0 %v4074
    %5765 = vmatprep.subr.bf16.mxu0 0
    %5766 = vmatpush1.bf16.msra.mxu0 %v4073
    %5767 = vmatprep.subr.bf16.mxu0 0
    %5768 = vmatpush1.bf16.msra.mxu0 %v4072
    %5769 = vmatprep.subr.bf16.mxu0 0
    %5770 = vmatpush1.bf16.msra.mxu0 %v4071
    %5771 = vmatprep.subr.bf16.mxu0 0
    %5772 = vmatpush1.bf16.msra.mxu0 %v4070
    %5773 = vmatprep.subr.bf16.mxu0 0
    %5774 = vmatpush1.bf16.msra.mxu0 %v4069
    %5775 = vmatprep.subr.bf16.mxu0 0
    %5776 = vmatpush1.bf16.msra.mxu0 %v4068
    %5777 = vmatprep.subr.bf16.mxu0 0
    %5778 = vmatpush1.bf16.msra.mxu0 %v4067
    %5779 = vmatprep.subr.bf16.mxu0 0
    %5780 = vmatpush2.bf16.msra.mxu0 %v4082
    %5781 = vmatprep.subr.bf16.mxu0 0
    %5782 = vmatpush2.bf16.msra.mxu0 %v4081
    %5783 = vmatprep.subr.bf16.mxu0 0
    %5784 = vmatpush2.bf16.msra.mxu0 %v4080
    %5785 = vmatprep.subr.bf16.mxu0 0
    %5786 = vmatpush2.bf16.msra.mxu0 %v4079
    %5787 = vmatprep.subr.bf16.mxu0 0
    %5788 = vmatpush2.bf16.msra.mxu0 %v4078
    %5789 = vmatprep.subr.bf16.mxu0 0
    %5790 = vmatpush2.bf16.msra.mxu0 %v4077
    %5791 = vmatprep.subr.bf16.mxu0 0
    %5792 = vmatpush2.bf16.msra.mxu0 %v4076
    %5793 = vmatprep.subr.bf16.mxu0 0
    %5794 = vmatpush2.bf16.msra.mxu0 %v4075
    %5795 = vmatprep.mubr.bf16.mxu0 %v1495
    %5796 = vmatmul.mubr.bf16.gmra.mxu0 %v1481
    %v5797 = vpop.f32.mrf.mxu0
    %v5798 = vadd.f32 %v5758, %v5797
    %v5799 = vpop.f32.mrf.mxu0
    %v5800 = vpop.f32.mrf.mxu0
    %v5801 = vpop.f32.mrf.mxu0
    %5802 = vdwg.mxu0
    %5803 = vmatprep.subr.bf16.mxu0 0
    %5804 = vmatpush1.bf16.msra.mxu0 %v4090
    %5805 = vmatprep.subr.bf16.mxu0 0
    %5806 = vmatpush1.bf16.msra.mxu0 %v4089
    %5807 = vmatprep.subr.bf16.mxu0 0
    %5808 = vmatpush1.bf16.msra.mxu0 %v4088
    %5809 = vmatprep.subr.bf16.mxu0 0
    %5810 = vmatpush1.bf16.msra.mxu0 %v4087
    %5811 = vmatprep.subr.bf16.mxu0 0
    %5812 = vmatpush1.bf16.msra.mxu0 %v4086
    %5813 = vmatprep.subr.bf16.mxu0 0
    %5814 = vmatpush1.bf16.msra.mxu0 %v4085
    %5815 = vmatprep.subr.bf16.mxu0 0
    %5816 = vmatpush1.bf16.msra.mxu0 %v4084
    %5817 = vmatprep.subr.bf16.mxu0 0
    %5818 = vmatpush1.bf16.msra.mxu0 %v4083
    %5819 = vmatprep.subr.bf16.mxu0 0
    %5820 = vmatpush2.bf16.msra.mxu0 %v4098
    %5821 = vmatprep.subr.bf16.mxu0 0
    %5822 = vmatpush2.bf16.msra.mxu0 %v4097
    %5823 = vmatprep.subr.bf16.mxu0 0
    %5824 = vmatpush2.bf16.msra.mxu0 %v4096
    %5825 = vmatprep.subr.bf16.mxu0 0
    %5826 = vmatpush2.bf16.msra.mxu0 %v4095
    %5827 = vmatprep.subr.bf16.mxu0 0
    %5828 = vmatpush2.bf16.msra.mxu0 %v4094
    %5829 = vmatprep.subr.bf16.mxu0 0
    %5830 = vmatpush2.bf16.msra.mxu0 %v4093
    %5831 = vmatprep.subr.bf16.mxu0 0
    %5832 = vmatpush2.bf16.msra.mxu0 %v4092
    %5833 = vmatprep.subr.bf16.mxu0 0
    %5834 = vmatpush2.bf16.msra.mxu0 %v4091
    %5835 = vmatprep.mubr.bf16.mxu0 %v1505
    %5836 = vmatmul.mubr.bf16.gmra.mxu0 %v1503
    %v5837 = vpop.f32.mrf.mxu0
    %v5838 = vadd.f32 %v5798, %v5837
    %v5839 = vpop.f32.mrf.mxu0
    %v5840 = vpop.f32.mrf.mxu0
    %v5841 = vpop.f32.mrf.mxu0
    %5842 = vdwg.mxu0
    %5843 = vmatprep.subr.bf16.mxu0 0
    %5844 = vmatpush1.bf16.msra.mxu0 %v4106
    %5845 = vmatprep.subr.bf16.mxu0 0
    %5846 = vmatpush1.bf16.msra.mxu0 %v4105
    %5847 = vmatprep.subr.bf16.mxu0 0
    %5848 = vmatpush1.bf16.msra.mxu0 %v4104
    %5849 = vmatprep.subr.bf16.mxu0 0
    %5850 = vmatpush1.bf16.msra.mxu0 %v4103
    %5851 = vmatprep.subr.bf16.mxu0 0
    %5852 = vmatpush1.bf16.msra.mxu0 %v4102
    %5853 = vmatprep.subr.bf16.mxu0 0
    %5854 = vmatpush1.bf16.msra.mxu0 %v4101
    %5855 = vmatprep.subr.bf16.mxu0 0
    %5856 = vmatpush1.bf16.msra.mxu0 %v4100
    %5857 = vmatprep.subr.bf16.mxu0 0
    %5858 = vmatpush1.bf16.msra.mxu0 %v4099
    %5859 = vmatprep.subr.bf16.mxu0 0
    %5860 = vmatpush2.bf16.msra.mxu0 %v4114
    %5861 = vmatprep.subr.bf16.mxu0 0
    %5862 = vmatpush2.bf16.msra.mxu0 %v4113
    %5863 = vmatprep.subr.bf16.mxu0 0
    %5864 = vmatpush2.bf16.msra.mxu0 %v4112
    %5865 = vmatprep.subr.bf16.mxu0 0
    %5866 = vmatpush2.bf16.msra.mxu0 %v4111
    %5867 = vmatprep.subr.bf16.mxu0 0
    %5868 = vmatpush2.bf16.msra.mxu0 %v4110
    %5869 = vmatprep.subr.bf16.mxu0 0
    %5870 = vmatpush2.bf16.msra.mxu0 %v4109
    %5871 = vmatprep.subr.bf16.mxu0 0
    %5872 = vmatpush2.bf16.msra.mxu0 %v4108
    %5873 = vmatprep.subr.bf16.mxu0 0
    %5874 = vmatpush2.bf16.msra.mxu0 %v4107
    %5875 = vmatprep.mubr.bf16.mxu0 %v1502
    %5876 = vmatmul.mubr.bf16.gmra.mxu0 %v1488
    %v5877 = vpop.f32.mrf.mxu0
    %v5878 = vadd.f32 %v5838, %v5877
    %v5879 = vpop.f32.mrf.mxu0
    %v5880 = vpop.f32.mrf.mxu0
    %v5881 = vpop.f32.mrf.mxu0
    %5882 = vdwg.mxu0
    %5883 = vmatprep.subr.bf16.mxu0 0
    %5884 = vmatpush1.bf16.msra.mxu0 %v4122
    %5885 = vmatprep.subr.bf16.mxu0 0
    %5886 = vmatpush1.bf16.msra.mxu0 %v4121
    %5887 = vmatprep.subr.bf16.mxu0 0
    %5888 = vmatpush1.bf16.msra.mxu0 %v4120
    %5889 = vmatprep.subr.bf16.mxu0 0
    %5890 = vmatpush1.bf16.msra.mxu0 %v4119
    %5891 = vmatprep.subr.bf16.mxu0 0
    %5892 = vmatpush1.bf16.msra.mxu0 %v4118
    %5893 = vmatprep.subr.bf16.mxu0 0
    %5894 = vmatpush1.bf16.msra.mxu0 %v4117
    %5895 = vmatprep.subr.bf16.mxu0 0
    %5896 = vmatpush1.bf16.msra.mxu0 %v4116
    %5897 = vmatprep.subr.bf16.mxu0 0
    %5898 = vmatpush1.bf16.msra.mxu0 %v4115
    %5899 = vmatprep.subr.bf16.mxu0 0
    %5900 = vmatpush2.bf16.msra.mxu0 %v4130
    %5901 = vmatprep.subr.bf16.mxu0 0
    %5902 = vmatpush2.bf16.msra.mxu0 %v4129
    %5903 = vmatprep.subr.bf16.mxu0 0
    %5904 = vmatpush2.bf16.msra.mxu0 %v4128
    %5905 = vmatprep.subr.bf16.mxu0 0
    %5906 = vmatpush2.bf16.msra.mxu0 %v4127
    %5907 = vmatprep.subr.bf16.mxu0 0
    %5908 = vmatpush2.bf16.msra.mxu0 %v4126
    %5909 = vmatprep.subr.bf16.mxu0 0
    %5910 = vmatpush2.bf16.msra.mxu0 %v4125
    %5911 = vmatprep.subr.bf16.mxu0 0
    %5912 = vmatpush2.bf16.msra.mxu0 %v4124
    %5913 = vmatprep.subr.bf16.mxu0 0
    %5914 = vmatpush2.bf16.msra.mxu0 %v4123
    %5915 = vmatprep.mubr.bf16.mxu0 %v1506
    %5916 = vmatmul.mubr.bf16.gmra.mxu0 %v1504
    %v5917 = vpop.f32.mrf.mxu0
    %v5918 = vadd.f32 %v5878, %v5917
    %v5919 = vpop.f32.mrf.mxu0
    %v5920 = vpop.f32.mrf.mxu0
    %v5921 = vpop.f32.mrf.mxu0
    %5922 = vdwg.mxu0
    %v5923 = vmax.f32 %v5918, 0.0
    %v5924 = vpack.c.bf16 %v5923, %v5923
    %v5925 = vld [vmem:[#allocation4] sm:$0xf]
    %v5926 = vld [vmem:[#allocation4 + $0x4] sm:$0xf]
    %v5927 = vld [vmem:[#allocation4 + $0x8] sm:$0xf]
    %v5928 = vld [vmem:[#allocation4 + $0xc] sm:$0xf]
    %v5929 = vld [vmem:[#allocation4 + $0x10] sm:$0xf]
    %v5930 = vld [vmem:[#allocation4 + $0x14] sm:$0xf]
    %v5931 = vld [vmem:[#allocation4 + $0x18] sm:$0xf]
    %v5932 = vld [vmem:[#allocation4 + $0x1c] sm:$0xf]
    %v5933 = vld [vmem:[#allocation4 + $0x20] sm:$0xf]
    %v5934 = vld [vmem:[#allocation4 + $0x24] sm:$0xf]
    %v5935 = vld [vmem:[#allocation4 + $0x28] sm:$0xf]
    %v5936 = vld [vmem:[#allocation4 + $0x2c] sm:$0xf]
    %v5937 = vld [vmem:[#allocation4 + $0x30] sm:$0xf]
    %v5938 = vld [vmem:[#allocation4 + $0x34] sm:$0xf]
    %v5939 = vld [vmem:[#allocation4 + $0x38] sm:$0xf]
    %v5940 = vld [vmem:[#allocation4 + $0x3c] sm:$0xf]
    %v5941 = vld [vmem:[%s4] sm:$0x1]
    %v5943 = vlaneseq
    %v5944 = vshrl.u32 %v5943, 7
    %v5945 = vsub.s32 0, %v5944
    %v5946 = vrot.slane %v5941, %v5945
    %v5964 = vunpack.c.l.b16 %v5925
    %v5965 = vunpack.c.l.b16 %v5926
    %v5966 = vunpack.c.l.b16 %v5927
    %v5967 = vunpack.c.l.b16 %v5928
    %v5968 = vunpack.c.l.b16 %v5929
    %v5969 = vunpack.c.l.b16 %v5930
    %v5970 = vunpack.c.l.b16 %v5931
    %v5971 = vunpack.c.l.b16 %v5932
    %v5972 = vunpack.c.l.b16 %v5933
    %v5973 = vunpack.c.l.b16 %v5934
    %v5974 = vunpack.c.l.b16 %v5935
    %v5975 = vunpack.c.l.b16 %v5936
    %v5976 = vunpack.c.l.b16 %v5937
    %v5977 = vunpack.c.l.b16 %v5938
    %v5978 = vunpack.c.l.b16 %v5939
    %v5979 = vunpack.c.l.b16 %v5940
    %v5980 = vpack.c.b16 %v5965, %v5964
    %v5981 = vpack.c.b16 %v5967, %v5966
    %v5982 = vpack.c.b16 %v5969, %v5968
    %v5983 = vpack.c.b16 %v5971, %v5970
    %v5984 = vpack.c.b16 %v5973, %v5972
    %v5985 = vpack.c.b16 %v5975, %v5974
    %v5986 = vpack.c.b16 %v5977, %v5976
    %v5987 = vpack.c.b16 %v5979, %v5978
    %5996 = vmatprep.subr.bf16.mxu0 0
    %5997 = vmatpush1.bf16.msra.mxu0 %v5987
    %5998 = vmatprep.subr.bf16.mxu0 0
    %5999 = vmatpush1.bf16.msra.mxu0 %v5986
    %6000 = vmatprep.subr.bf16.mxu0 0
    %6001 = vmatpush1.bf16.msra.mxu0 %v5985
    %6002 = vmatprep.subr.bf16.mxu0 0
    %6003 = vmatpush1.bf16.msra.mxu0 %v5984
    %6004 = vmatprep.subr.bf16.mxu0 0
    %6005 = vmatpush1.bf16.msra.mxu0 %v5983
    %6006 = vmatprep.subr.bf16.mxu0 0
    %6007 = vmatpush1.bf16.msra.mxu0 %v5982
    %6008 = vmatprep.subr.bf16.mxu0 0
    %6009 = vmatpush1.bf16.msra.mxu0 %v5981
    %6010 = vmatprep.subr.bf16.mxu0 0
    %6011 = vmatpush1.bf16.msra.mxu0 %v5980
    %6012 = vmatprep.subr.bf16.mxu0 0
    %6013 = vmatpush2.bf16.msra.mxu0 0
    %6014 = vmatprep.subr.bf16.mxu0 0
    %6015 = vmatpush2.bf16.msra.mxu0 0
    %6016 = vmatprep.subr.bf16.mxu0 0
    %6017 = vmatpush2.bf16.msra.mxu0 0
    %6018 = vmatprep.subr.bf16.mxu0 0
    %6019 = vmatpush2.bf16.msra.mxu0 0
    %6020 = vmatprep.subr.bf16.mxu0 0
    %6021 = vmatpush2.bf16.msra.mxu0 0
    %6022 = vmatprep.subr.bf16.mxu0 0
    %6023 = vmatpush2.bf16.msra.mxu0 0
    %6024 = vmatprep.subr.bf16.mxu0 0
    %6025 = vmatpush2.bf16.msra.mxu0 0
    %6026 = vmatprep.subr.bf16.mxu0 0
    %6027 = vmatpush2.bf16.msra.mxu0 0
    %6028 = vmatprep.mubr.bf16.mxu0 0
    %6029 = vmatmul.mubr.bf16.gmra.mxu0 %v5924
    %v6030 = vpop.f32.mrf.mxu0
    %v6031 = vadd.f32 %v5946, %v6030
    %v6032 = vpop.f32.mrf.mxu0
    %v6033 = vpop.f32.mrf.mxu0
    %v6034 = vpop.f32.mrf.mxu0
    %6035 = vdwg.mxu0
    %v6036 = vmax.f32 %v6031, 0.0
    %v6037 = vpack.c.bf16 %v6036, %v6036
    %v6038 = vld [vmem:[#allocation6] sm:$0xff]
    %v6039 = vld [vmem:[#allocation6 + $0x8] sm:$0xff]
    %v6040 = vld [vmem:[#allocation6 + $0x10] sm:$0xff]
    %v6041 = vld [vmem:[#allocation6 + $0x18] sm:$0xff]
    %v6042 = vld [vmem:[#allocation6 + $0x20] sm:$0xff]
    %v6043 = vld [vmem:[#allocation6 + $0x28] sm:$0xff]
    %v6044 = vld [vmem:[#allocation6 + $0x30] sm:$0xff]
    %v6045 = vld [vmem:[#allocation6 + $0x38] sm:$0xff]
    %v6046 = vld [vmem:[#allocation6 + $0x40] sm:$0xff]
    %v6047 = vld [vmem:[#allocation6 + $0x48] sm:$0xff]
    %v6048 = vld [vmem:[#allocation6 + $0x50] sm:$0xff]
    %v6049 = vld [vmem:[#allocation6 + $0x58] sm:$0xff]
    %v6050 = vld [vmem:[#allocation6 + $0x60] sm:$0xff]
    %v6051 = vld [vmem:[#allocation6 + $0x68] sm:$0xff]
    %v6052 = vld [vmem:[#allocation6 + $0x70] sm:$0xff]
    %v6053 = vld [vmem:[#allocation6 + $0x78] sm:$0xff]
    %v6054 = vld [vmem:[%s6] sm:$0x3]
    %v6056 = vlaneseq
    %v6057 = vshrl.u32 %v6056, 7
    %v6058 = vsub.s32 0, %v6057
    %v6059 = vrot.slane %v6054, %v6058
    %v6060 = vlaneseq
    %v6061 = vshrl.u32 %v6060, 7
    %v6062 = vsub.s32 1, %v6061
    %v6063 = vrot.slane %v6054, %v6062
    %v6082 = vunpack.c.l.b16 %v6038
    %v6083 = vunpack.c.h.b16 %v6038
    %v6084 = vunpack.c.l.b16 %v6039
    %v6085 = vunpack.c.h.b16 %v6039
    %v6086 = vunpack.c.l.b16 %v6040
    %v6087 = vunpack.c.h.b16 %v6040
    %v6088 = vunpack.c.l.b16 %v6041
    %v6089 = vunpack.c.h.b16 %v6041
    %v6090 = vunpack.c.l.b16 %v6042
    %v6091 = vunpack.c.h.b16 %v6042
    %v6092 = vunpack.c.l.b16 %v6043
    %v6093 = vunpack.c.h.b16 %v6043
    %v6094 = vunpack.c.l.b16 %v6044
    %v6095 = vunpack.c.h.b16 %v6044
    %v6096 = vunpack.c.l.b16 %v6045
    %v6097 = vunpack.c.h.b16 %v6045
    %v6098 = vunpack.c.l.b16 %v6046
    %v6099 = vunpack.c.h.b16 %v6046
    %v6100 = vunpack.c.l.b16 %v6047
    %v6101 = vunpack.c.h.b16 %v6047
    %v6102 = vunpack.c.l.b16 %v6048
    %v6103 = vunpack.c.h.b16 %v6048
    %v6104 = vunpack.c.l.b16 %v6049
    %v6105 = vunpack.c.h.b16 %v6049
    %v6106 = vunpack.c.l.b16 %v6050
    %v6107 = vunpack.c.h.b16 %v6050
    %v6108 = vunpack.c.l.b16 %v6051
    %v6109 = vunpack.c.h.b16 %v6051
    %v6110 = vunpack.c.l.b16 %v6052
    %v6111 = vunpack.c.h.b16 %v6052
    %v6112 = vunpack.c.l.b16 %v6053
    %v6113 = vunpack.c.h.b16 %v6053
    %v6114 = vpack.c.b16 %v6084, %v6082
    %v6115 = vpack.c.b16 %v6085, %v6083
    %v6116 = vpack.c.b16 %v6088, %v6086
    %v6117 = vpack.c.b16 %v6089, %v6087
    %v6118 = vpack.c.b16 %v6092, %v6090
    %v6119 = vpack.c.b16 %v6093, %v6091
    %v6120 = vpack.c.b16 %v6096, %v6094
    %v6121 = vpack.c.b16 %v6097, %v6095
    %v6122 = vpack.c.b16 %v6100, %v6098
    %v6123 = vpack.c.b16 %v6101, %v6099
    %v6124 = vpack.c.b16 %v6104, %v6102
    %v6125 = vpack.c.b16 %v6105, %v6103
    %v6126 = vpack.c.b16 %v6108, %v6106
    %v6127 = vpack.c.b16 %v6109, %v6107
    %v6128 = vpack.c.b16 %v6112, %v6110
    %v6129 = vpack.c.b16 %v6113, %v6111
    %6146 = vmatprep.subr.bf16.mxu0 %v6129
    %6147 = vmatpush1.bf16.msra.mxu0 %v6128
    %6148 = vmatprep.subr.bf16.mxu0 %v6127
    %6149 = vmatpush1.bf16.msra.mxu0 %v6126
    %6150 = vmatprep.subr.bf16.mxu0 %v6125
    %6151 = vmatpush1.bf16.msra.mxu0 %v6124
    %6152 = vmatprep.subr.bf16.mxu0 %v6123
    %6153 = vmatpush1.bf16.msra.mxu0 %v6122
    %6154 = vmatprep.subr.bf16.mxu0 %v6121
    %6155 = vmatpush1.bf16.msra.mxu0 %v6120
    %6156 = vmatprep.subr.bf16.mxu0 %v6119
    %6157 = vmatpush1.bf16.msra.mxu0 %v6118
    %6158 = vmatprep.subr.bf16.mxu0 %v6117
    %6159 = vmatpush1.bf16.msra.mxu0 %v6116
    %6160 = vmatprep.subr.bf16.mxu0 %v6115
    %6161 = vmatpush1.bf16.msra.mxu0 %v6114
    %6162 = vmatprep.subr.bf16.mxu0 0
    %6163 = vmatpush2.bf16.msra.mxu0 0
    %6164 = vmatprep.subr.bf16.mxu0 0
    %6165 = vmatpush2.bf16.msra.mxu0 0
    %6166 = vmatprep.subr.bf16.mxu0 0
    %6167 = vmatpush2.bf16.msra.mxu0 0
    %6168 = vmatprep.subr.bf16.mxu0 0
    %6169 = vmatpush2.bf16.msra.mxu0 0
    %6170 = vmatprep.subr.bf16.mxu0 0
    %6171 = vmatpush2.bf16.msra.mxu0 0
    %6172 = vmatprep.subr.bf16.mxu0 0
    %6173 = vmatpush2.bf16.msra.mxu0 0
    %6174 = vmatprep.subr.bf16.mxu0 0
    %6175 = vmatpush2.bf16.msra.mxu0 0
    %6176 = vmatprep.subr.bf16.mxu0 0
    %6177 = vmatpush2.bf16.msra.mxu0 0
    %6178 = vmatprep.mubr.bf16.mxu0 0
    %6179 = vmatmul.mubr.bf16.gmra.mxu0 %v6037
    %v6180 = vpop.f32.mrf.mxu0
    %v6181 = vadd.f32 %v6059, %v6180
    %v6182 = vpop.f32.mrf.mxu0
    %v6183 = vadd.f32 %v6063, %v6182
    %v6184 = vpop.f32.mrf.mxu0
    %v6185 = vpop.f32.mrf.mxu0
    %6186 = vdwg.mxu0
    %v6189 = vcombine.low %v6181, %v6183
    %v6191 = vunpack.c.l.s4 1983009808
    %v6192 = vunpack.c.0.s8 %v6191
    %v6193 = vlaneseq
    %v6194 = vshrl.u32 %v6193, 7
    %v6195 = vsub.s32 %v6192, %v6194
    %v6196 = vrot.slane %v6189, %v6195
    %6198 = vst [vmem:[%s7] sm:$0xf] %v6196
    // Predicated region
    $region42: #{_lambda_.3} parent=1 // pred_check
      _
    $region43: #{_lambda_.3} parent=1 // pred_check_branch
      %6200 = sbr.rel (0) target = $region45
    $region44: #{_lambda_.3} parent=1 // pred_region
      _
    $region45: #{_lambda_.3} parent=1 // pred_fallthru
      _
    // Predicated region
    $region46: #{_lambda_.3} parent=1 // pred_check
      _
    $region47: #{_lambda_.3} parent=1 // pred_check_branch
      %6202 = sbr.rel (0) target = $region49
    $region48: #{_lambda_.3} parent=1 // pred_region
      _
    $region49: #{_lambda_.3} parent=1 // pred_fallthru
      _
    %6203 = vsyncpa [#allocation3], 1
    %6204 = vsyncpa [#allocation5], 1

</llo_original>
